<compile_context>
chip_gen: v6e
topology: v6e:2x2x1
jax: 0.10.0
libtpu: 0.0.40
codegen_flags: <defaults>
</compile_context>

<pallas_src>
import functools
import math

import jax
import jax.numpy as jnp
from jax.experimental import pallas as pl
from jax.experimental.pallas import tpu as pltpu

LN_EPS = 1e-6  # nn.LayerNorm(embed_dim, eps=1e-6) in the course encoder block


# ---------------------------------------------------------------------------
# Fused Pallas kernel: whole encoder stack + classification head.
# One grid step = Bt sequences.
# ---------------------------------------------------------------------------
def fused_encoder_cls_kernel(x_ref,
                             wqkv_ref, bqkv_ref, wo_ref, bo_ref,
                             g1_ref, be1_ref,
                             w1_ref, b1_ref, w2_ref, b2_ref,
                             g2_ref, be2_ref,
                             fc1w_ref, fc1b_ref, fc2w_ref, fc2b_ref,
                             out_ref,
                             qkv_scr, o_scr, pooled_scr,
                             *, num_heads, num_layers, seq_len, seqs_per_step):
    H, S, Bt = num_heads, seq_len, seqs_per_step
    _, D = x_ref.shape                       # x_ref: (Bt*S, D) bf16
    dh = D // H

    def layer_body(l, xr):                   # xr: (Bt*S, D) f32 residual stream
        x_bf = xr.astype(jnp.bfloat16)

        # --- Fused QKV projection: one full-width matmul (N = 3D) ---------
        # 1/sqrt(dh) is already folded into the Q columns / bias.
        qkv = jnp.dot(x_bf, wqkv_ref[l],
                      preferred_element_type=jnp.float32) + bqkv_ref[l]
        qkv_scr[...] = qkv.astype(jnp.bfloat16)          # stage for per-head slices

        # --- Attention core: per (sequence, head) SxS score/context -------
        for b in range(Bt):                  # static, small (Bt <= 8)
            r = b * S
            for h in range(H):
                c = h * dh
                qh = qkv_scr[r:r + S, c:c + dh]                      # (S, dh) bf16
                kh = qkv_scr[r:r + S, D + c:D + c + dh]
                vh = qkv_scr[r:r + S, 2 * D + c:2 * D + c + dh]
                s = jax.lax.dot_general(qh, kh, (((1,), (1,)), ((), ())),
                                        preferred_element_type=jnp.float32)  # (S,S)
                s = s - jnp.max(s, axis=-1, keepdims=True)
                p = jnp.exp(s)
                p = p * pl.reciprocal(jnp.sum(p, axis=-1, keepdims=True),
                                      approx=True)
                oh = jnp.dot(p.astype(jnp.bfloat16), vh,
                             preferred_element_type=jnp.float32)     # (S, dh)
                o_scr[r:r + S, c:c + dh] = oh.astype(jnp.bfloat16)

        # --- Output projection: one matmul, head-sum inside MXU accumulator
        attn = jnp.dot(o_scr[...], wo_ref[l],
                       preferred_element_type=jnp.float32) + bo_ref[l]   # (Bt*S, D)

        # dropout_1: eval-mode identity.  Residual + LayerNorm 1
        # (one-pass stats: the two reductions are independent).
        h1 = xr + attn
        mu1 = jnp.mean(h1, axis=-1, keepdims=True)
        ms1 = jnp.mean(h1 * h1, axis=-1, keepdims=True)
        o1 = (h1 - mu1) * jax.lax.rsqrt(ms1 - mu1 * mu1 + LN_EPS) \
             * g1_ref[l] + be1_ref[l]

        # --- Feed-forward: Linear(D, F) -> ReLU -> Linear(F, D) -----------
        f = jnp.dot(o1.astype(jnp.bfloat16), w1_ref[l],
                    preferred_element_type=jnp.float32) + b1_ref[l]
        f = jnp.maximum(f, 0.0)
        f = jnp.dot(f.astype(jnp.bfloat16), w2_ref[l],
                    preferred_element_type=jnp.float32) + b2_ref[l]

        # dropout_2: eval-mode identity.  Residual + LayerNorm 2.
        h2 = o1 + f
        mu2 = jnp.mean(h2, axis=-1, keepdims=True)
        ms2 = jnp.mean(h2 * h2, axis=-1, keepdims=True)
        return (h2 - mu2) * jax.lax.rsqrt(ms2 - mu2 * mu2 + LN_EPS) \
               * g2_ref[l] + be2_ref[l]

    xr = jax.lax.fori_loop(0, num_layers, layer_body,
                           x_ref[...].astype(jnp.float32))

    # --- Classification head fused into the epilogue ----------------------
    # AvgPool1d(kernel_size=S) per sequence, then fc1 -> fc2 with M = Bt
    # (dropouts are eval-mode identity; forward has no ReLU between fc1/fc2).
    for b in range(Bt):
        pooled_scr[b:b + 1, :] = jnp.mean(xr[b * S:(b + 1) * S, :],
                                          axis=0, keepdims=True)
    hcls = jnp.dot(pooled_scr[...].astype(jnp.bfloat16), fc1w_ref[...],
                   preferred_element_type=jnp.float32) + fc1b_ref[...]   # (Bt, 20)
    y = jnp.dot(hcls.astype(jnp.bfloat16), fc2w_ref[...],
                preferred_element_type=jnp.float32) + fc2b_ref[...]      # (Bt, 2)
    out_ref[0] = y.astype(out_ref.dtype)


# ---------------------------------------------------------------------------
# Wrapper
# ---------------------------------------------------------------------------
def _resident_spec(a):
    """Whole-array block, constant index map -> DMA'd once, VMEM-resident."""
    nd = a.ndim
    return pl.BlockSpec(a.shape, lambda b: (0,) * nd)


def _pick_seqs_per_step(batch, seq_len):
    """Largest Bt<=8 dividing B, keeping >=2 grid steps (v7x megacore) and an
    (8,128)-legal (Bt*S, D) block; fall back to a single full-batch step."""
    for bt in (8, 4, 2):
        if batch % bt == 0 and batch // bt >= 2 and (bt * seq_len) % 8 == 0:
            return bt
    return batch


def transformer_encoder_cls_forward(token_ids, params, seqs_per_step=None):
    """Full TransformerEncoderCls.forward (eval mode) as one pallas_call."""
    B, S = token_ids.shape
    # Token + position embedding (gather is glue, done in plain JAX).
    word = jnp.take(params["word_emb"], token_ids, axis=0)               # (B, S, D)
    pos = params["pos_emb"][:S][None, :, :]                              # (1, S, D)
    x = (word + pos).astype(jnp.bfloat16)                                # bf16 DMA
    D = x.shape[-1]
    x2d = x.reshape(B * S, D)                                            # (B*S, D)

    Bt = _pick_seqs_per_step(B, S) if seqs_per_step is None else seqs_per_step
    assert B % Bt == 0
    n_steps = B // Bt

    lw = params["layers"]
    weight_order = ("wqkv", "bqkv", "wo", "bo", "g1", "be1",
                    "w1", "b1", "w2", "b2", "g2", "be2")
    weights = [lw[k] for k in weight_order] + [
        params["fc1_w"], params["fc1_b"], params["fc2_w"], params["fc2_b"]]
    n_out = params["fc2_w"].shape[-1]

    out = pl.pallas_call(
        functools.partial(fused_encoder_cls_kernel,
                          num_heads=params["num_heads"],
                          num_layers=params["num_layers"],
                          seq_len=S, seqs_per_step=Bt),
        out_shape=jax.ShapeDtypeStruct((n_steps, Bt, n_out), jnp.float32),
        grid=(n_steps,),
        in_specs=[pl.BlockSpec((Bt * S, D), lambda b: (b, 0))]
                 + [_resident_spec(w) for w in weights],
        out_specs=pl.BlockSpec((1, Bt, n_out), lambda b: (b, 0, 0)),
        scratch_shapes=[pltpu.VMEM((Bt * S, 3 * D), jnp.bfloat16),   # staged QKV
                        pltpu.VMEM((Bt * S, D), jnp.bfloat16),       # staged context
                        pltpu.VMEM((Bt, D), jnp.float32)],           # pooled rows
        compiler_params=pltpu.CompilerParams(
            dimension_semantics=("parallel",)),     # v7x: both TensorCores busy
    )(x2d, *weights)
    return out.reshape(B, n_out)


# ---------------------------------------------------------------------------
# Deterministic parameter construction.
#
# Linear weights are generated in PyTorch (out, in) layout and then, once, at
# construction time:
#   * transposed to (in, out)                     -> no in-kernel transposes,
#   * Wq|Wk|Wv packed into one (D, 3D) matrix     -> single fused QKV matmul,
#   * 1/sqrt(dh) folded into the Q columns/bias   -> no in-kernel score scale,
#   * matmul weights cast to bfloat16             -> half the DMA, full MXU rate.
# Biases / LayerNorm params stay f32.
# ---------------------------------------------------------------------------
def make_params(key, vocab_size, max_length, num_layers, embed_dim, num_heads, ff_dim):
    D, F, H, L = embed_dim, ff_dim, num_heads, num_layers
    assert D % H == 0
    dh = D // H
    scale = 1.0 / math.sqrt(dh)

    def nrm(k, shape, s=0.02):
        return (s * jax.random.normal(k, shape)).astype(jnp.float32)

    keys = jax.random.split(key, 3 + L)
    params = {
        "num_heads": H,
        "num_layers": L,
        "word_emb": nrm(keys[0], (vocab_size, D)),
        "pos_emb": nrm(keys[1], (max_length, D)),
    }

    names = ("wqkv", "bqkv", "wo", "bo", "g1", "be1",
             "w1", "b1", "w2", "b2", "g2", "be2")
    per_layer = {n: [] for n in names}

    for li in range(L):
        lk = jax.random.split(keys[2 + li], 8)
        wq = nrm(lk[0], (D, D))          # torch (out, in) layout
        wk = nrm(lk[1], (D, D))
        wv = nrm(lk[2], (D, D))
        wo = nrm(lk[3], (D, D))
        # (in, out) packed [Q | K | V]; attention scale folded into Q columns.
        wqkv = jnp.concatenate([wq.T * scale, wk.T, wv.T], axis=1)       # (D, 3D)
        bq = jnp.zeros((D,), jnp.float32) * scale   # scale genuinely applied to bq
        bk = jnp.zeros((D,), jnp.float32)
        bv = jnp.zeros((D,), jnp.float32)
        per_layer["wqkv"].append(wqkv.astype(jnp.bfloat16))
        per_layer["bqkv"].append(jnp.concatenate([bq, bk, bv]).reshape(1, 3 * D))
        per_layer["wo"].append(wo.T.astype(jnp.bfloat16))                # (D, D)
        per_layer["bo"].append(jnp.zeros((1, D), jnp.float32))
        per_layer["g1"].append(jnp.ones((1, D), jnp.float32))
        per_layer["be1"].append(jnp.zeros((1, D), jnp.float32))
        per_layer["w1"].append(nrm(lk[4], (F, D)).T.astype(jnp.bfloat16))  # (D, F)
        per_layer["b1"].append(jnp.zeros((1, F), jnp.float32))
        per_layer["w2"].append(nrm(lk[5], (D, F)).T.astype(jnp.bfloat16))  # (F, D)
        per_layer["b2"].append(jnp.zeros((1, D), jnp.float32))
        per_layer["g2"].append(jnp.ones((1, D), jnp.float32))
        per_layer["be2"].append(jnp.zeros((1, D), jnp.float32))

    params["layers"] = {n: jnp.stack(v) for n, v in per_layer.items()}

    hk = jax.random.split(keys[2 + L], 2)
    params["fc1_w"] = nrm(hk[0], (20, D)).T.astype(jnp.bfloat16)   # (D, 20)
    params["fc1_b"] = jnp.zeros((1, 20), jnp.float32)
    params["fc2_w"] = nrm(hk[1], (2, 20)).T.astype(jnp.bfloat16)   # (20, 2)
    params["fc2_b"] = jnp.zeros((1, 2), jnp.float32)
    return params


if __name__ == "__main__":
    # Small shapes consistent with the module (scaled down from
    # vocab=10000, max_length=100, layers=4, embed_dim=200, heads=4, ff=128).
    VOCAB, MAXLEN, NLAYERS, EMBED, HEADS, FF = 1000, 16, 2, 32, 4, 64
    BATCH = 4   # -> Bt=2 sequences per grid step, 2 grid steps

    key = jax.random.PRNGKey(0)
    k_params, k_tok = jax.random.split(key)
    params = make_params(k_params, VOCAB, MAXLEN, NLAYERS, EMBED, HEADS, FF)
    token_ids = jax.random.randint(k_tok, (BATCH, MAXLEN), 0, VOCAB, dtype=jnp.int32)

    logits = transformer_encoder_cls_forward(token_ids, params)
    logits = jax.block_until_ready(logits)
    assert logits.shape == (BATCH, 2) and logits.dtype == jnp.float32
    assert bool(jnp.all(jnp.isfinite(logits)))
    print("KERNEL_OK")
</pallas_src>

<mosaic_0001>
module attributes {stable_mosaic.version = 11 : i64} {
  func.func @fused_encoder_cls_kernel(%arg0: i32, %arg1: memref<32x32xbf16, #tpu.memory_space<vmem>>, %arg2: memref<2x32x96xbf16, #tpu.memory_space<vmem>>, %arg3: memref<2x1x96xf32, #tpu.memory_space<vmem>>, %arg4: memref<2x32x32xbf16, #tpu.memory_space<vmem>>, %arg5: memref<2x1x32xf32, #tpu.memory_space<vmem>>, %arg6: memref<2x1x32xf32, #tpu.memory_space<vmem>>, %arg7: memref<2x1x32xf32, #tpu.memory_space<vmem>>, %arg8: memref<2x32x64xbf16, #tpu.memory_space<vmem>>, %arg9: memref<2x1x64xf32, #tpu.memory_space<vmem>>, %arg10: memref<2x64x32xbf16, #tpu.memory_space<vmem>>, %arg11: memref<2x1x32xf32, #tpu.memory_space<vmem>>, %arg12: memref<2x1x32xf32, #tpu.memory_space<vmem>>, %arg13: memref<2x1x32xf32, #tpu.memory_space<vmem>>, %arg14: memref<32x20xbf16, #tpu.memory_space<vmem>>, %arg15: memref<1x20xf32, #tpu.memory_space<vmem>>, %arg16: memref<20x2xbf16, #tpu.memory_space<vmem>>, %arg17: memref<1x2xf32, #tpu.memory_space<vmem>>, %arg18: memref<1x2x2xf32, #tpu.memory_space<vmem>>, %arg19: memref<32x96xbf16, #tpu.memory_space<vmem>>, %arg20: memref<32x32xbf16, #tpu.memory_space<vmem>>, %arg21: memref<2x32xf32, #tpu.memory_space<vmem>>) attributes {dimension_semantics = [#tpu.dimension_semantics<parallel>], iteration_bounds = array<i64: 2>, scalar_prefetch = 0 : i64, scratch_operands = 3 : i64, tpu.core_type = #tpu.core_type<tc>, window_params = [{transform_indices = @transform_0, window_bounds = array<i64: 32, 32>}, {pipeline_mode = #tpu.pipeline_mode<synchronous>, transform_indices = @transform_1, window_bounds = array<i64: 2, 32, 96>}, {pipeline_mode = #tpu.pipeline_mode<synchronous>, transform_indices = @transform_2, window_bounds = array<i64: 2, 1, 96>}, {pipeline_mode = #tpu.pipeline_mode<synchronous>, transform_indices = @transform_3, window_bounds = array<i64: 2, 32, 32>}, {pipeline_mode = #tpu.pipeline_mode<synchronous>, transform_indices = @transform_4, window_bounds = array<i64: 2, 1, 32>}, {pipeline_mode = #tpu.pipeline_mode<synchronous>, transform_indices = @transform_5, window_bounds = array<i64: 2, 1, 32>}, {pipeline_mode = #tpu.pipeline_mode<synchronous>, transform_indices = @transform_6, window_bounds = array<i64: 2, 1, 32>}, {pipeline_mode = #tpu.pipeline_mode<synchronous>, transform_indices = @transform_7, window_bounds = array<i64: 2, 32, 64>}, {pipeline_mode = #tpu.pipeline_mode<synchronous>, transform_indices = @transform_8, window_bounds = array<i64: 2, 1, 64>}, {pipeline_mode = #tpu.pipeline_mode<synchronous>, transform_indices = @transform_9, window_bounds = array<i64: 2, 64, 32>}, {pipeline_mode = #tpu.pipeline_mode<synchronous>, transform_indices = @transform_10, window_bounds = array<i64: 2, 1, 32>}, {pipeline_mode = #tpu.pipeline_mode<synchronous>, transform_indices = @transform_11, window_bounds = array<i64: 2, 1, 32>}, {pipeline_mode = #tpu.pipeline_mode<synchronous>, transform_indices = @transform_12, window_bounds = array<i64: 2, 1, 32>}, {pipeline_mode = #tpu.pipeline_mode<synchronous>, transform_indices = @transform_13, window_bounds = array<i64: 32, 20>}, {pipeline_mode = #tpu.pipeline_mode<synchronous>, transform_indices = @transform_14, window_bounds = array<i64: 1, 20>}, {pipeline_mode = #tpu.pipeline_mode<synchronous>, transform_indices = @transform_15, window_bounds = array<i64: 20, 2>}, {pipeline_mode = #tpu.pipeline_mode<synchronous>, transform_indices = @transform_16, window_bounds = array<i64: 1, 2>}, {transform_indices = @transform_17, window_bounds = array<i64: 1, 2, 2>}]} {
    %c0 = arith.constant 0 : index
    %c0_0 = arith.constant 0 : index
    %0 = vector.load %arg1[%c0, %c0_0] : memref<32x32xbf16, #tpu.memory_space<vmem>>, vector<32x32xbf16>
    %1 = arith.extf %0 : vector<32x32xbf16> to vector<32x32xf32>
    %c0_i32 = arith.constant 0 : i32
    %c2_i32 = arith.constant 2 : i32
    %2 = arith.addi %c0_i32, %c2_i32 : i32
    %c1_i32 = arith.constant 1 : i32
    %3 = scf.for %arg22 = %c0_i32 to %2 step %c1_i32 iter_args(%arg23 = %1) -> (vector<32x32xf32>)  : i32 {
      %32 = arith.truncf %arg23 : vector<32x32xf32> to vector<32x32xbf16>
      %33 = arith.index_cast %arg22 : i32 to index
      %c0_23 = arith.constant 0 : index
      %c0_24 = arith.constant 0 : index
      %34 = vector.load %arg2[%33, %c0_23, %c0_24] : memref<2x32x96xbf16, #tpu.memory_space<vmem>>, vector<1x32x96xbf16>
      %35 = vector.shape_cast %34 : vector<1x32x96xbf16> to vector<32x96xbf16>
      %cst_25 = arith.constant dense<0.000000e+00> : vector<32x96xf32>
      %36 = tpu.matmul %32, %35, %cst_25 {dimension_numbers = #tpu.dot_dimension_numbers<[1], [0], [0], [1], [0, 0, 1, 1], [], []>} : vector<32x32xbf16>, vector<32x96xbf16>, vector<32x96xf32> -> vector<32x96xf32>
      %37 = arith.index_cast %arg22 : i32 to index
      %c0_26 = arith.constant 0 : index
      %c0_27 = arith.constant 0 : index
      %38 = vector.load %arg3[%37, %c0_26, %c0_27] : memref<2x1x96xf32, #tpu.memory_space<vmem>>, vector<1x1x96xf32>
      %39 = vector.shape_cast %38 : vector<1x1x96xf32> to vector<1x96xf32>
      %40 = vector.broadcast %39 : vector<1x96xf32> to vector<32x96xf32>
      %41 = arith.addf %36, %40 : vector<32x96xf32>
      %42 = arith.truncf %41 : vector<32x96xf32> to vector<32x96xbf16>
      %c0_28 = arith.constant 0 : index
      %c0_29 = arith.constant 0 : index
      %43 = vector.load %arg19[%c0_28, %c0_29] : memref<32x96xbf16, #tpu.memory_space<vmem>>, vector<32x96xbf16>
      tpu.vector_store %arg19[%c0_28, %c0_29], %42 {strides = array<i32>} : memref<32x96xbf16, #tpu.memory_space<vmem>>, vector<32x96xbf16>,
      %c0_30 = arith.constant 0 : index
      %c0_31 = arith.constant 0 : index
      %44 = vector.load %arg19[%c0_30, %c0_31] : memref<32x96xbf16, #tpu.memory_space<vmem>>, vector<16x8xbf16>
      %c0_32 = arith.constant 0 : index
      %c32 = arith.constant 32 : index
      %45 = vector.load %arg19[%c0_32, %c32] : memref<32x96xbf16, #tpu.memory_space<vmem>>, vector<16x8xbf16>
      %c0_33 = arith.constant 0 : index
      %c64 = arith.constant 64 : index
      %46 = vector.load %arg19[%c0_33, %c64] : memref<32x96xbf16, #tpu.memory_space<vmem>>, vector<16x8xbf16>
      %cst_34 = arith.constant dense<0.000000e+00> : vector<16x16xf32>
      %47 = tpu.matmul %44, %45, %cst_34 {dimension_numbers = #tpu.dot_dimension_numbers<[1], [1], [0], [0], [0, 0, 1, 0], [], []>} : vector<16x8xbf16>, vector<16x8xbf16>, vector<16x16xf32> -> vector<16x16xf32>
      %cst_35 = arith.constant dense<0xFF800000> : vector<16xf32>
      %48 = vector.multi_reduction <maximumf>, %47, %cst_35 [1] : vector<16x16xf32> to vector<16xf32>
      %49 = vector.shape_cast %48 : vector<16xf32> to vector<16x1xf32>
      %50 = vector.broadcast %49 : vector<16x1xf32> to vector<16x16xf32>
      %51 = arith.subf %47, %50 : vector<16x16xf32>
      %52 = math.exp %51 : vector<16x16xf32>
      %cst_36 = arith.constant dense<0.000000e+00> : vector<16xf32>
      %53 = vector.multi_reduction <add>, %52, %cst_36 [1] : vector<16x16xf32> to vector<16xf32>
      %54 = vector.shape_cast %53 : vector<16xf32> to vector<16x1xf32>
      %55 = tpu.reciprocal %54 {approx = true} : vector<16x1xf32> -> vector<16x1xf32>
      %56 = vector.broadcast %55 : vector<16x1xf32> to vector<16x16xf32>
      %57 = arith.mulf %52, %56 : vector<16x16xf32>
      %58 = arith.truncf %57 : vector<16x16xf32> to vector<16x16xbf16>
      %cst_37 = arith.constant dense<0.000000e+00> : vector<16x8xf32>
      %59 = tpu.matmul %58, %46, %cst_37 {dimension_numbers = #tpu.dot_dimension_numbers<[1], [0], [0], [1], [0, 0, 1, 1], [], []>} : vector<16x16xbf16>, vector<16x8xbf16>, vector<16x8xf32> -> vector<16x8xf32>
      %60 = arith.truncf %59 : vector<16x8xf32> to vector<16x8xbf16>
      %c0_38 = arith.constant 0 : index
      %c0_39 = arith.constant 0 : index
      %61 = vector.load %arg20[%c0_38, %c0_39] : memref<32x32xbf16, #tpu.memory_space<vmem>>, vector<16x8xbf16>
      tpu.vector_store %arg20[%c0_38, %c0_39], %60 {strides = array<i32>} : memref<32x32xbf16, #tpu.memory_space<vmem>>, vector<16x8xbf16>,
      %c0_40 = arith.constant 0 : index
      %c8 = arith.constant 8 : index
      %62 = vector.load %arg19[%c0_40, %c8] : memref<32x96xbf16, #tpu.memory_space<vmem>>, vector<16x8xbf16>
      %c0_41 = arith.constant 0 : index
      %c40 = arith.constant 40 : index
      %63 = vector.load %arg19[%c0_41, %c40] : memref<32x96xbf16, #tpu.memory_space<vmem>>, vector<16x8xbf16>
      %c0_42 = arith.constant 0 : index
      %c72 = arith.constant 72 : index
      %64 = vector.load %arg19[%c0_42, %c72] : memref<32x96xbf16, #tpu.memory_space<vmem>>, vector<16x8xbf16>
      %cst_43 = arith.constant dense<0.000000e+00> : vector<16x16xf32>
      %65 = tpu.matmul %62, %63, %cst_43 {dimension_numbers = #tpu.dot_dimension_numbers<[1], [1], [0], [0], [0, 0, 1, 0], [], []>} : vector<16x8xbf16>, vector<16x8xbf16>, vector<16x16xf32> -> vector<16x16xf32>
      %cst_44 = arith.constant dense<0xFF800000> : vector<16xf32>
      %66 = vector.multi_reduction <maximumf>, %65, %cst_44 [1] : vector<16x16xf32> to vector<16xf32>
      %67 = vector.shape_cast %66 : vector<16xf32> to vector<16x1xf32>
      %68 = vector.broadcast %67 : vector<16x1xf32> to vector<16x16xf32>
      %69 = arith.subf %65, %68 : vector<16x16xf32>
      %70 = math.exp %69 : vector<16x16xf32>
      %cst_45 = arith.constant dense<0.000000e+00> : vector<16xf32>
      %71 = vector.multi_reduction <add>, %70, %cst_45 [1] : vector<16x16xf32> to vector<16xf32>
      %72 = vector.shape_cast %71 : vector<16xf32> to vector<16x1xf32>
      %73 = tpu.reciprocal %72 {approx = true} : vector<16x1xf32> -> vector<16x1xf32>
      %74 = vector.broadcast %73 : vector<16x1xf32> to vector<16x16xf32>
      %75 = arith.mulf %70, %74 : vector<16x16xf32>
      %76 = arith.truncf %75 : vector<16x16xf32> to vector<16x16xbf16>
      %cst_46 = arith.constant dense<0.000000e+00> : vector<16x8xf32>
      %77 = tpu.matmul %76, %64, %cst_46 {dimension_numbers = #tpu.dot_dimension_numbers<[1], [0], [0], [1], [0, 0, 1, 1], [], []>} : vector<16x16xbf16>, vector<16x8xbf16>, vector<16x8xf32> -> vector<16x8xf32>
      %78 = arith.truncf %77 : vector<16x8xf32> to vector<16x8xbf16>
      %c0_47 = arith.constant 0 : index
      %c8_48 = arith.constant 8 : index
      %79 = vector.load %arg20[%c0_47, %c8_48] : memref<32x32xbf16, #tpu.memory_space<vmem>>, vector<16x8xbf16>
      tpu.vector_store %arg20[%c0_47, %c8_48], %78 {strides = array<i32>} : memref<32x32xbf16, #tpu.memory_space<vmem>>, vector<16x8xbf16>,
      %c0_49 = arith.constant 0 : index
      %c16 = arith.constant 16 : index
      %80 = vector.load %arg19[%c0_49, %c16] : memref<32x96xbf16, #tpu.memory_space<vmem>>, vector<16x8xbf16>
      %c0_50 = arith.constant 0 : index
      %c48 = arith.constant 48 : index
      %81 = vector.load %arg19[%c0_50, %c48] : memref<32x96xbf16, #tpu.memory_space<vmem>>, vector<16x8xbf16>
      %c0_51 = arith.constant 0 : index
      %c80 = arith.constant 80 : index
      %82 = vector.load %arg19[%c0_51, %c80] : memref<32x96xbf16, #tpu.memory_space<vmem>>, vector<16x8xbf16>
      %cst_52 = arith.constant dense<0.000000e+00> : vector<16x16xf32>
      %83 = tpu.matmul %80, %81, %cst_52 {dimension_numbers = #tpu.dot_dimension_numbers<[1], [1], [0], [0], [0, 0, 1, 0], [], []>} : vector<16x8xbf16>, vector<16x8xbf16>, vector<16x16xf32> -> vector<16x16xf32>
      %cst_53 = arith.constant dense<0xFF800000> : vector<16xf32>
      %84 = vector.multi_reduction <maximumf>, %83, %cst_53 [1] : vector<16x16xf32> to vector<16xf32>
      %85 = vector.shape_cast %84 : vector<16xf32> to vector<16x1xf32>
      %86 = vector.broadcast %85 : vector<16x1xf32> to vector<16x16xf32>
      %87 = arith.subf %83, %86 : vector<16x16xf32>
      %88 = math.exp %87 : vector<16x16xf32>
      %cst_54 = arith.constant dense<0.000000e+00> : vector<16xf32>
      %89 = vector.multi_reduction <add>, %88, %cst_54 [1] : vector<16x16xf32> to vector<16xf32>
      %90 = vector.shape_cast %89 : vector<16xf32> to vector<16x1xf32>
      %91 = tpu.reciprocal %90 {approx = true} : vector<16x1xf32> -> vector<16x1xf32>
      %92 = vector.broadcast %91 : vector<16x1xf32> to vector<16x16xf32>
      %93 = arith.mulf %88, %92 : vector<16x16xf32>
      %94 = arith.truncf %93 : vector<16x16xf32> to vector<16x16xbf16>
      %cst_55 = arith.constant dense<0.000000e+00> : vector<16x8xf32>
      %95 = tpu.matmul %94, %82, %cst_55 {dimension_numbers = #tpu.dot_dimension_numbers<[1], [0], [0], [1], [0, 0, 1, 1], [], []>} : vector<16x16xbf16>, vector<16x8xbf16>, vector<16x8xf32> -> vector<16x8xf32>
      %96 = arith.truncf %95 : vector<16x8xf32> to vector<16x8xbf16>
      %c0_56 = arith.constant 0 : index
      %c16_57 = arith.constant 16 : index
      %97 = vector.load %arg20[%c0_56, %c16_57] : memref<32x32xbf16, #tpu.memory_space<vmem>>, vector<16x8xbf16>
      tpu.vector_store %arg20[%c0_56, %c16_57], %96 {strides = array<i32>} : memref<32x32xbf16, #tpu.memory_space<vmem>>, vector<16x8xbf16>,
      %c0_58 = arith.constant 0 : index
      %c24 = arith.constant 24 : index
      %98 = vector.load %arg19[%c0_58, %c24] : memref<32x96xbf16, #tpu.memory_space<vmem>>, vector<16x8xbf16>
      %c0_59 = arith.constant 0 : index
      %c56 = arith.constant 56 : index
      %99 = vector.load %arg19[%c0_59, %c56] : memref<32x96xbf16, #tpu.memory_space<vmem>>, vector<16x8xbf16>
      %c0_60 = arith.constant 0 : index
      %c88 = arith.constant 88 : index
      %100 = vector.load %arg19[%c0_60, %c88] : memref<32x96xbf16, #tpu.memory_space<vmem>>, vector<16x8xbf16>
      %cst_61 = arith.constant dense<0.000000e+00> : vector<16x16xf32>
      %101 = tpu.matmul %98, %99, %cst_61 {dimension_numbers = #tpu.dot_dimension_numbers<[1], [1], [0], [0], [0, 0, 1, 0], [], []>} : vector<16x8xbf16>, vector<16x8xbf16>, vector<16x16xf32> -> vector<16x16xf32>
      %cst_62 = arith.constant dense<0xFF800000> : vector<16xf32>
      %102 = vector.multi_reduction <maximumf>, %101, %cst_62 [1] : vector<16x16xf32> to vector<16xf32>
      %103 = vector.shape_cast %102 : vector<16xf32> to vector<16x1xf32>
      %104 = vector.broadcast %103 : vector<16x1xf32> to vector<16x16xf32>
      %105 = arith.subf %101, %104 : vector<16x16xf32>
      %106 = math.exp %105 : vector<16x16xf32>
      %cst_63 = arith.constant dense<0.000000e+00> : vector<16xf32>
      %107 = vector.multi_reduction <add>, %106, %cst_63 [1] : vector<16x16xf32> to vector<16xf32>
      %108 = vector.shape_cast %107 : vector<16xf32> to vector<16x1xf32>
      %109 = tpu.reciprocal %108 {approx = true} : vector<16x1xf32> -> vector<16x1xf32>
      %110 = vector.broadcast %109 : vector<16x1xf32> to vector<16x16xf32>
      %111 = arith.mulf %106, %110 : vector<16x16xf32>
      %112 = arith.truncf %111 : vector<16x16xf32> to vector<16x16xbf16>
      %cst_64 = arith.constant dense<0.000000e+00> : vector<16x8xf32>
      %113 = tpu.matmul %112, %100, %cst_64 {dimension_numbers = #tpu.dot_dimension_numbers<[1], [0], [0], [1], [0, 0, 1, 1], [], []>} : vector<16x16xbf16>, vector<16x8xbf16>, vector<16x8xf32> -> vector<16x8xf32>
      %114 = arith.truncf %113 : vector<16x8xf32> to vector<16x8xbf16>
      %c0_65 = arith.constant 0 : index
      %c24_66 = arith.constant 24 : index
      %115 = vector.load %arg20[%c0_65, %c24_66] : memref<32x32xbf16, #tpu.memory_space<vmem>>, vector<16x8xbf16>
      tpu.vector_store %arg20[%c0_65, %c24_66], %114 {strides = array<i32>} : memref<32x32xbf16, #tpu.memory_space<vmem>>, vector<16x8xbf16>,
      %c16_67 = arith.constant 16 : index
      %c0_68 = arith.constant 0 : index
      %116 = vector.load %arg19[%c16_67, %c0_68] : memref<32x96xbf16, #tpu.memory_space<vmem>>, vector<16x8xbf16>
      %c16_69 = arith.constant 16 : index
      %c32_70 = arith.constant 32 : index
      %117 = vector.load %arg19[%c16_69, %c32_70] : memref<32x96xbf16, #tpu.memory_space<vmem>>, vector<16x8xbf16>
      %c16_71 = arith.constant 16 : index
      %c64_72 = arith.constant 64 : index
      %118 = vector.load %arg19[%c16_71, %c64_72] : memref<32x96xbf16, #tpu.memory_space<vmem>>, vector<16x8xbf16>
      %cst_73 = arith.constant dense<0.000000e+00> : vector<16x16xf32>
      %119 = tpu.matmul %116, %117, %cst_73 {dimension_numbers = #tpu.dot_dimension_numbers<[1], [1], [0], [0], [0, 0, 1, 0], [], []>} : vector<16x8xbf16>, vector<16x8xbf16>, vector<16x16xf32> -> vector<16x16xf32>
      %cst_74 = arith.constant dense<0xFF800000> : vector<16xf32>
      %120 = vector.multi_reduction <maximumf>, %119, %cst_74 [1] : vector<16x16xf32> to vector<16xf32>
      %121 = vector.shape_cast %120 : vector<16xf32> to vector<16x1xf32>
      %122 = vector.broadcast %121 : vector<16x1xf32> to vector<16x16xf32>
      %123 = arith.subf %119, %122 : vector<16x16xf32>
      %124 = math.exp %123 : vector<16x16xf32>
      %cst_75 = arith.constant dense<0.000000e+00> : vector<16xf32>
      %125 = vector.multi_reduction <add>, %124, %cst_75 [1] : vector<16x16xf32> to vector<16xf32>
      %126 = vector.shape_cast %125 : vector<16xf32> to vector<16x1xf32>
      %127 = tpu.reciprocal %126 {approx = true} : vector<16x1xf32> -> vector<16x1xf32>
      %128 = vector.broadcast %127 : vector<16x1xf32> to vector<16x16xf32>
      %129 = arith.mulf %124, %128 : vector<16x16xf32>
      %130 = arith.truncf %129 : vector<16x16xf32> to vector<16x16xbf16>
      %cst_76 = arith.constant dense<0.000000e+00> : vector<16x8xf32>
      %131 = tpu.matmul %130, %118, %cst_76 {dimension_numbers = #tpu.dot_dimension_numbers<[1], [0], [0], [1], [0, 0, 1, 1], [], []>} : vector<16x16xbf16>, vector<16x8xbf16>, vector<16x8xf32> -> vector<16x8xf32>
      %132 = arith.truncf %131 : vector<16x8xf32> to vector<16x8xbf16>
      %c16_77 = arith.constant 16 : index
      %c0_78 = arith.constant 0 : index
      %133 = vector.load %arg20[%c16_77, %c0_78] : memref<32x32xbf16, #tpu.memory_space<vmem>>, vector<16x8xbf16>
      tpu.vector_store %arg20[%c16_77, %c0_78], %132 {strides = array<i32>} : memref<32x32xbf16, #tpu.memory_space<vmem>>, vector<16x8xbf16>,
      %c16_79 = arith.constant 16 : index
      %c8_80 = arith.constant 8 : index
      %134 = vector.load %arg19[%c16_79, %c8_80] : memref<32x96xbf16, #tpu.memory_space<vmem>>, vector<16x8xbf16>
      %c16_81 = arith.constant 16 : index
      %c40_82 = arith.constant 40 : index
      %135 = vector.load %arg19[%c16_81, %c40_82] : memref<32x96xbf16, #tpu.memory_space<vmem>>, vector<16x8xbf16>
      %c16_83 = arith.constant 16 : index
      %c72_84 = arith.constant 72 : index
      %136 = vector.load %arg19[%c16_83, %c72_84] : memref<32x96xbf16, #tpu.memory_space<vmem>>, vector<16x8xbf16>
      %cst_85 = arith.constant dense<0.000000e+00> : vector<16x16xf32>
      %137 = tpu.matmul %134, %135, %cst_85 {dimension_numbers = #tpu.dot_dimension_numbers<[1], [1], [0], [0], [0, 0, 1, 0], [], []>} : vector<16x8xbf16>, vector<16x8xbf16>, vector<16x16xf32> -> vector<16x16xf32>
      %cst_86 = arith.constant dense<0xFF800000> : vector<16xf32>
      %138 = vector.multi_reduction <maximumf>, %137, %cst_86 [1] : vector<16x16xf32> to vector<16xf32>
      %139 = vector.shape_cast %138 : vector<16xf32> to vector<16x1xf32>
      %140 = vector.broadcast %139 : vector<16x1xf32> to vector<16x16xf32>
      %141 = arith.subf %137, %140 : vector<16x16xf32>
      %142 = math.exp %141 : vector<16x16xf32>
      %cst_87 = arith.constant dense<0.000000e+00> : vector<16xf32>
      %143 = vector.multi_reduction <add>, %142, %cst_87 [1] : vector<16x16xf32> to vector<16xf32>
      %144 = vector.shape_cast %143 : vector<16xf32> to vector<16x1xf32>
      %145 = tpu.reciprocal %144 {approx = true} : vector<16x1xf32> -> vector<16x1xf32>
      %146 = vector.broadcast %145 : vector<16x1xf32> to vector<16x16xf32>
      %147 = arith.mulf %142, %146 : vector<16x16xf32>
      %148 = arith.truncf %147 : vector<16x16xf32> to vector<16x16xbf16>
      %cst_88 = arith.constant dense<0.000000e+00> : vector<16x8xf32>
      %149 = tpu.matmul %148, %136, %cst_88 {dimension_numbers = #tpu.dot_dimension_numbers<[1], [0], [0], [1], [0, 0, 1, 1], [], []>} : vector<16x16xbf16>, vector<16x8xbf16>, vector<16x8xf32> -> vector<16x8xf32>
      %150 = arith.truncf %149 : vector<16x8xf32> to vector<16x8xbf16>
      %c16_89 = arith.constant 16 : index
      %c8_90 = arith.constant 8 : index
      %151 = vector.load %arg20[%c16_89, %c8_90] : memref<32x32xbf16, #tpu.memory_space<vmem>>, vector<16x8xbf16>
      tpu.vector_store %arg20[%c16_89, %c8_90], %150 {strides = array<i32>} : memref<32x32xbf16, #tpu.memory_space<vmem>>, vector<16x8xbf16>,
      %c16_91 = arith.constant 16 : index
      %c16_92 = arith.constant 16 : index
      %152 = vector.load %arg19[%c16_91, %c16_92] : memref<32x96xbf16, #tpu.memory_space<vmem>>, vector<16x8xbf16>
      %c16_93 = arith.constant 16 : index
      %c48_94 = arith.constant 48 : index
      %153 = vector.load %arg19[%c16_93, %c48_94] : memref<32x96xbf16, #tpu.memory_space<vmem>>, vector<16x8xbf16>
      %c16_95 = arith.constant 16 : index
      %c80_96 = arith.constant 80 : index
      %154 = vector.load %arg19[%c16_95, %c80_96] : memref<32x96xbf16, #tpu.memory_space<vmem>>, vector<16x8xbf16>
      %cst_97 = arith.constant dense<0.000000e+00> : vector<16x16xf32>
      %155 = tpu.matmul %152, %153, %cst_97 {dimension_numbers = #tpu.dot_dimension_numbers<[1], [1], [0], [0], [0, 0, 1, 0], [], []>} : vector<16x8xbf16>, vector<16x8xbf16>, vector<16x16xf32> -> vector<16x16xf32>
      %cst_98 = arith.constant dense<0xFF800000> : vector<16xf32>
      %156 = vector.multi_reduction <maximumf>, %155, %cst_98 [1] : vector<16x16xf32> to vector<16xf32>
      %157 = vector.shape_cast %156 : vector<16xf32> to vector<16x1xf32>
      %158 = vector.broadcast %157 : vector<16x1xf32> to vector<16x16xf32>
      %159 = arith.subf %155, %158 : vector<16x16xf32>
      %160 = math.exp %159 : vector<16x16xf32>
      %cst_99 = arith.constant dense<0.000000e+00> : vector<16xf32>
      %161 = vector.multi_reduction <add>, %160, %cst_99 [1] : vector<16x16xf32> to vector<16xf32>
      %162 = vector.shape_cast %161 : vector<16xf32> to vector<16x1xf32>
      %163 = tpu.reciprocal %162 {approx = true} : vector<16x1xf32> -> vector<16x1xf32>
      %164 = vector.broadcast %163 : vector<16x1xf32> to vector<16x16xf32>
      %165 = arith.mulf %160, %164 : vector<16x16xf32>
      %166 = arith.truncf %165 : vector<16x16xf32> to vector<16x16xbf16>
      %cst_100 = arith.constant dense<0.000000e+00> : vector<16x8xf32>
      %167 = tpu.matmul %166, %154, %cst_100 {dimension_numbers = #tpu.dot_dimension_numbers<[1], [0], [0], [1], [0, 0, 1, 1], [], []>} : vector<16x16xbf16>, vector<16x8xbf16>, vector<16x8xf32> -> vector<16x8xf32>
      %168 = arith.truncf %167 : vector<16x8xf32> to vector<16x8xbf16>
      %c16_101 = arith.constant 16 : index
      %c16_102 = arith.constant 16 : index
      %169 = vector.load %arg20[%c16_101, %c16_102] : memref<32x32xbf16, #tpu.memory_space<vmem>>, vector<16x8xbf16>
      tpu.vector_store %arg20[%c16_101, %c16_102], %168 {strides = array<i32>} : memref<32x32xbf16, #tpu.memory_space<vmem>>, vector<16x8xbf16>,
      %c16_103 = arith.constant 16 : index
      %c24_104 = arith.constant 24 : index
      %170 = vector.load %arg19[%c16_103, %c24_104] : memref<32x96xbf16, #tpu.memory_space<vmem>>, vector<16x8xbf16>
      %c16_105 = arith.constant 16 : index
      %c56_106 = arith.constant 56 : index
      %171 = vector.load %arg19[%c16_105, %c56_106] : memref<32x96xbf16, #tpu.memory_space<vmem>>, vector<16x8xbf16>
      %c16_107 = arith.constant 16 : index
      %c88_108 = arith.constant 88 : index
      %172 = vector.load %arg19[%c16_107, %c88_108] : memref<32x96xbf16, #tpu.memory_space<vmem>>, vector<16x8xbf16>
      %cst_109 = arith.constant dense<0.000000e+00> : vector<16x16xf32>
      %173 = tpu.matmul %170, %171, %cst_109 {dimension_numbers = #tpu.dot_dimension_numbers<[1], [1], [0], [0], [0, 0, 1, 0], [], []>} : vector<16x8xbf16>, vector<16x8xbf16>, vector<16x16xf32> -> vector<16x16xf32>
      %cst_110 = arith.constant dense<0xFF800000> : vector<16xf32>
      %174 = vector.multi_reduction <maximumf>, %173, %cst_110 [1] : vector<16x16xf32> to vector<16xf32>
      %175 = vector.shape_cast %174 : vector<16xf32> to vector<16x1xf32>
      %176 = vector.broadcast %175 : vector<16x1xf32> to vector<16x16xf32>
      %177 = arith.subf %173, %176 : vector<16x16xf32>
      %178 = math.exp %177 : vector<16x16xf32>
      %cst_111 = arith.constant dense<0.000000e+00> : vector<16xf32>
      %179 = vector.multi_reduction <add>, %178, %cst_111 [1] : vector<16x16xf32> to vector<16xf32>
      %180 = vector.shape_cast %179 : vector<16xf32> to vector<16x1xf32>
      %181 = tpu.reciprocal %180 {approx = true} : vector<16x1xf32> -> vector<16x1xf32>
      %182 = vector.broadcast %181 : vector<16x1xf32> to vector<16x16xf32>
      %183 = arith.mulf %178, %182 : vector<16x16xf32>
      %184 = arith.truncf %183 : vector<16x16xf32> to vector<16x16xbf16>
      %cst_112 = arith.constant dense<0.000000e+00> : vector<16x8xf32>
      %185 = tpu.matmul %184, %172, %cst_112 {dimension_numbers = #tpu.dot_dimension_numbers<[1], [0], [0], [1], [0, 0, 1, 1], [], []>} : vector<16x16xbf16>, vector<16x8xbf16>, vector<16x8xf32> -> vector<16x8xf32>
      %186 = arith.truncf %185 : vector<16x8xf32> to vector<16x8xbf16>
      %c16_113 = arith.constant 16 : index
      %c24_114 = arith.constant 24 : index
      %187 = vector.load %arg20[%c16_113, %c24_114] : memref<32x32xbf16, #tpu.memory_space<vmem>>, vector<16x8xbf16>
      tpu.vector_store %arg20[%c16_113, %c24_114], %186 {strides = array<i32>} : memref<32x32xbf16, #tpu.memory_space<vmem>>, vector<16x8xbf16>,
      %c0_115 = arith.constant 0 : index
      %c0_116 = arith.constant 0 : index
      %188 = vector.load %arg20[%c0_115, %c0_116] : memref<32x32xbf16, #tpu.memory_space<vmem>>, vector<32x32xbf16>
      %189 = arith.index_cast %arg22 : i32 to index
      %c0_117 = arith.constant 0 : index
      %c0_118 = arith.constant 0 : index
      %190 = vector.load %arg4[%189, %c0_117, %c0_118] : memref<2x32x32xbf16, #tpu.memory_space<vmem>>, vector<1x32x32xbf16>
      %191 = vector.shape_cast %190 : vector<1x32x32xbf16> to vector<32x32xbf16>
      %cst_119 = arith.constant dense<0.000000e+00> : vector<32x32xf32>
      %192 = tpu.matmul %188, %191, %cst_119 {dimension_numbers = #tpu.dot_dimension_numbers<[1], [0], [0], [1], [0, 0, 1, 1], [], []>} : vector<32x32xbf16>, vector<32x32xbf16>, vector<32x32xf32> -> vector<32x32xf32>
      %193 = arith.index_cast %arg22 : i32 to index
      %c0_120 = arith.constant 0 : index
      %c0_121 = arith.constant 0 : index
      %194 = vector.load %arg5[%193, %c0_120, %c0_121] : memref<2x1x32xf32, #tpu.memory_space<vmem>>, vector<1x1x32xf32>
      %195 = vector.shape_cast %194 : vector<1x1x32xf32> to vector<1x32xf32>
      %196 = vector.broadcast %195 : vector<1x32xf32> to vector<32x32xf32>
      %197 = arith.addf %192, %196 : vector<32x32xf32>
      %198 = arith.addf %arg23, %197 : vector<32x32xf32>
      %cst_122 = arith.constant dense<0.000000e+00> : vector<32xf32>
      %199 = vector.multi_reduction <add>, %198, %cst_122 [1] : vector<32x32xf32> to vector<32xf32>
      %200 = vector.shape_cast %199 : vector<32xf32> to vector<32x1xf32>
      %cst_123 = arith.constant 3.200000e+01 : f32
      %201 = vector.broadcast %cst_123 : f32 to vector<32x1xf32>
      %202 = arith.divf %200, %201 : vector<32x1xf32>
      %203 = arith.mulf %198, %198 : vector<32x32xf32>
      %cst_124 = arith.constant dense<0.000000e+00> : vector<32xf32>
      %204 = vector.multi_reduction <add>, %203, %cst_124 [1] : vector<32x32xf32> to vector<32xf32>
      %205 = vector.shape_cast %204 : vector<32xf32> to vector<32x1xf32>
      %cst_125 = arith.constant 3.200000e+01 : f32
      %206 = vector.broadcast %cst_125 : f32 to vector<32x1xf32>
      %207 = arith.divf %205, %206 : vector<32x1xf32>
      %208 = vector.broadcast %202 : vector<32x1xf32> to vector<32x32xf32>
      %209 = arith.subf %198, %208 : vector<32x32xf32>
      %210 = arith.mulf %202, %202 : vector<32x1xf32>
      %211 = arith.subf %207, %210 : vector<32x1xf32>
      %cst_126 = arith.constant 9.99999997E-7 : f32
      %212 = vector.broadcast %cst_126 : f32 to vector<32x1xf32>
      %213 = arith.addf %211, %212 : vector<32x1xf32>
      %214 = math.rsqrt %213 : vector<32x1xf32>
      %215 = vector.broadcast %214 : vector<32x1xf32> to vector<32x32xf32>
      %216 = arith.mulf %209, %215 : vector<32x32xf32>
      %217 = arith.index_cast %arg22 : i32 to index
      %c0_127 = arith.constant 0 : index
      %c0_128 = arith.constant 0 : index
      %218 = vector.load %arg6[%217, %c0_127, %c0_128] : memref<2x1x32xf32, #tpu.memory_space<vmem>>, vector<1x1x32xf32>
      %219 = vector.shape_cast %218 : vector<1x1x32xf32> to vector<1x32xf32>
      %220 = vector.broadcast %219 : vector<1x32xf32> to vector<32x32xf32>
      %221 = arith.mulf %216, %220 : vector<32x32xf32>
      %222 = arith.index_cast %arg22 : i32 to index
      %c0_129 = arith.constant 0 : index
      %c0_130 = arith.constant 0 : index
      %223 = vector.load %arg7[%222, %c0_129, %c0_130] : memref<2x1x32xf32, #tpu.memory_space<vmem>>, vector<1x1x32xf32>
      %224 = vector.shape_cast %223 : vector<1x1x32xf32> to vector<1x32xf32>
      %225 = vector.broadcast %224 : vector<1x32xf32> to vector<32x32xf32>
      %226 = arith.addf %221, %225 : vector<32x32xf32>
      %227 = arith.truncf %226 : vector<32x32xf32> to vector<32x32xbf16>
      %228 = arith.index_cast %arg22 : i32 to index
      %c0_131 = arith.constant 0 : index
      %c0_132 = arith.constant 0 : index
      %229 = vector.load %arg8[%228, %c0_131, %c0_132] : memref<2x32x64xbf16, #tpu.memory_space<vmem>>, vector<1x32x64xbf16>
      %230 = vector.shape_cast %229 : vector<1x32x64xbf16> to vector<32x64xbf16>
      %cst_133 = arith.constant dense<0.000000e+00> : vector<32x64xf32>
      %231 = tpu.matmul %227, %230, %cst_133 {dimension_numbers = #tpu.dot_dimension_numbers<[1], [0], [0], [1], [0, 0, 1, 1], [], []>} : vector<32x32xbf16>, vector<32x64xbf16>, vector<32x64xf32> -> vector<32x64xf32>
      %232 = arith.index_cast %arg22 : i32 to index
      %c0_134 = arith.constant 0 : index
      %c0_135 = arith.constant 0 : index
      %233 = vector.load %arg9[%232, %c0_134, %c0_135] : memref<2x1x64xf32, #tpu.memory_space<vmem>>, vector<1x1x64xf32>
      %234 = vector.shape_cast %233 : vector<1x1x64xf32> to vector<1x64xf32>
      %235 = vector.broadcast %234 : vector<1x64xf32> to vector<32x64xf32>
      %236 = arith.addf %231, %235 : vector<32x64xf32>
      %cst_136 = arith.constant 0.000000e+00 : f32
      %237 = vector.broadcast %cst_136 : f32 to vector<32x64xf32>
      %238 = arith.maximumf %236, %237 : vector<32x64xf32>
      %239 = arith.truncf %238 : vector<32x64xf32> to vector<32x64xbf16>
      %240 = arith.index_cast %arg22 : i32 to index
      %c0_137 = arith.constant 0 : index
      %c0_138 = arith.constant 0 : index
      %241 = vector.load %arg10[%240, %c0_137, %c0_138] : memref<2x64x32xbf16, #tpu.memory_space<vmem>>, vector<1x64x32xbf16>
      %242 = vector.shape_cast %241 : vector<1x64x32xbf16> to vector<64x32xbf16>
      %cst_139 = arith.constant dense<0.000000e+00> : vector<32x32xf32>
      %243 = tpu.matmul %239, %242, %cst_139 {dimension_numbers = #tpu.dot_dimension_numbers<[1], [0], [0], [1], [0, 0, 1, 1], [], []>} : vector<32x64xbf16>, vector<64x32xbf16>, vector<32x32xf32> -> vector<32x32xf32>
      %244 = arith.index_cast %arg22 : i32 to index
      %c0_140 = arith.constant 0 : index
      %c0_141 = arith.constant 0 : index
      %245 = vector.load %arg11[%244, %c0_140, %c0_141] : memref<2x1x32xf32, #tpu.memory_space<vmem>>, vector<1x1x32xf32>
      %246 = vector.shape_cast %245 : vector<1x1x32xf32> to vector<1x32xf32>
      %247 = vector.broadcast %246 : vector<1x32xf32> to vector<32x32xf32>
      %248 = arith.addf %243, %247 : vector<32x32xf32>
      %249 = arith.addf %226, %248 : vector<32x32xf32>
      %cst_142 = arith.constant dense<0.000000e+00> : vector<32xf32>
      %250 = vector.multi_reduction <add>, %249, %cst_142 [1] : vector<32x32xf32> to vector<32xf32>
      %251 = vector.shape_cast %250 : vector<32xf32> to vector<32x1xf32>
      %cst_143 = arith.constant 3.200000e+01 : f32
      %252 = vector.broadcast %cst_143 : f32 to vector<32x1xf32>
      %253 = arith.divf %251, %252 : vector<32x1xf32>
      %254 = arith.mulf %249, %249 : vector<32x32xf32>
      %cst_144 = arith.constant dense<0.000000e+00> : vector<32xf32>
      %255 = vector.multi_reduction <add>, %254, %cst_144 [1] : vector<32x32xf32> to vector<32xf32>
      %256 = vector.shape_cast %255 : vector<32xf32> to vector<32x1xf32>
      %cst_145 = arith.constant 3.200000e+01 : f32
      %257 = vector.broadcast %cst_145 : f32 to vector<32x1xf32>
      %258 = arith.divf %256, %257 : vector<32x1xf32>
      %259 = vector.broadcast %253 : vector<32x1xf32> to vector<32x32xf32>
      %260 = arith.subf %249, %259 : vector<32x32xf32>
      %261 = arith.mulf %253, %253 : vector<32x1xf32>
      %262 = arith.subf %258, %261 : vector<32x1xf32>
      %cst_146 = arith.constant 9.99999997E-7 : f32
      %263 = vector.broadcast %cst_146 : f32 to vector<32x1xf32>
      %264 = arith.addf %262, %263 : vector<32x1xf32>
      %265 = math.rsqrt %264 : vector<32x1xf32>
      %266 = vector.broadcast %265 : vector<32x1xf32> to vector<32x32xf32>
      %267 = arith.mulf %260, %266 : vector<32x32xf32>
      %268 = arith.index_cast %arg22 : i32 to index
      %c0_147 = arith.constant 0 : index
      %c0_148 = arith.constant 0 : index
      %269 = vector.load %arg12[%268, %c0_147, %c0_148] : memref<2x1x32xf32, #tpu.memory_space<vmem>>, vector<1x1x32xf32>
      %270 = vector.shape_cast %269 : vector<1x1x32xf32> to vector<1x32xf32>
      %271 = vector.broadcast %270 : vector<1x32xf32> to vector<32x32xf32>
      %272 = arith.mulf %267, %271 : vector<32x32xf32>
      %273 = arith.index_cast %arg22 : i32 to index
      %c0_149 = arith.constant 0 : index
      %c0_150 = arith.constant 0 : index
      %274 = vector.load %arg13[%273, %c0_149, %c0_150] : memref<2x1x32xf32, #tpu.memory_space<vmem>>, vector<1x1x32xf32>
      %275 = vector.shape_cast %274 : vector<1x1x32xf32> to vector<1x32xf32>
      %276 = vector.broadcast %275 : vector<1x32xf32> to vector<32x32xf32>
      %277 = arith.addf %272, %276 : vector<32x32xf32>
      scf.yield %277 : vector<32x32xf32>
    }
    %c2_i32_1 = arith.constant 2 : i32
    %4 = vector.extract_strided_slice %3 {offsets = [0, 0], sizes = [16, 32], strides = [1, 1]} : vector<32x32xf32> to vector<16x32xf32>
    %cst = arith.constant dense<0.000000e+00> : vector<32xf32>
    %5 = vector.multi_reduction <add>, %4, %cst [0] : vector<16x32xf32> to vector<32xf32>
    %6 = vector.shape_cast %5 : vector<32xf32> to vector<1x32xf32>
    %cst_2 = arith.constant 1.600000e+01 : f32
    %7 = vector.broadcast %cst_2 : f32 to vector<1x32xf32>
    %8 = arith.divf %6, %7 : vector<1x32xf32>
    %c0_3 = arith.constant 0 : index
    %c0_4 = arith.constant 0 : index
    %9 = vector.load %arg21[%c0_3, %c0_4] : memref<2x32xf32, #tpu.memory_space<vmem>>, vector<1x32xf32>
    tpu.vector_store %arg21[%c0_3, %c0_4], %8 {strides = array<i32>} : memref<2x32xf32, #tpu.memory_space<vmem>>, vector<1x32xf32>,
    %10 = vector.extract_strided_slice %3 {offsets = [16, 0], sizes = [16, 32], strides = [1, 1]} : vector<32x32xf32> to vector<16x32xf32>
    %cst_5 = arith.constant dense<0.000000e+00> : vector<32xf32>
    %11 = vector.multi_reduction <add>, %10, %cst_5 [0] : vector<16x32xf32> to vector<32xf32>
    %12 = vector.shape_cast %11 : vector<32xf32> to vector<1x32xf32>
    %cst_6 = arith.constant 1.600000e+01 : f32
    %13 = vector.broadcast %cst_6 : f32 to vector<1x32xf32>
    %14 = arith.divf %12, %13 : vector<1x32xf32>
    %c1 = arith.constant 1 : index
    %c0_7 = arith.constant 0 : index
    %15 = vector.load %arg21[%c1, %c0_7] : memref<2x32xf32, #tpu.memory_space<vmem>>, vector<1x32xf32>
    tpu.vector_store %arg21[%c1, %c0_7], %14 {strides = array<i32>} : memref<2x32xf32, #tpu.memory_space<vmem>>, vector<1x32xf32>,
    %c0_8 = arith.constant 0 : index
    %c0_9 = arith.constant 0 : index
    %16 = vector.load %arg21[%c0_8, %c0_9] : memref<2x32xf32, #tpu.memory_space<vmem>>, vector<2x32xf32>
    %17 = arith.truncf %16 : vector<2x32xf32> to vector<2x32xbf16>
    %c0_10 = arith.constant 0 : index
    %c0_11 = arith.constant 0 : index
    %18 = vector.load %arg14[%c0_10, %c0_11] : memref<32x20xbf16, #tpu.memory_space<vmem>>, vector<32x20xbf16>
    %cst_12 = arith.constant dense<0.000000e+00> : vector<2x20xf32>
    %19 = tpu.matmul %17, %18, %cst_12 {dimension_numbers = #tpu.dot_dimension_numbers<[1], [0], [0], [1], [0, 0, 1, 1], [], []>} : vector<2x32xbf16>, vector<32x20xbf16>, vector<2x20xf32> -> vector<2x20xf32>
    %c0_13 = arith.constant 0 : index
    %c0_14 = arith.constant 0 : index
    %20 = vector.load %arg15[%c0_13, %c0_14] : memref<1x20xf32, #tpu.memory_space<vmem>>, vector<1x20xf32>
    %21 = vector.broadcast %20 : vector<1x20xf32> to vector<2x20xf32>
    %22 = arith.addf %19, %21 : vector<2x20xf32>
    %23 = arith.truncf %22 : vector<2x20xf32> to vector<2x20xbf16>
    %c0_15 = arith.constant 0 : index
    %c0_16 = arith.constant 0 : index
    %24 = vector.load %arg16[%c0_15, %c0_16] : memref<20x2xbf16, #tpu.memory_space<vmem>>, vector<20x2xbf16>
    %cst_17 = arith.constant dense<0.000000e+00> : vector<2x2xf32>
    %25 = tpu.matmul %23, %24, %cst_17 {dimension_numbers = #tpu.dot_dimension_numbers<[1], [0], [0], [1], [0, 0, 1, 1], [], []>} : vector<2x20xbf16>, vector<20x2xbf16>, vector<2x2xf32> -> vector<2x2xf32>
    %c0_18 = arith.constant 0 : index
    %c0_19 = arith.constant 0 : index
    %26 = vector.load %arg17[%c0_18, %c0_19] : memref<1x2xf32, #tpu.memory_space<vmem>>, vector<1x2xf32>
    %27 = vector.broadcast %26 : vector<1x2xf32> to vector<2x2xf32>
    %28 = arith.addf %25, %27 : vector<2x2xf32>
    %c0_20 = arith.constant 0 : index
    %c0_21 = arith.constant 0 : index
    %c0_22 = arith.constant 0 : index
    %29 = vector.load %arg18[%c0_20, %c0_21, %c0_22] : memref<1x2x2xf32, #tpu.memory_space<vmem>>, vector<1x2x2xf32>
    %30 = vector.shape_cast %29 : vector<1x2x2xf32> to vector<2x2xf32>
    %31 = vector.shape_cast %28 : vector<2x2xf32> to vector<1x2x2xf32>
    tpu.vector_store %arg18[%c0_20, %c0_21, %c0_22], %31 {strides = array<i32>} : memref<1x2x2xf32, #tpu.memory_space<vmem>>, vector<1x2x2xf32>,
    return
  }
  func.func @transform_0(%arg0: i32) -> (i32, i32) {
    %c0_i32 = arith.constant 0 : i32
    %c0_i32_0 = arith.constant 0 : i32
    return %arg0, %c0_i32 : i32, i32
  }
  func.func @transform_1(%arg0: i32) -> (i32, i32, i32) {
    %c0_i32 = arith.constant 0 : i32
    %c0_i32_0 = arith.constant 0 : i32
    %c0_i32_1 = arith.constant 0 : i32
    %c0_i32_2 = arith.constant 0 : i32
    return %c0_i32, %c0_i32_0, %c0_i32_1 : i32, i32, i32
  }
  func.func @transform_2(%arg0: i32) -> (i32, i32, i32) {
    %c0_i32 = arith.constant 0 : i32
    %c0_i32_0 = arith.constant 0 : i32
    %c0_i32_1 = arith.constant 0 : i32
    %c0_i32_2 = arith.constant 0 : i32
    return %c0_i32, %c0_i32_0, %c0_i32_1 : i32, i32, i32
  }
  func.func @transform_3(%arg0: i32) -> (i32, i32, i32) {
    %c0_i32 = arith.constant 0 : i32
    %c0_i32_0 = arith.constant 0 : i32
    %c0_i32_1 = arith.constant 0 : i32
    %c0_i32_2 = arith.constant 0 : i32
    return %c0_i32, %c0_i32_0, %c0_i32_1 : i32, i32, i32
  }
  func.func @transform_4(%arg0: i32) -> (i32, i32, i32) {
    %c0_i32 = arith.constant 0 : i32
    %c0_i32_0 = arith.constant 0 : i32
    %c0_i32_1 = arith.constant 0 : i32
    %c0_i32_2 = arith.constant 0 : i32
    return %c0_i32, %c0_i32_0, %c0_i32_1 : i32, i32, i32
  }
  func.func @transform_5(%arg0: i32) -> (i32, i32, i32) {
    %c0_i32 = arith.constant 0 : i32
    %c0_i32_0 = arith.constant 0 : i32
    %c0_i32_1 = arith.constant 0 : i32
    %c0_i32_2 = arith.constant 0 : i32
    return %c0_i32, %c0_i32_0, %c0_i32_1 : i32, i32, i32
  }
  func.func @transform_6(%arg0: i32) -> (i32, i32, i32) {
    %c0_i32 = arith.constant 0 : i32
    %c0_i32_0 = arith.constant 0 : i32
    %c0_i32_1 = arith.constant 0 : i32
    %c0_i32_2 = arith.constant 0 : i32
    return %c0_i32, %c0_i32_0, %c0_i32_1 : i32, i32, i32
  }
  func.func @transform_7(%arg0: i32) -> (i32, i32, i32) {
    %c0_i32 = arith.constant 0 : i32
    %c0_i32_0 = arith.constant 0 : i32
    %c0_i32_1 = arith.constant 0 : i32
    %c0_i32_2 = arith.constant 0 : i32
    return %c0_i32, %c0_i32_0, %c0_i32_1 : i32, i32, i32
  }
  func.func @transform_8(%arg0: i32) -> (i32, i32, i32) {
    %c0_i32 = arith.constant 0 : i32
    %c0_i32_0 = arith.constant 0 : i32
    %c0_i32_1 = arith.constant 0 : i32
    %c0_i32_2 = arith.constant 0 : i32
    return %c0_i32, %c0_i32_0, %c0_i32_1 : i32, i32, i32
  }
  func.func @transform_9(%arg0: i32) -> (i32, i32, i32) {
    %c0_i32 = arith.constant 0 : i32
    %c0_i32_0 = arith.constant 0 : i32
    %c0_i32_1 = arith.constant 0 : i32
    %c0_i32_2 = arith.constant 0 : i32
    return %c0_i32, %c0_i32_0, %c0_i32_1 : i32, i32, i32
  }
  func.func @transform_10(%arg0: i32) -> (i32, i32, i32) {
    %c0_i32 = arith.constant 0 : i32
    %c0_i32_0 = arith.constant 0 : i32
    %c0_i32_1 = arith.constant 0 : i32
    %c0_i32_2 = arith.constant 0 : i32
    return %c0_i32, %c0_i32_0, %c0_i32_1 : i32, i32, i32
  }
  func.func @transform_11(%arg0: i32) -> (i32, i32, i32) {
    %c0_i32 = arith.constant 0 : i32
    %c0_i32_0 = arith.constant 0 : i32
    %c0_i32_1 = arith.constant 0 : i32
    %c0_i32_2 = arith.constant 0 : i32
    return %c0_i32, %c0_i32_0, %c0_i32_1 : i32, i32, i32
  }
  func.func @transform_12(%arg0: i32) -> (i32, i32, i32) {
    %c0_i32 = arith.constant 0 : i32
    %c0_i32_0 = arith.constant 0 : i32
    %c0_i32_1 = arith.constant 0 : i32
    %c0_i32_2 = arith.constant 0 : i32
    return %c0_i32, %c0_i32_0, %c0_i32_1 : i32, i32, i32
  }
  func.func @transform_13(%arg0: i32) -> (i32, i32) {
    %c0_i32 = arith.constant 0 : i32
    %c0_i32_0 = arith.constant 0 : i32
    %c0_i32_1 = arith.constant 0 : i32
    return %c0_i32, %c0_i32_0 : i32, i32
  }
  func.func @transform_14(%arg0: i32) -> (i32, i32) {
    %c0_i32 = arith.constant 0 : i32
    %c0_i32_0 = arith.constant 0 : i32
    %c0_i32_1 = arith.constant 0 : i32
    return %c0_i32, %c0_i32_0 : i32, i32
  }
  func.func @transform_15(%arg0: i32) -> (i32, i32) {
    %c0_i32 = arith.constant 0 : i32
    %c0_i32_0 = arith.constant 0 : i32
    %c0_i32_1 = arith.constant 0 : i32
    return %c0_i32, %c0_i32_0 : i32, i32
  }
  func.func @transform_16(%arg0: i32) -> (i32, i32) {
    %c0_i32 = arith.constant 0 : i32
    %c0_i32_0 = arith.constant 0 : i32
    %c0_i32_1 = arith.constant 0 : i32
    return %c0_i32, %c0_i32_0 : i32, i32
  }
  func.func @transform_17(%arg0: i32) -> (i32, i32, i32) {
    %c0_i32 = arith.constant 0 : i32
    %c0_i32_0 = arith.constant 0 : i32
    %c0_i32_1 = arith.constant 0 : i32
    return %arg0, %c0_i32, %c0_i32_0 : i32, i32, i32
  }
}

</mosaic_0001>

<llo_original>
// kernel: tpu_custom_call.1
$region0: #{tpu_custom_call.1}
  #allocation0 [shape = 'u32[]', space=smem, size = 0x4, offset = 0x4, fixed_abs, tag = 'smem constant byte address 0x4 - core index']
  #allocation1 [shape = 'u32[144,128]{1,0:T(1,128)}', space=vmem, size = 0x12000, scoped, tag = 'internal scratch']
  #allocation2 [shape = 'bf16[32,96]{1,0:T(8,128)(2,1)}', space=vmem, size = 0x2000, scoped, tag = 'scratch operand']
  #allocation3 [shape = 'bf16[32,32]{1,0:T(8,128)(2,1)}', space=vmem, size = 0x2000, scoped, tag = 'scratch operand']
  #allocation4 [shape = 'f32[2,32]{1,0:T(2,128)}', space=vmem, size = 0x400, scoped, tag = 'scratch operand']
  %s0 = inlined_call_operand.vmem [shape: bf16[64,32], index: 0, kind: input, shape index: {}]
  %s1 = inlined_call_operand.vmem [shape: bf16[2,32,96], index: 1, kind: input, shape index: {}]
  %s2 = inlined_call_operand.vmem [shape: f32[2,1,96], index: 2, kind: input, shape index: {}]
  %s3 = inlined_call_operand.vmem [shape: bf16[2,32,32], index: 3, kind: input, shape index: {}]
  %s4 = inlined_call_operand.vmem [shape: f32[2,1,32], index: 4, kind: input, shape index: {}]
  %s5 = inlined_call_operand.vmem [shape: f32[2,1,32], index: 5, kind: input, shape index: {}]
  %s6 = inlined_call_operand.vmem [shape: f32[2,1,32], index: 6, kind: input, shape index: {}]
  %s7 = inlined_call_operand.vmem [shape: bf16[2,32,64], index: 7, kind: input, shape index: {}]
  %s8 = inlined_call_operand.vmem [shape: f32[2,1,64], index: 8, kind: input, shape index: {}]
  %s9 = inlined_call_operand.vmem [shape: bf16[2,64,32], index: 9, kind: input, shape index: {}]
  %s10 = inlined_call_operand.vmem [shape: f32[2,1,32], index: 10, kind: input, shape index: {}]
  %s11 = inlined_call_operand.vmem [shape: f32[2,1,32], index: 11, kind: input, shape index: {}]
  %s12 = inlined_call_operand.vmem [shape: f32[2,1,32], index: 12, kind: input, shape index: {}]
  %s13 = inlined_call_operand.vmem [shape: bf16[32,20], index: 13, kind: input, shape index: {}]
  %s14 = inlined_call_operand.vmem [shape: f32[1,20], index: 14, kind: input, shape index: {}]
  %s15 = inlined_call_operand.vmem [shape: bf16[20,2], index: 15, kind: input, shape index: {}]
  %s16 = inlined_call_operand.vmem [shape: f32[1,2], index: 16, kind: input, shape index: {}]
  %s17 = inlined_call_operand.hbm [shape: f32[2,2,2], index: 17, kind: output, shape index: {}]
  %s18 = sld [smem:[#allocation0]]
  $region108: #{tpu_custom_call.1} parent=0
    _
  %s20 = ssub.s32 1, %s18
  %s21 = scalar_select 0, %s20, %s18
  $region1: #{tpu_custom_call.1} parent=0
    #allocation5 [shape = 'u8[2048]{0}', space=vmem, size = 0x800, scoped, tag = 'output window, operand 0']
    #allocation6 [shape = 's32[2]{0}', space=sflag, size = 0x8, scoped, tag = 'scoped memory for tpu_custom_call.1']
    %22 = vsyncpa [#allocation6], 0
    %s23 = scalar_lea.sflag [#allocation6], 1
    %24 = vsyncpa %s23, 0
    loop: start=0, step=1, limit=4
    $region2: #{tpu_custom_call.1} parent=1 // loop_pre_header
      _
    $region3: #{tpu_custom_call.1} parent=1 // loop_header
      %s26 = sphi 0, %s30
      %p27 = scmp.ge.s32.totalorder %s26, 4
      %s36 = sphi 0, %s38
      %s39 = sphi 0, %s36
      %s40 = sphi 0, %s39
      %s56 = sphi 0, %s40
      %s60 = sphi 0, %s60
      %s62 = sphi 0, %s60
      %s63 = sphi 0, %s62
      %s77 = sphi 0, %s63
      %s81 = sphi 0, %s81
      %s83 = sphi 0, %s81
      %s84 = sphi 0, %s83
      %s98 = sphi 0, %s84
      %s102 = sphi 0, %s102
      %s104 = sphi 0, %s102
      %s105 = sphi 0, %s104
      %s119 = sphi 0, %s105
      %s123 = sphi 0, %s123
      %s125 = sphi 0, %s123
      %s126 = sphi 0, %s125
      %s140 = sphi 0, %s126
      %s144 = sphi 0, %s144
      %s146 = sphi 0, %s144
      %s147 = sphi 0, %s146
      %s161 = sphi 0, %s147
      %s165 = sphi 0, %s165
      %s167 = sphi 0, %s165
      %s168 = sphi 0, %s167
      %s182 = sphi 0, %s168
      %s186 = sphi 0, %s186
      %s188 = sphi 0, %s186
      %s189 = sphi 0, %s188
      %s203 = sphi 0, %s189
      %s207 = sphi 0, %s207
      %s209 = sphi 0, %s207
      %s210 = sphi 0, %s209
      %s224 = sphi 0, %s210
      %s228 = sphi 0, %s228
      %s230 = sphi 0, %s228
      %s231 = sphi 0, %s230
      %s245 = sphi 0, %s231
      %s249 = sphi 0, %s249
      %s251 = sphi 0, %s249
      %s252 = sphi 0, %s251
      %s266 = sphi 0, %s252
      %s270 = sphi 0, %s270
      %s272 = sphi 0, %s270
      %s273 = sphi 0, %s272
      %s287 = sphi 0, %s273
      %s291 = sphi 0, %s291
      %s293 = sphi 0, %s291
      %s294 = sphi 0, %s293
      %s308 = sphi 0, %s294
      %s312 = sphi 0, %s312
      %s314 = sphi 0, %s312
      %s315 = sphi 0, %s314
      %s329 = sphi 0, %s315
      %s333 = sphi 0, %s333
      %s335 = sphi 0, %s333
      %s336 = sphi 0, %s335
      %s350 = sphi 0, %s336
      %s354 = sphi 0, %s354
      %s356 = sphi 0, %s354
      %s357 = sphi 0, %s356
      %s371 = sphi 0, %s357
      %s375 = sphi 0, %s375
      %s377 = sphi 0, %s375
      %s378 = sphi 0, %s377
      %s392 = sphi 0, %s378
      %s398 = sphi 0, %s400
      %s401 = sphi 0, %s398
      %s402 = sphi 0, %s401
      %s418 = sphi 0, %s402
    $region4: #{tpu_custom_call.1} parent=1 // loop_header_branch
      %29 = sbr.rel (%p27) target = $region8
    $region5: #{tpu_custom_call.1} parent=1 // loop_body
      %s31 = ssub.s32 %s26, 1
      %s32 = ssub.s32 %s26, 2
      %s33 = sadd.s32 %s26, 1
      %s34 = ssub.s32 %s26, %s33
      %p35 = scmp.eq.s32.totalorder %s34, 0
      %s37 = sadd.s32 %s36, 1
      %s38 = scalar_select %p35, %s36, %s37
      %p41 = pneg %p35
      %p42 = scmp.eq.s32.totalorder %s26, 1
      %p43 = por %p41, %p42
      %p44 = scmp.ne.s32.totalorder %s36, %s39
      %p45 = scmp.eq.s32.totalorder %s26, 0
      %p46 = por %p44, %p45
      %p47 = scmp.ne.s32.totalorder %s36, %s39
      %p48 = scmp.eq.s32.totalorder %s31, 1
      %p49 = por %p47, %p48
      %p50 = scmp.ne.s32.totalorder %s39, %s40
      %p51 = scmp.eq.s32.totalorder %s31, 0
      %p52 = por %p50, %p51
      %p53 = scmp.ne.s32.totalorder %s39, %s40
      %p54 = scmp.eq.s32.totalorder %s32, 1
      %p55 = por %p53, %p54
      %p57 = scmp.ne.s32.totalorder %s40, %s56
      %p58 = scmp.eq.s32.totalorder %s32, 0
      %p59 = por %p57, %p58
      %s61 = sadd.s32 %s60, 1
      %p64 = scmp.eq.s32.totalorder %s26, 1
      %p65 = scmp.ne.s32.totalorder %s60, %s62
      %p66 = scmp.eq.s32.totalorder %s26, 0
      %p67 = por %p65, %p66
      %p68 = scmp.ne.s32.totalorder %s60, %s62
      %p69 = scmp.eq.s32.totalorder %s31, 1
      %p70 = por %p68, %p69
      %p71 = scmp.ne.s32.totalorder %s62, %s63
      %p72 = scmp.eq.s32.totalorder %s31, 0
      %p73 = por %p71, %p72
      %p74 = scmp.ne.s32.totalorder %s62, %s63
      %p75 = scmp.eq.s32.totalorder %s32, 1
      %p76 = por %p74, %p75
      %p78 = scmp.ne.s32.totalorder %s63, %s77
      %p79 = scmp.eq.s32.totalorder %s32, 0
      %p80 = por %p78, %p79
      %s82 = sadd.s32 %s81, 1
      %p85 = scmp.eq.s32.totalorder %s26, 1
      %p86 = scmp.ne.s32.totalorder %s81, %s83
      %p87 = scmp.eq.s32.totalorder %s26, 0
      %p88 = por %p86, %p87
      %p89 = scmp.ne.s32.totalorder %s81, %s83
      %p90 = scmp.eq.s32.totalorder %s31, 1
      %p91 = por %p89, %p90
      %p92 = scmp.ne.s32.totalorder %s83, %s84
      %p93 = scmp.eq.s32.totalorder %s31, 0
      %p94 = por %p92, %p93
      %p95 = scmp.ne.s32.totalorder %s83, %s84
      %p96 = scmp.eq.s32.totalorder %s32, 1
      %p97 = por %p95, %p96
      %p99 = scmp.ne.s32.totalorder %s84, %s98
      %p100 = scmp.eq.s32.totalorder %s32, 0
      %p101 = por %p99, %p100
      %s103 = sadd.s32 %s102, 1
      %p106 = scmp.eq.s32.totalorder %s26, 1
      %p107 = scmp.ne.s32.totalorder %s102, %s104
      %p108 = scmp.eq.s32.totalorder %s26, 0
      %p109 = por %p107, %p108
      %p110 = scmp.ne.s32.totalorder %s102, %s104
      %p111 = scmp.eq.s32.totalorder %s31, 1
      %p112 = por %p110, %p111
      %p113 = scmp.ne.s32.totalorder %s104, %s105
      %p114 = scmp.eq.s32.totalorder %s31, 0
      %p115 = por %p113, %p114
      %p116 = scmp.ne.s32.totalorder %s104, %s105
      %p117 = scmp.eq.s32.totalorder %s32, 1
      %p118 = por %p116, %p117
      %p120 = scmp.ne.s32.totalorder %s105, %s119
      %p121 = scmp.eq.s32.totalorder %s32, 0
      %p122 = por %p120, %p121
      %s124 = sadd.s32 %s123, 1
      %p127 = scmp.eq.s32.totalorder %s26, 1
      %p128 = scmp.ne.s32.totalorder %s123, %s125
      %p129 = scmp.eq.s32.totalorder %s26, 0
      %p130 = por %p128, %p129
      %p131 = scmp.ne.s32.totalorder %s123, %s125
      %p132 = scmp.eq.s32.totalorder %s31, 1
      %p133 = por %p131, %p132
      %p134 = scmp.ne.s32.totalorder %s125, %s126
      %p135 = scmp.eq.s32.totalorder %s31, 0
      %p136 = por %p134, %p135
      %p137 = scmp.ne.s32.totalorder %s125, %s126
      %p138 = scmp.eq.s32.totalorder %s32, 1
      %p139 = por %p137, %p138
      %p141 = scmp.ne.s32.totalorder %s126, %s140
      %p142 = scmp.eq.s32.totalorder %s32, 0
      %p143 = por %p141, %p142
      %s145 = sadd.s32 %s144, 1
      %p148 = scmp.eq.s32.totalorder %s26, 1
      %p149 = scmp.ne.s32.totalorder %s144, %s146
      %p150 = scmp.eq.s32.totalorder %s26, 0
      %p151 = por %p149, %p150
      %p152 = scmp.ne.s32.totalorder %s144, %s146
      %p153 = scmp.eq.s32.totalorder %s31, 1
      %p154 = por %p152, %p153
      %p155 = scmp.ne.s32.totalorder %s146, %s147
      %p156 = scmp.eq.s32.totalorder %s31, 0
      %p157 = por %p155, %p156
      %p158 = scmp.ne.s32.totalorder %s146, %s147
      %p159 = scmp.eq.s32.totalorder %s32, 1
      %p160 = por %p158, %p159
      %p162 = scmp.ne.s32.totalorder %s147, %s161
      %p163 = scmp.eq.s32.totalorder %s32, 0
      %p164 = por %p162, %p163
      %s166 = sadd.s32 %s165, 1
      %p169 = scmp.eq.s32.totalorder %s26, 1
      %p170 = scmp.ne.s32.totalorder %s165, %s167
      %p171 = scmp.eq.s32.totalorder %s26, 0
      %p172 = por %p170, %p171
      %p173 = scmp.ne.s32.totalorder %s165, %s167
      %p174 = scmp.eq.s32.totalorder %s31, 1
      %p175 = por %p173, %p174
      %p176 = scmp.ne.s32.totalorder %s167, %s168
      %p177 = scmp.eq.s32.totalorder %s31, 0
      %p178 = por %p176, %p177
      %p179 = scmp.ne.s32.totalorder %s167, %s168
      %p180 = scmp.eq.s32.totalorder %s32, 1
      %p181 = por %p179, %p180
      %p183 = scmp.ne.s32.totalorder %s168, %s182
      %p184 = scmp.eq.s32.totalorder %s32, 0
      %p185 = por %p183, %p184
      %s187 = sadd.s32 %s186, 1
      %p190 = scmp.eq.s32.totalorder %s26, 1
      %p191 = scmp.ne.s32.totalorder %s186, %s188
      %p192 = scmp.eq.s32.totalorder %s26, 0
      %p193 = por %p191, %p192
      %p194 = scmp.ne.s32.totalorder %s186, %s188
      %p195 = scmp.eq.s32.totalorder %s31, 1
      %p196 = por %p194, %p195
      %p197 = scmp.ne.s32.totalorder %s188, %s189
      %p198 = scmp.eq.s32.totalorder %s31, 0
      %p199 = por %p197, %p198
      %p200 = scmp.ne.s32.totalorder %s188, %s189
      %p201 = scmp.eq.s32.totalorder %s32, 1
      %p202 = por %p200, %p201
      %p204 = scmp.ne.s32.totalorder %s189, %s203
      %p205 = scmp.eq.s32.totalorder %s32, 0
      %p206 = por %p204, %p205
      %s208 = sadd.s32 %s207, 1
      %p211 = scmp.eq.s32.totalorder %s26, 1
      %p212 = scmp.ne.s32.totalorder %s207, %s209
      %p213 = scmp.eq.s32.totalorder %s26, 0
      %p214 = por %p212, %p213
      %p215 = scmp.ne.s32.totalorder %s207, %s209
      %p216 = scmp.eq.s32.totalorder %s31, 1
      %p217 = por %p215, %p216
      %p218 = scmp.ne.s32.totalorder %s209, %s210
      %p219 = scmp.eq.s32.totalorder %s31, 0
      %p220 = por %p218, %p219
      %p221 = scmp.ne.s32.totalorder %s209, %s210
      %p222 = scmp.eq.s32.totalorder %s32, 1
      %p223 = por %p221, %p222
      %p225 = scmp.ne.s32.totalorder %s210, %s224
      %p226 = scmp.eq.s32.totalorder %s32, 0
      %p227 = por %p225, %p226
      %s229 = sadd.s32 %s228, 1
      %p232 = scmp.eq.s32.totalorder %s26, 1
      %p233 = scmp.ne.s32.totalorder %s228, %s230
      %p234 = scmp.eq.s32.totalorder %s26, 0
      %p235 = por %p233, %p234
      %p236 = scmp.ne.s32.totalorder %s228, %s230
      %p237 = scmp.eq.s32.totalorder %s31, 1
      %p238 = por %p236, %p237
      %p239 = scmp.ne.s32.totalorder %s230, %s231
      %p240 = scmp.eq.s32.totalorder %s31, 0
      %p241 = por %p239, %p240
      %p242 = scmp.ne.s32.totalorder %s230, %s231
      %p243 = scmp.eq.s32.totalorder %s32, 1
      %p244 = por %p242, %p243
      %p246 = scmp.ne.s32.totalorder %s231, %s245
      %p247 = scmp.eq.s32.totalorder %s32, 0
      %p248 = por %p246, %p247
      %s250 = sadd.s32 %s249, 1
      %p253 = scmp.eq.s32.totalorder %s26, 1
      %p254 = scmp.ne.s32.totalorder %s249, %s251
      %p255 = scmp.eq.s32.totalorder %s26, 0
      %p256 = por %p254, %p255
      %p257 = scmp.ne.s32.totalorder %s249, %s251
      %p258 = scmp.eq.s32.totalorder %s31, 1
      %p259 = por %p257, %p258
      %p260 = scmp.ne.s32.totalorder %s251, %s252
      %p261 = scmp.eq.s32.totalorder %s31, 0
      %p262 = por %p260, %p261
      %p263 = scmp.ne.s32.totalorder %s251, %s252
      %p264 = scmp.eq.s32.totalorder %s32, 1
      %p265 = por %p263, %p264
      %p267 = scmp.ne.s32.totalorder %s252, %s266
      %p268 = scmp.eq.s32.totalorder %s32, 0
      %p269 = por %p267, %p268
      %s271 = sadd.s32 %s270, 1
      %p274 = scmp.eq.s32.totalorder %s26, 1
      %p275 = scmp.ne.s32.totalorder %s270, %s272
      %p276 = scmp.eq.s32.totalorder %s26, 0
      %p277 = por %p275, %p276
      %p278 = scmp.ne.s32.totalorder %s270, %s272
      %p279 = scmp.eq.s32.totalorder %s31, 1
      %p280 = por %p278, %p279
      %p281 = scmp.ne.s32.totalorder %s272, %s273
      %p282 = scmp.eq.s32.totalorder %s31, 0
      %p283 = por %p281, %p282
      %p284 = scmp.ne.s32.totalorder %s272, %s273
      %p285 = scmp.eq.s32.totalorder %s32, 1
      %p286 = por %p284, %p285
      %p288 = scmp.ne.s32.totalorder %s273, %s287
      %p289 = scmp.eq.s32.totalorder %s32, 0
      %p290 = por %p288, %p289
      %s292 = sadd.s32 %s291, 1
      %p295 = scmp.eq.s32.totalorder %s26, 1
      %p296 = scmp.ne.s32.totalorder %s291, %s293
      %p297 = scmp.eq.s32.totalorder %s26, 0
      %p298 = por %p296, %p297
      %p299 = scmp.ne.s32.totalorder %s291, %s293
      %p300 = scmp.eq.s32.totalorder %s31, 1
      %p301 = por %p299, %p300
      %p302 = scmp.ne.s32.totalorder %s293, %s294
      %p303 = scmp.eq.s32.totalorder %s31, 0
      %p304 = por %p302, %p303
      %p305 = scmp.ne.s32.totalorder %s293, %s294
      %p306 = scmp.eq.s32.totalorder %s32, 1
      %p307 = por %p305, %p306
      %p309 = scmp.ne.s32.totalorder %s294, %s308
      %p310 = scmp.eq.s32.totalorder %s32, 0
      %p311 = por %p309, %p310
      %s313 = sadd.s32 %s312, 1
      %p316 = scmp.eq.s32.totalorder %s26, 1
      %p317 = scmp.ne.s32.totalorder %s312, %s314
      %p318 = scmp.eq.s32.totalorder %s26, 0
      %p319 = por %p317, %p318
      %p320 = scmp.ne.s32.totalorder %s312, %s314
      %p321 = scmp.eq.s32.totalorder %s31, 1
      %p322 = por %p320, %p321
      %p323 = scmp.ne.s32.totalorder %s314, %s315
      %p324 = scmp.eq.s32.totalorder %s31, 0
      %p325 = por %p323, %p324
      %p326 = scmp.ne.s32.totalorder %s314, %s315
      %p327 = scmp.eq.s32.totalorder %s32, 1
      %p328 = por %p326, %p327
      %p330 = scmp.ne.s32.totalorder %s315, %s329
      %p331 = scmp.eq.s32.totalorder %s32, 0
      %p332 = por %p330, %p331
      %s334 = sadd.s32 %s333, 1
      %p337 = scmp.eq.s32.totalorder %s26, 1
      %p338 = scmp.ne.s32.totalorder %s333, %s335
      %p339 = scmp.eq.s32.totalorder %s26, 0
      %p340 = por %p338, %p339
      %p341 = scmp.ne.s32.totalorder %s333, %s335
      %p342 = scmp.eq.s32.totalorder %s31, 1
      %p343 = por %p341, %p342
      %p344 = scmp.ne.s32.totalorder %s335, %s336
      %p345 = scmp.eq.s32.totalorder %s31, 0
      %p346 = por %p344, %p345
      %p347 = scmp.ne.s32.totalorder %s335, %s336
      %p348 = scmp.eq.s32.totalorder %s32, 1
      %p349 = por %p347, %p348
      %p351 = scmp.ne.s32.totalorder %s336, %s350
      %p352 = scmp.eq.s32.totalorder %s32, 0
      %p353 = por %p351, %p352
      %s355 = sadd.s32 %s354, 1
      %p358 = scmp.eq.s32.totalorder %s26, 1
      %p359 = scmp.ne.s32.totalorder %s354, %s356
      %p360 = scmp.eq.s32.totalorder %s26, 0
      %p361 = por %p359, %p360
      %p362 = scmp.ne.s32.totalorder %s354, %s356
      %p363 = scmp.eq.s32.totalorder %s31, 1
      %p364 = por %p362, %p363
      %p365 = scmp.ne.s32.totalorder %s356, %s357
      %p366 = scmp.eq.s32.totalorder %s31, 0
      %p367 = por %p365, %p366
      %p368 = scmp.ne.s32.totalorder %s356, %s357
      %p369 = scmp.eq.s32.totalorder %s32, 1
      %p370 = por %p368, %p369
      %p372 = scmp.ne.s32.totalorder %s357, %s371
      %p373 = scmp.eq.s32.totalorder %s32, 0
      %p374 = por %p372, %p373
      %s376 = sadd.s32 %s375, 1
      %p379 = scmp.eq.s32.totalorder %s26, 1
      %p380 = scmp.ne.s32.totalorder %s375, %s377
      %p381 = scmp.eq.s32.totalorder %s26, 0
      %p382 = por %p380, %p381
      %p383 = scmp.ne.s32.totalorder %s375, %s377
      %p384 = scmp.eq.s32.totalorder %s31, 1
      %p385 = por %p383, %p384
      %p386 = scmp.ne.s32.totalorder %s377, %s378
      %p387 = scmp.eq.s32.totalorder %s31, 0
      %p388 = por %p386, %p387
      %p389 = scmp.ne.s32.totalorder %s377, %s378
      %p390 = scmp.eq.s32.totalorder %s32, 1
      %p391 = por %p389, %p390
      %p393 = scmp.ne.s32.totalorder %s378, %s392
      %p394 = scmp.eq.s32.totalorder %s32, 0
      %p395 = por %p393, %p394
      %s396 = ssub.s32 %s26, %s33
      %p397 = scmp.eq.s32.totalorder %s396, 0
      %s399 = sadd.s32 %s398, 1
      %s400 = scalar_select %p397, %s398, %s399
      %p403 = pneg %p397
      %p404 = scmp.eq.s32.totalorder %s26, 1
      %p405 = por %p403, %p404
      %p406 = scmp.ne.s32.totalorder %s398, %s401
      %p407 = scmp.eq.s32.totalorder %s26, 0
      %p408 = por %p406, %p407
      %p409 = scmp.ne.s32.totalorder %s398, %s401
      %p410 = scmp.eq.s32.totalorder %s31, 1
      %p411 = por %p409, %p410
      %p412 = scmp.ne.s32.totalorder %s401, %s402
      %p413 = scmp.eq.s32.totalorder %s31, 0
      %p414 = por %p412, %p413
      %p415 = scmp.ne.s32.totalorder %s401, %s402
      %p416 = scmp.eq.s32.totalorder %s32, 1
      %p417 = por %p415, %p416
      %p419 = scmp.ne.s32.totalorder %s402, %s418
      %p420 = scmp.eq.s32.totalorder %s32, 0
      %p421 = por %p419, %p420
      %p422 = scmp.le.s32.totalorder 1, %s26
      %p423 = scmp.lt.s32.totalorder %s26, 3
      %p424 = pnand %p422, %p423
      %p425 = pneg %p424
      // Predicated region
      $region9: #{tpu_custom_call.1} parent=5 // pred_check
        _
      $region10: #{tpu_custom_call.1} parent=5 // pred_check_branch
        %427 = sbr.rel (%p424) target = $region12
      $region11: #{tpu_custom_call.1} parent=5 // pred_region
        %s428 = ssub.s32 %s26, 1
        // Predicated region
        $region13: #{tpu_custom_call.1} parent=11 // pred_check
          %p429 = pneg %p73
        $region14: #{tpu_custom_call.1} parent=11 // pred_check_branch
          %431 = sbr.rel (%p429) target = $region16
        $region15: #{tpu_custom_call.1} parent=11 // pred_region
          _
        $region16: #{tpu_custom_call.1} parent=11 // pred_fallthru
          _
        // Predicated region
        $region17: #{tpu_custom_call.1} parent=11 // pred_check
          %p432 = pneg %p94
        $region18: #{tpu_custom_call.1} parent=11 // pred_check_branch
          %434 = sbr.rel (%p432) target = $region20
        $region19: #{tpu_custom_call.1} parent=11 // pred_region
          _
        $region20: #{tpu_custom_call.1} parent=11 // pred_fallthru
          _
        // Predicated region
        $region21: #{tpu_custom_call.1} parent=11 // pred_check
          %p435 = pneg %p115
        $region22: #{tpu_custom_call.1} parent=11 // pred_check_branch
          %437 = sbr.rel (%p435) target = $region24
        $region23: #{tpu_custom_call.1} parent=11 // pred_region
          _
        $region24: #{tpu_custom_call.1} parent=11 // pred_fallthru
          _
        // Predicated region
        $region25: #{tpu_custom_call.1} parent=11 // pred_check
          %p438 = pneg %p136
        $region26: #{tpu_custom_call.1} parent=11 // pred_check_branch
          %440 = sbr.rel (%p438) target = $region28
        $region27: #{tpu_custom_call.1} parent=11 // pred_region
          _
        $region28: #{tpu_custom_call.1} parent=11 // pred_fallthru
          _
        // Predicated region
        $region29: #{tpu_custom_call.1} parent=11 // pred_check
          %p441 = pneg %p157
        $region30: #{tpu_custom_call.1} parent=11 // pred_check_branch
          %443 = sbr.rel (%p441) target = $region32
        $region31: #{tpu_custom_call.1} parent=11 // pred_region
          _
        $region32: #{tpu_custom_call.1} parent=11 // pred_fallthru
          _
        // Predicated region
        $region33: #{tpu_custom_call.1} parent=11 // pred_check
          %p444 = pneg %p178
        $region34: #{tpu_custom_call.1} parent=11 // pred_check_branch
          %446 = sbr.rel (%p444) target = $region36
        $region35: #{tpu_custom_call.1} parent=11 // pred_region
          _
        $region36: #{tpu_custom_call.1} parent=11 // pred_fallthru
          _
        // Predicated region
        $region37: #{tpu_custom_call.1} parent=11 // pred_check
          %p447 = pneg %p199
        $region38: #{tpu_custom_call.1} parent=11 // pred_check_branch
          %449 = sbr.rel (%p447) target = $region40
        $region39: #{tpu_custom_call.1} parent=11 // pred_region
          _
        $region40: #{tpu_custom_call.1} parent=11 // pred_fallthru
          _
        // Predicated region
        $region41: #{tpu_custom_call.1} parent=11 // pred_check
          %p450 = pneg %p220
        $region42: #{tpu_custom_call.1} parent=11 // pred_check_branch
          %452 = sbr.rel (%p450) target = $region44
        $region43: #{tpu_custom_call.1} parent=11 // pred_region
          _
        $region44: #{tpu_custom_call.1} parent=11 // pred_fallthru
          _
        // Predicated region
        $region45: #{tpu_custom_call.1} parent=11 // pred_check
          %p453 = pneg %p241
        $region46: #{tpu_custom_call.1} parent=11 // pred_check_branch
          %455 = sbr.rel (%p453) target = $region48
        $region47: #{tpu_custom_call.1} parent=11 // pred_region
          _
        $region48: #{tpu_custom_call.1} parent=11 // pred_fallthru
          _
        // Predicated region
        $region49: #{tpu_custom_call.1} parent=11 // pred_check
          %p456 = pneg %p262
        $region50: #{tpu_custom_call.1} parent=11 // pred_check_branch
          %458 = sbr.rel (%p456) target = $region52
        $region51: #{tpu_custom_call.1} parent=11 // pred_region
          _
        $region52: #{tpu_custom_call.1} parent=11 // pred_fallthru
          _
        // Predicated region
        $region53: #{tpu_custom_call.1} parent=11 // pred_check
          %p459 = pneg %p283
        $region54: #{tpu_custom_call.1} parent=11 // pred_check_branch
          %461 = sbr.rel (%p459) target = $region56
        $region55: #{tpu_custom_call.1} parent=11 // pred_region
          _
        $region56: #{tpu_custom_call.1} parent=11 // pred_fallthru
          _
        // Predicated region
        $region57: #{tpu_custom_call.1} parent=11 // pred_check
          %p462 = pneg %p304
        $region58: #{tpu_custom_call.1} parent=11 // pred_check_branch
          %464 = sbr.rel (%p462) target = $region60
        $region59: #{tpu_custom_call.1} parent=11 // pred_region
          _
        $region60: #{tpu_custom_call.1} parent=11 // pred_fallthru
          _
        // Predicated region
        $region61: #{tpu_custom_call.1} parent=11 // pred_check
          %p465 = pneg %p325
        $region62: #{tpu_custom_call.1} parent=11 // pred_check_branch
          %467 = sbr.rel (%p465) target = $region64
        $region63: #{tpu_custom_call.1} parent=11 // pred_region
          _
        $region64: #{tpu_custom_call.1} parent=11 // pred_fallthru
          _
        // Predicated region
        $region65: #{tpu_custom_call.1} parent=11 // pred_check
          %p468 = pneg %p346
        $region66: #{tpu_custom_call.1} parent=11 // pred_check_branch
          %470 = sbr.rel (%p468) target = $region68
        $region67: #{tpu_custom_call.1} parent=11 // pred_region
          _
        $region68: #{tpu_custom_call.1} parent=11 // pred_fallthru
          _
        // Predicated region
        $region69: #{tpu_custom_call.1} parent=11 // pred_check
          %p471 = pneg %p367
        $region70: #{tpu_custom_call.1} parent=11 // pred_check_branch
          %473 = sbr.rel (%p471) target = $region72
        $region71: #{tpu_custom_call.1} parent=11 // pred_region
          _
        $region72: #{tpu_custom_call.1} parent=11 // pred_fallthru
          _
        // Predicated region
        $region73: #{tpu_custom_call.1} parent=11 // pred_check
          %p474 = pneg %p388
        $region74: #{tpu_custom_call.1} parent=11 // pred_check_branch
          %476 = sbr.rel (%p474) target = $region76
        $region75: #{tpu_custom_call.1} parent=11 // pred_region
          _
        $region76: #{tpu_custom_call.1} parent=11 // pred_fallthru
          _
      $region12: #{tpu_custom_call.1} parent=5 // pred_fallthru
        _
      %p477 = scmp.lt.s32.totalorder %s26, 2
      // Predicated region
      $region77: #{tpu_custom_call.1} parent=5 // pred_check
        %p478 = pneg %p477
      $region78: #{tpu_custom_call.1} parent=5 // pred_check_branch
        %480 = sbr.rel (%p478) target = $region80
      $region79: #{tpu_custom_call.1} parent=5 // pred_region
        // Predicated region
        $region81: #{tpu_custom_call.1} parent=79 // pred_check
          %p481 = pneg %p46
        $region82: #{tpu_custom_call.1} parent=79 // pred_check_branch
          %483 = sbr.rel (%p481) target = $region84
        $region83: #{tpu_custom_call.1} parent=79 // pred_region
          %s484 = smul.u32 4, %s26
          %p485 = scmp.lt.s32.totalorder %s484, 7
          %s486 = scalar_select %p485, %s484, 7
          %s487 = smul.addr %s486, 4
          %s488 = scalar_lea.vmem %s0, %s487
          %s489 = smul.u32 4, %s26
        $region84: #{tpu_custom_call.1} parent=79 // pred_fallthru
          _
      $region80: #{tpu_custom_call.1} parent=5 // pred_fallthru
        _
      %p490 = scmp.le.s32.totalorder 1, %s26
      %p491 = scmp.lt.s32.totalorder %s26, 3
      %p492 = pnand %p490, %p491
      %p493 = pneg %p492
      // Predicated region
      $region85: #{tpu_custom_call.1} parent=5 // pred_check
        _
      $region86: #{tpu_custom_call.1} parent=5 // pred_check_branch
        %495 = sbr.rel (%p492) target = $region88
      $region87: #{tpu_custom_call.1} parent=5 // pred_region
        %s496 = ssub.s32 %s26, 1
        %s497 = smul.u32 4, %s31
        %p498 = scmp.lt.s32.totalorder %s497, 7
        %s499 = scalar_select %p498, %s497, 7
        %s500 = smul.addr %s499, 4
        %s501 = scalar_lea.vmem %s0, %s500
        %p502 = pneg %p52
        %p503 = pneg %p49
        %p504 = pneg %p73
        %p505 = pneg %p70
        %p506 = pneg %p94
        %p507 = pneg %p91
        %p508 = pneg %p115
        %p509 = pneg %p112
        %p510 = pneg %p136
        %p511 = pneg %p133
        %p512 = pneg %p157
        %p513 = pneg %p154
        %p514 = pneg %p178
        %p515 = pneg %p175
        %p516 = pneg %p199
        %p517 = pneg %p196
        %p518 = pneg %p220
        %p519 = pneg %p217
        %p520 = pneg %p241
        %p521 = pneg %p238
        %p522 = pneg %p262
        %p523 = pneg %p259
        %p524 = pneg %p283
        %p525 = pneg %p280
        %p526 = pneg %p304
        %p527 = pneg %p301
        %p528 = pneg %p325
        %p529 = pneg %p322
        %p530 = pneg %p346
        %p531 = pneg %p343
        %p532 = pneg %p367
        %p533 = pneg %p364
        %p534 = pneg %p388
        %p535 = pneg %p385
        %p536 = pneg %p414
        %p537 = pneg %p411
        %s538 = sand.u32 %s401, 1
        %s539 = scalar_lea.sflag [#allocation6], %s538
        %s540 = sand.u32 %s401, 1
        %s541 = smul.addr %s540, 2
        %s542 = scalar_lea.vmem [#allocation5], %s541
        %s543 = smul.u32 4, %s31
        %p544 = scmp.lt.s32.totalorder %s543, 7
        %s545 = scalar_select %p544, %s543, 7
        %s546 = smul.addr %s545, 4
        %s547 = scalar_lea.vmem %s0, %s546
        %s548 = smul.u32 4, %s31
        %v550 = vld [vmem:[%s547] sm:$0xf]
        %v551 = vld [vmem:[%s547 + $0x4] sm:$0xf]
        %v552 = vld [vmem:[%s547 + $0x8] sm:$0xf]
        %v553 = vld [vmem:[%s547 + $0xc] sm:$0xf]
        %v554 = vunpack.c.l.bf16 %v550
        %v555 = vunpack.c.l.bf16 %v551
        %v556 = vunpack.c.l.bf16 %v552
        %v557 = vunpack.c.l.bf16 %v553
        loop: start=0, step=1, limit=2
        $region89: #{tpu_custom_call.1} parent=87 // loop_pre_header
          _
        $region90: #{tpu_custom_call.1} parent=87 // loop_header
          %s559 = sphi 0, %s563
          %p560 = scmp.ge.s32.totalorder %s559, 2
          %v564 = vphi %v554, %v2260
          %v565 = vphi %v555, %v2261
          %v566 = vphi %v556, %v2262
          %v567 = vphi %v557, %v2263
        $region91: #{tpu_custom_call.1} parent=87 // loop_header_branch
          %562 = sbr.rel (%p560) target = $region95
        $region92: #{tpu_custom_call.1} parent=87 // loop_body
          %v568 = vpack.c.bf16 %v565, %v564
          %v569 = vpack.c.bf16 %v567, %v566
          %s570 = smul.u32 %s559, 4
          %s571 = smul.addr %s570, 4
          %s572 = scalar_lea.vmem %s1, %s571
          %v573 = vld [vmem:[%s572] sm:$0xf]
          %v574 = vld [vmem:[%s572 + $0x4] sm:$0xf]
          %v575 = vld [vmem:[%s572 + $0x8] sm:$0xf]
          %v576 = vld [vmem:[%s572 + $0xc] sm:$0xf]
          %s577 = scalar_lea.vmem %s2, %s559
          %v578 = vld [vmem:[%s577] sm:$0x1]
          %v580 = vlaneseq
          %v581 = vshrl.u32 %v580, 7
          %v582 = vsub.s32 0, %v581
          %v583 = vrot.slane %v578, %v582
          %v589 = vunpack.c.l.b16 %v573
          %v590 = vunpack.c.l.b16 %v574
          %v591 = vunpack.c.l.b16 %v575
          %v592 = vunpack.c.l.b16 %v576
          %v593 = vpack.c.b16 %v590, %v589
          %v594 = vpack.c.b16 %v592, %v591
          %vm597 = vcmask 261120
          %v599 = vsel %vm597, %v568, 0
          %v602 = vsel %vm597, %v569, 0
          %604 = vmatprep.subr.bf16.mxu0 0
          %605 = vmatpush1.bf16.msra.mxu0 0
          %606 = vmatprep.subr.bf16.mxu0 0
          %607 = vmatpush1.bf16.msra.mxu0 0
          %608 = vmatprep.subr.bf16.mxu0 0
          %609 = vmatpush1.bf16.msra.mxu0 0
          %610 = vmatprep.subr.bf16.mxu0 0
          %611 = vmatpush1.bf16.msra.mxu0 0
          %612 = vmatprep.subr.bf16.mxu0 0
          %613 = vmatpush1.bf16.msra.mxu0 0
          %614 = vmatprep.subr.bf16.mxu0 0
          %615 = vmatpush1.bf16.msra.mxu0 0
          %616 = vmatprep.subr.bf16.mxu0 0
          %617 = vmatpush1.bf16.msra.mxu0 %v594
          %618 = vmatprep.subr.bf16.mxu0 0
          %619 = vmatpush1.bf16.msra.mxu0 %v593
          %620 = vmatprep.subr.bf16.mxu0 0
          %621 = vmatpush2.bf16.msra.mxu0 0
          %622 = vmatprep.subr.bf16.mxu0 0
          %623 = vmatpush2.bf16.msra.mxu0 0
          %624 = vmatprep.subr.bf16.mxu0 0
          %625 = vmatpush2.bf16.msra.mxu0 0
          %626 = vmatprep.subr.bf16.mxu0 0
          %627 = vmatpush2.bf16.msra.mxu0 0
          %628 = vmatprep.subr.bf16.mxu0 0
          %629 = vmatpush2.bf16.msra.mxu0 0
          %630 = vmatprep.subr.bf16.mxu0 0
          %631 = vmatpush2.bf16.msra.mxu0 0
          %632 = vmatprep.subr.bf16.mxu0 0
          %633 = vmatpush2.bf16.msra.mxu0 0
          %634 = vmatprep.subr.bf16.mxu0 0
          %635 = vmatpush2.bf16.msra.mxu0 0
          %636 = vmatprep.mubr.bf16.mxu0 0
          %637 = vmatmul.mubr.bf16.gmra.mxu0 %v599
          %v638 = vpop.f32.mrf.mxu0
          %v639 = vadd.f32 %v583, %v638
          %v640 = vpop.f32.mrf.mxu0
          %v641 = vpop.f32.mrf.mxu0
          %v642 = vadd.f32 %v583, %v641
          %v643 = vpop.f32.mrf.mxu0
          %644 = vmatprep.mubr.bf16.mxu0 0
          %645 = vmatmul.mubr.bf16.gmra.mxu0 %v602
          %v646 = vpop.f32.mrf.mxu0
          %v647 = vadd.f32 %v583, %v646
          %v648 = vpop.f32.mrf.mxu0
          %v649 = vpop.f32.mrf.mxu0
          %v650 = vadd.f32 %v583, %v649
          %v651 = vpop.f32.mrf.mxu0
          %652 = vdwg.mxu0
          %v653 = vpack.c.bf16 %v642, %v639
          %v654 = vpack.c.bf16 %v650, %v647
          %v657 = vunpack.c.l.b16 %v653
          %v658 = vunpack.c.h.b16 %v653
          %v659 = vunpack.c.l.b16 %v654
          %v660 = vunpack.c.h.b16 %v654
          %v661 = vpack.c.b16 %v657, %v657
          %v662 = vpack.c.b16 %v658, %v658
          %v663 = vpack.c.b16 %v659, %v659
          %v664 = vpack.c.b16 %v660, %v660
          %vm669 = vcmask 781312
          %670 = vst.msk [vmem:[#allocation2] sm:$0xf] %vm669, %v661
          %671 = vst.msk [vmem:[#allocation2 + $0x4] sm:$0xf] %vm669, %v662
          %672 = vst.msk [vmem:[#allocation2 + $0x8] sm:$0xf] %vm669, %v663
          %673 = vst.msk [vmem:[#allocation2 + $0xc] sm:$0xf] %vm669, %v664
          %v674 = vld [vmem:[#allocation2] sm:$0xf]
          %v675 = vld [vmem:[#allocation2 + $0x4] sm:$0xf]
          %v678 = vunpack.c.l.b16 %v674
          %v679 = vunpack.c.l.b16 %v675
          %v680 = vpack.c.b16 %v679, %v678
          %681 = vrot.lane.b32.xlu0 %v680, 96
          %v682 = vpop.permute.xlu0 %681
          %vm683 = vcmask 64512
          %v685 = vsel %vm683, %v680, 0
          %v688 = vsel %vm683, %v682, 0
          %690 = vmatprep.subr.bf16.mxu0 0
          %691 = vmatpush1.bf16.xpose.msra.mxu0 0
          %692 = vmatprep.subr.bf16.mxu0 0
          %693 = vmatpush1.bf16.xpose.msra.mxu0 0
          %694 = vmatprep.subr.bf16.mxu0 0
          %695 = vmatpush1.bf16.xpose.msra.mxu0 0
          %696 = vmatprep.subr.bf16.mxu0 0
          %697 = vmatpush1.bf16.xpose.msra.mxu0 0
          %698 = vmatprep.subr.bf16.mxu0 0
          %699 = vmatpush1.bf16.xpose.msra.mxu0 0
          %700 = vmatprep.subr.bf16.mxu0 0
          %701 = vmatpush1.bf16.xpose.msra.mxu0 0
          %702 = vmatprep.subr.bf16.mxu0 0
          %703 = vmatpush1.bf16.xpose.msra.mxu0 0
          %704 = vmatprep.subr.bf16.mxu0 0
          %705 = vmatpush1.bf16.xpose.msra.mxu0 %v688
          %706 = vmatprep.subr.bf16.mxu0 0
          %707 = vmatpush2.bf16.xpose.msra.mxu0 0
          %708 = vmatprep.subr.bf16.mxu0 0
          %709 = vmatpush2.bf16.xpose.msra.mxu0 0
          %710 = vmatprep.subr.bf16.mxu0 0
          %711 = vmatpush2.bf16.xpose.msra.mxu0 0
          %712 = vmatprep.subr.bf16.mxu0 0
          %713 = vmatpush2.bf16.xpose.msra.mxu0 0
          %714 = vmatprep.subr.bf16.mxu0 0
          %715 = vmatpush2.bf16.xpose.msra.mxu0 0
          %716 = vmatprep.subr.bf16.mxu0 0
          %717 = vmatpush2.bf16.xpose.msra.mxu0 0
          %718 = vmatprep.subr.bf16.mxu0 0
          %719 = vmatpush2.bf16.xpose.msra.mxu0 0
          %720 = vmatprep.subr.bf16.mxu0 0
          %721 = vmatpush2.bf16.xpose.msra.mxu0 0
          %722 = vmatprep.mubr.bf16.mxu0 0
          %723 = vmatmul.mubr.bf16.gmra.mxu0 %v685
          %v724 = vpop.f32.mrf.mxu0
          %v725 = vadd.f32 0.0, %v724
          %v726 = vpop.f32.mrf.mxu0
          %v727 = vpop.f32.mrf.mxu0
          %v728 = vadd.f32 0.0, %v727
          %v729 = vpop.f32.mrf.mxu0
          %730 = vdwg.mxu0
          %vm731 = vcmask 130048
          %v732 = vsel %vm731, %v725, -inf
          %733 = vmax.xlane.f32.xlu0 %v732
          %v734 = vpop.xlane.xlu0 %733
          %v735 = vsel %vm731, %v728, -inf
          %736 = vmax.xlane.f32.xlu0 %v735
          %v737 = vpop.xlane.xlu0 %736
          %v738 = vsub.f32 %v725, %v734
          %v739 = vsub.f32 %v728, %v737
          %v740 = vmul.f32 %v738, 1.442695
          %v741 = vpow.pop %v740
          %v742 = vmul.f32 %v739, 1.442695
          %v743 = vpow.pop %v742
          %v744 = vsel %vm731, %v741, 0.0
          %745 = vadd.xlane.f32.xlu0 %v744
          %v746 = vpop.xlane.xlu0 %745
          %v747 = vsel %vm731, %v743, 0.0
          %748 = vadd.xlane.f32.xlu0 %v747
          %v749 = vpop.xlane.xlu0 %748
          %v750 = vrcp.pop %v746
          %v751 = vrcp.pop %v749
          %v752 = vmul.f32 %v741, %v750
          %v753 = vmul.f32 %v743, %v751
          %v754 = vpack.c.bf16 %v753, %v752
          %755 = vrot.lane.b32.xlu0 %v680, 64
          %v756 = vpop.permute.xlu0 %755
          %v759 = vsel %vm731, %v754, 0
          %761 = vmatprep.subr.bf16.mxu0 0
          %762 = vmatpush1.bf16.msra.mxu0 0
          %763 = vmatprep.subr.bf16.mxu0 0
          %764 = vmatpush1.bf16.msra.mxu0 0
          %765 = vmatprep.subr.bf16.mxu0 0
          %766 = vmatpush1.bf16.msra.mxu0 0
          %767 = vmatprep.subr.bf16.mxu0 0
          %768 = vmatpush1.bf16.msra.mxu0 0
          %769 = vmatprep.subr.bf16.mxu0 0
          %770 = vmatpush1.bf16.msra.mxu0 0
          %771 = vmatprep.subr.bf16.mxu0 0
          %772 = vmatpush1.bf16.msra.mxu0 0
          %773 = vmatprep.subr.bf16.mxu0 0
          %774 = vmatpush1.bf16.msra.mxu0 0
          %775 = vmatprep.subr.bf16.mxu0 0
          %776 = vmatpush1.bf16.msra.mxu0 %v756
          %777 = vmatprep.subr.bf16.mxu0 0
          %778 = vmatpush2.bf16.msra.mxu0 0
          %779 = vmatprep.subr.bf16.mxu0 0
          %780 = vmatpush2.bf16.msra.mxu0 0
          %781 = vmatprep.subr.bf16.mxu0 0
          %782 = vmatpush2.bf16.msra.mxu0 0
          %783 = vmatprep.subr.bf16.mxu0 0
          %784 = vmatpush2.bf16.msra.mxu0 0
          %785 = vmatprep.subr.bf16.mxu0 0
          %786 = vmatpush2.bf16.msra.mxu0 0
          %787 = vmatprep.subr.bf16.mxu0 0
          %788 = vmatpush2.bf16.msra.mxu0 0
          %789 = vmatprep.subr.bf16.mxu0 0
          %790 = vmatpush2.bf16.msra.mxu0 0
          %791 = vmatprep.subr.bf16.mxu0 0
          %792 = vmatpush2.bf16.msra.mxu0 0
          %793 = vmatprep.mubr.bf16.mxu0 0
          %794 = vmatmul.mubr.bf16.gmra.mxu0 %v759
          %v795 = vpop.f32.mrf.mxu0
          %v796 = vadd.f32 0.0, %v795
          %v797 = vpop.f32.mrf.mxu0
          %v798 = vpop.f32.mrf.mxu0
          %v799 = vadd.f32 0.0, %v798
          %v800 = vpop.f32.mrf.mxu0
          %801 = vdwg.mxu0
          %v802 = vpack.c.bf16 %v799, %v796
          %v804 = vunpack.c.l.b16 %v802
          %v805 = vunpack.c.h.b16 %v802
          %v806 = vpack.c.b16 %v804, %v804
          %v807 = vpack.c.b16 %v805, %v805
          %vm810 = vcmask 60416
          %811 = vst.msk [vmem:[#allocation3] sm:$0xf] %vm810, %v806
          %812 = vst.msk [vmem:[#allocation3 + $0x4] sm:$0xf] %vm810, %v807
          %v813 = vld [vmem:[#allocation2] sm:$0xf]
          %v814 = vld [vmem:[#allocation2 + $0x4] sm:$0xf]
          %v817 = vunpack.c.l.b16 %v813
          %v818 = vunpack.c.l.b16 %v814
          %v819 = vpack.c.b16 %v818, %v817
          %820 = vrot.lane.b32.xlu0 %v819, 120
          %v821 = vpop.permute.xlu0 %820
          %822 = vrot.lane.b32.xlu0 %v819, 88
          %v823 = vpop.permute.xlu0 %822
          %v825 = vsel %vm683, %v821, 0
          %v828 = vsel %vm683, %v823, 0
          %830 = vmatprep.subr.bf16.mxu0 0
          %831 = vmatpush1.bf16.xpose.msra.mxu0 0
          %832 = vmatprep.subr.bf16.mxu0 0
          %833 = vmatpush1.bf16.xpose.msra.mxu0 0
          %834 = vmatprep.subr.bf16.mxu0 0
          %835 = vmatpush1.bf16.xpose.msra.mxu0 0
          %836 = vmatprep.subr.bf16.mxu0 0
          %837 = vmatpush1.bf16.xpose.msra.mxu0 0
          %838 = vmatprep.subr.bf16.mxu0 0
          %839 = vmatpush1.bf16.xpose.msra.mxu0 0
          %840 = vmatprep.subr.bf16.mxu0 0
          %841 = vmatpush1.bf16.xpose.msra.mxu0 0
          %842 = vmatprep.subr.bf16.mxu0 0
          %843 = vmatpush1.bf16.xpose.msra.mxu0 0
          %844 = vmatprep.subr.bf16.mxu0 0
          %845 = vmatpush1.bf16.xpose.msra.mxu0 %v828
          %846 = vmatprep.subr.bf16.mxu0 0
          %847 = vmatpush2.bf16.xpose.msra.mxu0 0
          %848 = vmatprep.subr.bf16.mxu0 0
          %849 = vmatpush2.bf16.xpose.msra.mxu0 0
          %850 = vmatprep.subr.bf16.mxu0 0
          %851 = vmatpush2.bf16.xpose.msra.mxu0 0
          %852 = vmatprep.subr.bf16.mxu0 0
          %853 = vmatpush2.bf16.xpose.msra.mxu0 0
          %854 = vmatprep.subr.bf16.mxu0 0
          %855 = vmatpush2.bf16.xpose.msra.mxu0 0
          %856 = vmatprep.subr.bf16.mxu0 0
          %857 = vmatpush2.bf16.xpose.msra.mxu0 0
          %858 = vmatprep.subr.bf16.mxu0 0
          %859 = vmatpush2.bf16.xpose.msra.mxu0 0
          %860 = vmatprep.subr.bf16.mxu0 0
          %861 = vmatpush2.bf16.xpose.msra.mxu0 0
          %862 = vmatprep.mubr.bf16.mxu0 0
          %863 = vmatmul.mubr.bf16.gmra.mxu0 %v825
          %v864 = vpop.f32.mrf.mxu0
          %v865 = vadd.f32 0.0, %v864
          %v866 = vpop.f32.mrf.mxu0
          %v867 = vpop.f32.mrf.mxu0
          %v868 = vadd.f32 0.0, %v867
          %v869 = vpop.f32.mrf.mxu0
          %870 = vdwg.mxu0
          %v871 = vsel %vm731, %v865, -inf
          %872 = vmax.xlane.f32.xlu0 %v871
          %v873 = vpop.xlane.xlu0 %872
          %v874 = vsel %vm731, %v868, -inf
          %875 = vmax.xlane.f32.xlu0 %v874
          %v876 = vpop.xlane.xlu0 %875
          %v877 = vsub.f32 %v865, %v873
          %v878 = vsub.f32 %v868, %v876
          %v879 = vmul.f32 %v877, 1.442695
          %v880 = vpow.pop %v879
          %v881 = vmul.f32 %v878, 1.442695
          %v882 = vpow.pop %v881
          %v883 = vsel %vm731, %v880, 0.0
          %884 = vadd.xlane.f32.xlu0 %v883
          %v885 = vpop.xlane.xlu0 %884
          %v886 = vsel %vm731, %v882, 0.0
          %887 = vadd.xlane.f32.xlu0 %v886
          %v888 = vpop.xlane.xlu0 %887
          %v889 = vrcp.pop %v885
          %v890 = vrcp.pop %v888
          %v891 = vmul.f32 %v880, %v889
          %v892 = vmul.f32 %v882, %v890
          %v893 = vpack.c.bf16 %v892, %v891
          %894 = vrot.lane.b32.xlu0 %v819, 56
          %v895 = vpop.permute.xlu0 %894
          %v898 = vsel %vm731, %v893, 0
          %900 = vmatprep.subr.bf16.mxu0 0
          %901 = vmatpush1.bf16.msra.mxu0 0
          %902 = vmatprep.subr.bf16.mxu0 0
          %903 = vmatpush1.bf16.msra.mxu0 0
          %904 = vmatprep.subr.bf16.mxu0 0
          %905 = vmatpush1.bf16.msra.mxu0 0
          %906 = vmatprep.subr.bf16.mxu0 0
          %907 = vmatpush1.bf16.msra.mxu0 0
          %908 = vmatprep.subr.bf16.mxu0 0
          %909 = vmatpush1.bf16.msra.mxu0 0
          %910 = vmatprep.subr.bf16.mxu0 0
          %911 = vmatpush1.bf16.msra.mxu0 0
          %912 = vmatprep.subr.bf16.mxu0 0
          %913 = vmatpush1.bf16.msra.mxu0 0
          %914 = vmatprep.subr.bf16.mxu0 0
          %915 = vmatpush1.bf16.msra.mxu0 %v895
          %916 = vmatprep.subr.bf16.mxu0 0
          %917 = vmatpush2.bf16.msra.mxu0 0
          %918 = vmatprep.subr.bf16.mxu0 0
          %919 = vmatpush2.bf16.msra.mxu0 0
          %920 = vmatprep.subr.bf16.mxu0 0
          %921 = vmatpush2.bf16.msra.mxu0 0
          %922 = vmatprep.subr.bf16.mxu0 0
          %923 = vmatpush2.bf16.msra.mxu0 0
          %924 = vmatprep.subr.bf16.mxu0 0
          %925 = vmatpush2.bf16.msra.mxu0 0
          %926 = vmatprep.subr.bf16.mxu0 0
          %927 = vmatpush2.bf16.msra.mxu0 0
          %928 = vmatprep.subr.bf16.mxu0 0
          %929 = vmatpush2.bf16.msra.mxu0 0
          %930 = vmatprep.subr.bf16.mxu0 0
          %931 = vmatpush2.bf16.msra.mxu0 0
          %932 = vmatprep.mubr.bf16.mxu0 0
          %933 = vmatmul.mubr.bf16.gmra.mxu0 %v898
          %v934 = vpop.f32.mrf.mxu0
          %v935 = vadd.f32 0.0, %v934
          %v936 = vpop.f32.mrf.mxu0
          %v937 = vpop.f32.mrf.mxu0
          %v938 = vadd.f32 0.0, %v937
          %v939 = vpop.f32.mrf.mxu0
          %940 = vdwg.mxu0
          %v941 = vpack.c.bf16 %v938, %v935
          %v943 = vunpack.c.l.b16 %v941
          %v944 = vunpack.c.h.b16 %v941
          %v945 = vpack.c.b16 %v943, %v943
          %v946 = vpack.c.b16 %v944, %v944
          %947 = vrot.lane.b32.xlu0 %v945, 8
          %v948 = vpop.permute.xlu0 %947
          %949 = vrot.lane.b32.xlu0 %v946, 8
          %v950 = vpop.permute.xlu0 %949
          %vm953 = vcmask 126016
          %954 = vst.msk [vmem:[#allocation3] sm:$0xf] %vm953, %v948
          %955 = vst.msk [vmem:[#allocation3 + $0x4] sm:$0xf] %vm953, %v950
          %v956 = vld [vmem:[#allocation2] sm:$0xf]
          %v957 = vld [vmem:[#allocation2 + $0x4] sm:$0xf]
          %v960 = vunpack.c.l.b16 %v956
          %v961 = vunpack.c.l.b16 %v957
          %v962 = vpack.c.b16 %v961, %v960
          %963 = vrot.lane.b32.xlu0 %v962, 112
          %v964 = vpop.permute.xlu0 %963
          %965 = vrot.lane.b32.xlu0 %v962, 80
          %v966 = vpop.permute.xlu0 %965
          %v968 = vsel %vm683, %v964, 0
          %v971 = vsel %vm683, %v966, 0
          %973 = vmatprep.subr.bf16.mxu0 0
          %974 = vmatpush1.bf16.xpose.msra.mxu0 0
          %975 = vmatprep.subr.bf16.mxu0 0
          %976 = vmatpush1.bf16.xpose.msra.mxu0 0
          %977 = vmatprep.subr.bf16.mxu0 0
          %978 = vmatpush1.bf16.xpose.msra.mxu0 0
          %979 = vmatprep.subr.bf16.mxu0 0
          %980 = vmatpush1.bf16.xpose.msra.mxu0 0
          %981 = vmatprep.subr.bf16.mxu0 0
          %982 = vmatpush1.bf16.xpose.msra.mxu0 0
          %983 = vmatprep.subr.bf16.mxu0 0
          %984 = vmatpush1.bf16.xpose.msra.mxu0 0
          %985 = vmatprep.subr.bf16.mxu0 0
          %986 = vmatpush1.bf16.xpose.msra.mxu0 0
          %987 = vmatprep.subr.bf16.mxu0 0
          %988 = vmatpush1.bf16.xpose.msra.mxu0 %v971
          %989 = vmatprep.subr.bf16.mxu0 0
          %990 = vmatpush2.bf16.xpose.msra.mxu0 0
          %991 = vmatprep.subr.bf16.mxu0 0
          %992 = vmatpush2.bf16.xpose.msra.mxu0 0
          %993 = vmatprep.subr.bf16.mxu0 0
          %994 = vmatpush2.bf16.xpose.msra.mxu0 0
          %995 = vmatprep.subr.bf16.mxu0 0
          %996 = vmatpush2.bf16.xpose.msra.mxu0 0
          %997 = vmatprep.subr.bf16.mxu0 0
          %998 = vmatpush2.bf16.xpose.msra.mxu0 0
          %999 = vmatprep.subr.bf16.mxu0 0
          %1000 = vmatpush2.bf16.xpose.msra.mxu0 0
          %1001 = vmatprep.subr.bf16.mxu0 0
          %1002 = vmatpush2.bf16.xpose.msra.mxu0 0
          %1003 = vmatprep.subr.bf16.mxu0 0
          %1004 = vmatpush2.bf16.xpose.msra.mxu0 0
          %1005 = vmatprep.mubr.bf16.mxu0 0
          %1006 = vmatmul.mubr.bf16.gmra.mxu0 %v968
          %v1007 = vpop.f32.mrf.mxu0
          %v1008 = vadd.f32 0.0, %v1007
          %v1009 = vpop.f32.mrf.mxu0
          %v1010 = vpop.f32.mrf.mxu0
          %v1011 = vadd.f32 0.0, %v1010
          %v1012 = vpop.f32.mrf.mxu0
          %1013 = vdwg.mxu0
          %v1014 = vsel %vm731, %v1008, -inf
          %1015 = vmax.xlane.f32.xlu0 %v1014
          %v1016 = vpop.xlane.xlu0 %1015
          %v1017 = vsel %vm731, %v1011, -inf
          %1018 = vmax.xlane.f32.xlu0 %v1017
          %v1019 = vpop.xlane.xlu0 %1018
          %v1020 = vsub.f32 %v1008, %v1016
          %v1021 = vsub.f32 %v1011, %v1019
          %v1022 = vmul.f32 %v1020, 1.442695
          %v1023 = vpow.pop %v1022
          %v1024 = vmul.f32 %v1021, 1.442695
          %v1025 = vpow.pop %v1024
          %v1026 = vsel %vm731, %v1023, 0.0
          %1027 = vadd.xlane.f32.xlu0 %v1026
          %v1028 = vpop.xlane.xlu0 %1027
          %v1029 = vsel %vm731, %v1025, 0.0
          %1030 = vadd.xlane.f32.xlu0 %v1029
          %v1031 = vpop.xlane.xlu0 %1030
          %v1032 = vrcp.pop %v1028
          %v1033 = vrcp.pop %v1031
          %v1034 = vmul.f32 %v1023, %v1032
          %v1035 = vmul.f32 %v1025, %v1033
          %v1036 = vpack.c.bf16 %v1035, %v1034
          %1037 = vrot.lane.b32.xlu0 %v962, 48
          %v1038 = vpop.permute.xlu0 %1037
          %v1041 = vsel %vm731, %v1036, 0
          %1043 = vmatprep.subr.bf16.mxu0 0
          %1044 = vmatpush1.bf16.msra.mxu0 0
          %1045 = vmatprep.subr.bf16.mxu0 0
          %1046 = vmatpush1.bf16.msra.mxu0 0
          %1047 = vmatprep.subr.bf16.mxu0 0
          %1048 = vmatpush1.bf16.msra.mxu0 0
          %1049 = vmatprep.subr.bf16.mxu0 0
          %1050 = vmatpush1.bf16.msra.mxu0 0
          %1051 = vmatprep.subr.bf16.mxu0 0
          %1052 = vmatpush1.bf16.msra.mxu0 0
          %1053 = vmatprep.subr.bf16.mxu0 0
          %1054 = vmatpush1.bf16.msra.mxu0 0
          %1055 = vmatprep.subr.bf16.mxu0 0
          %1056 = vmatpush1.bf16.msra.mxu0 0
          %1057 = vmatprep.subr.bf16.mxu0 0
          %1058 = vmatpush1.bf16.msra.mxu0 %v1038
          %1059 = vmatprep.subr.bf16.mxu0 0
          %1060 = vmatpush2.bf16.msra.mxu0 0
          %1061 = vmatprep.subr.bf16.mxu0 0
          %1062 = vmatpush2.bf16.msra.mxu0 0
          %1063 = vmatprep.subr.bf16.mxu0 0
          %1064 = vmatpush2.bf16.msra.mxu0 0
          %1065 = vmatprep.subr.bf16.mxu0 0
          %1066 = vmatpush2.bf16.msra.mxu0 0
          %1067 = vmatprep.subr.bf16.mxu0 0
          %1068 = vmatpush2.bf16.msra.mxu0 0
          %1069 = vmatprep.subr.bf16.mxu0 0
          %1070 = vmatpush2.bf16.msra.mxu0 0
          %1071 = vmatprep.subr.bf16.mxu0 0
          %1072 = vmatpush2.bf16.msra.mxu0 0
          %1073 = vmatprep.subr.bf16.mxu0 0
          %1074 = vmatpush2.bf16.msra.mxu0 0
          %1075 = vmatprep.mubr.bf16.mxu0 0
          %1076 = vmatmul.mubr.bf16.gmra.mxu0 %v1041
          %v1077 = vpop.f32.mrf.mxu0
          %v1078 = vadd.f32 0.0, %v1077
          %v1079 = vpop.f32.mrf.mxu0
          %v1080 = vpop.f32.mrf.mxu0
          %v1081 = vadd.f32 0.0, %v1080
          %v1082 = vpop.f32.mrf.mxu0
          %1083 = vdwg.mxu0
          %v1084 = vpack.c.bf16 %v1081, %v1078
          %v1086 = vunpack.c.l.b16 %v1084
          %v1087 = vunpack.c.h.b16 %v1084
          %v1088 = vpack.c.b16 %v1086, %v1086
          %v1089 = vpack.c.b16 %v1087, %v1087
          %1090 = vrot.lane.b32.xlu0 %v1088, 16
          %v1091 = vpop.permute.xlu0 %1090
          %1092 = vrot.lane.b32.xlu0 %v1089, 16
          %v1093 = vpop.permute.xlu0 %1092
          %vm1096 = vcmask 191616
          %1097 = vst.msk [vmem:[#allocation3] sm:$0xf] %vm1096, %v1091
          %1098 = vst.msk [vmem:[#allocation3 + $0x4] sm:$0xf] %vm1096, %v1093
          %v1099 = vld [vmem:[#allocation2] sm:$0xf]
          %v1100 = vld [vmem:[#allocation2 + $0x4] sm:$0xf]
          %v1103 = vunpack.c.l.b16 %v1099
          %v1104 = vunpack.c.l.b16 %v1100
          %v1105 = vpack.c.b16 %v1104, %v1103
          %1106 = vrot.lane.b32.xlu0 %v1105, 104
          %v1107 = vpop.permute.xlu0 %1106
          %1108 = vrot.lane.b32.xlu0 %v1105, 72
          %v1109 = vpop.permute.xlu0 %1108
          %v1111 = vsel %vm683, %v1107, 0
          %v1114 = vsel %vm683, %v1109, 0
          %1116 = vmatprep.subr.bf16.mxu0 0
          %1117 = vmatpush1.bf16.xpose.msra.mxu0 0
          %1118 = vmatprep.subr.bf16.mxu0 0
          %1119 = vmatpush1.bf16.xpose.msra.mxu0 0
          %1120 = vmatprep.subr.bf16.mxu0 0
          %1121 = vmatpush1.bf16.xpose.msra.mxu0 0
          %1122 = vmatprep.subr.bf16.mxu0 0
          %1123 = vmatpush1.bf16.xpose.msra.mxu0 0
          %1124 = vmatprep.subr.bf16.mxu0 0
          %1125 = vmatpush1.bf16.xpose.msra.mxu0 0
          %1126 = vmatprep.subr.bf16.mxu0 0
          %1127 = vmatpush1.bf16.xpose.msra.mxu0 0
          %1128 = vmatprep.subr.bf16.mxu0 0
          %1129 = vmatpush1.bf16.xpose.msra.mxu0 0
          %1130 = vmatprep.subr.bf16.mxu0 0
          %1131 = vmatpush1.bf16.xpose.msra.mxu0 %v1114
          %1132 = vmatprep.subr.bf16.mxu0 0
          %1133 = vmatpush2.bf16.xpose.msra.mxu0 0
          %1134 = vmatprep.subr.bf16.mxu0 0
          %1135 = vmatpush2.bf16.xpose.msra.mxu0 0
          %1136 = vmatprep.subr.bf16.mxu0 0
          %1137 = vmatpush2.bf16.xpose.msra.mxu0 0
          %1138 = vmatprep.subr.bf16.mxu0 0
          %1139 = vmatpush2.bf16.xpose.msra.mxu0 0
          %1140 = vmatprep.subr.bf16.mxu0 0
          %1141 = vmatpush2.bf16.xpose.msra.mxu0 0
          %1142 = vmatprep.subr.bf16.mxu0 0
          %1143 = vmatpush2.bf16.xpose.msra.mxu0 0
          %1144 = vmatprep.subr.bf16.mxu0 0
          %1145 = vmatpush2.bf16.xpose.msra.mxu0 0
          %1146 = vmatprep.subr.bf16.mxu0 0
          %1147 = vmatpush2.bf16.xpose.msra.mxu0 0
          %1148 = vmatprep.mubr.bf16.mxu0 0
          %1149 = vmatmul.mubr.bf16.gmra.mxu0 %v1111
          %v1150 = vpop.f32.mrf.mxu0
          %v1151 = vadd.f32 0.0, %v1150
          %v1152 = vpop.f32.mrf.mxu0
          %v1153 = vpop.f32.mrf.mxu0
          %v1154 = vadd.f32 0.0, %v1153
          %v1155 = vpop.f32.mrf.mxu0
          %1156 = vdwg.mxu0
          %v1157 = vsel %vm731, %v1151, -inf
          %1158 = vmax.xlane.f32.xlu0 %v1157
          %v1159 = vpop.xlane.xlu0 %1158
          %v1160 = vsel %vm731, %v1154, -inf
          %1161 = vmax.xlane.f32.xlu0 %v1160
          %v1162 = vpop.xlane.xlu0 %1161
          %v1163 = vsub.f32 %v1151, %v1159
          %v1164 = vsub.f32 %v1154, %v1162
          %v1165 = vmul.f32 %v1163, 1.442695
          %v1166 = vpow.pop %v1165
          %v1167 = vmul.f32 %v1164, 1.442695
          %v1168 = vpow.pop %v1167
          %v1169 = vsel %vm731, %v1166, 0.0
          %1170 = vadd.xlane.f32.xlu0 %v1169
          %v1171 = vpop.xlane.xlu0 %1170
          %v1172 = vsel %vm731, %v1168, 0.0
          %1173 = vadd.xlane.f32.xlu0 %v1172
          %v1174 = vpop.xlane.xlu0 %1173
          %v1175 = vrcp.pop %v1171
          %v1176 = vrcp.pop %v1174
          %v1177 = vmul.f32 %v1166, %v1175
          %v1178 = vmul.f32 %v1168, %v1176
          %v1179 = vpack.c.bf16 %v1178, %v1177
          %1180 = vrot.lane.b32.xlu0 %v1105, 40
          %v1181 = vpop.permute.xlu0 %1180
          %v1184 = vsel %vm731, %v1179, 0
          %1186 = vmatprep.subr.bf16.mxu0 0
          %1187 = vmatpush1.bf16.msra.mxu0 0
          %1188 = vmatprep.subr.bf16.mxu0 0
          %1189 = vmatpush1.bf16.msra.mxu0 0
          %1190 = vmatprep.subr.bf16.mxu0 0
          %1191 = vmatpush1.bf16.msra.mxu0 0
          %1192 = vmatprep.subr.bf16.mxu0 0
          %1193 = vmatpush1.bf16.msra.mxu0 0
          %1194 = vmatprep.subr.bf16.mxu0 0
          %1195 = vmatpush1.bf16.msra.mxu0 0
          %1196 = vmatprep.subr.bf16.mxu0 0
          %1197 = vmatpush1.bf16.msra.mxu0 0
          %1198 = vmatprep.subr.bf16.mxu0 0
          %1199 = vmatpush1.bf16.msra.mxu0 0
          %1200 = vmatprep.subr.bf16.mxu0 0
          %1201 = vmatpush1.bf16.msra.mxu0 %v1181
          %1202 = vmatprep.subr.bf16.mxu0 0
          %1203 = vmatpush2.bf16.msra.mxu0 0
          %1204 = vmatprep.subr.bf16.mxu0 0
          %1205 = vmatpush2.bf16.msra.mxu0 0
          %1206 = vmatprep.subr.bf16.mxu0 0
          %1207 = vmatpush2.bf16.msra.mxu0 0
          %1208 = vmatprep.subr.bf16.mxu0 0
          %1209 = vmatpush2.bf16.msra.mxu0 0
          %1210 = vmatprep.subr.bf16.mxu0 0
          %1211 = vmatpush2.bf16.msra.mxu0 0
          %1212 = vmatprep.subr.bf16.mxu0 0
          %1213 = vmatpush2.bf16.msra.mxu0 0
          %1214 = vmatprep.subr.bf16.mxu0 0
          %1215 = vmatpush2.bf16.msra.mxu0 0
          %1216 = vmatprep.subr.bf16.mxu0 0
          %1217 = vmatpush2.bf16.msra.mxu0 0
          %1218 = vmatprep.mubr.bf16.mxu0 0
          %1219 = vmatmul.mubr.bf16.gmra.mxu0 %v1184
          %v1220 = vpop.f32.mrf.mxu0
          %v1221 = vadd.f32 0.0, %v1220
          %v1222 = vpop.f32.mrf.mxu0
          %v1223 = vpop.f32.mrf.mxu0
          %v1224 = vadd.f32 0.0, %v1223
          %v1225 = vpop.f32.mrf.mxu0
          %1226 = vdwg.mxu0
          %v1227 = vpack.c.bf16 %v1224, %v1221
          %v1229 = vunpack.c.l.b16 %v1227
          %v1230 = vunpack.c.h.b16 %v1227
          %v1231 = vpack.c.b16 %v1229, %v1229
          %v1232 = vpack.c.b16 %v1230, %v1230
          %1233 = vrot.lane.b32.xlu0 %v1231, 24
          %v1234 = vpop.permute.xlu0 %1233
          %1235 = vrot.lane.b32.xlu0 %v1232, 24
          %v1236 = vpop.permute.xlu0 %1235
          %vm1239 = vcmask 257216
          %1240 = vst.msk [vmem:[#allocation3] sm:$0xf] %vm1239, %v1234
          %1241 = vst.msk [vmem:[#allocation3 + $0x4] sm:$0xf] %vm1239, %v1236
          %v1242 = vld [vmem:[#allocation2 + $0x8] sm:$0xf]
          %v1243 = vld [vmem:[#allocation2 + $0xc] sm:$0xf]
          %v1246 = vunpack.c.l.b16 %v1242
          %v1247 = vunpack.c.l.b16 %v1243
          %v1248 = vpack.c.b16 %v1247, %v1246
          %1249 = vrot.lane.b32.xlu0 %v1248, 96
          %v1250 = vpop.permute.xlu0 %1249
          %v1252 = vsel %vm683, %v1248, 0
          %v1255 = vsel %vm683, %v1250, 0
          %1257 = vmatprep.subr.bf16.mxu0 0
          %1258 = vmatpush1.bf16.xpose.msra.mxu0 0
          %1259 = vmatprep.subr.bf16.mxu0 0
          %1260 = vmatpush1.bf16.xpose.msra.mxu0 0
          %1261 = vmatprep.subr.bf16.mxu0 0
          %1262 = vmatpush1.bf16.xpose.msra.mxu0 0
          %1263 = vmatprep.subr.bf16.mxu0 0
          %1264 = vmatpush1.bf16.xpose.msra.mxu0 0
          %1265 = vmatprep.subr.bf16.mxu0 0
          %1266 = vmatpush1.bf16.xpose.msra.mxu0 0
          %1267 = vmatprep.subr.bf16.mxu0 0
          %1268 = vmatpush1.bf16.xpose.msra.mxu0 0
          %1269 = vmatprep.subr.bf16.mxu0 0
          %1270 = vmatpush1.bf16.xpose.msra.mxu0 0
          %1271 = vmatprep.subr.bf16.mxu0 0
          %1272 = vmatpush1.bf16.xpose.msra.mxu0 %v1255
          %1273 = vmatprep.subr.bf16.mxu0 0
          %1274 = vmatpush2.bf16.xpose.msra.mxu0 0
          %1275 = vmatprep.subr.bf16.mxu0 0
          %1276 = vmatpush2.bf16.xpose.msra.mxu0 0
          %1277 = vmatprep.subr.bf16.mxu0 0
          %1278 = vmatpush2.bf16.xpose.msra.mxu0 0
          %1279 = vmatprep.subr.bf16.mxu0 0
          %1280 = vmatpush2.bf16.xpose.msra.mxu0 0
          %1281 = vmatprep.subr.bf16.mxu0 0
          %1282 = vmatpush2.bf16.xpose.msra.mxu0 0
          %1283 = vmatprep.subr.bf16.mxu0 0
          %1284 = vmatpush2.bf16.xpose.msra.mxu0 0
          %1285 = vmatprep.subr.bf16.mxu0 0
          %1286 = vmatpush2.bf16.xpose.msra.mxu0 0
          %1287 = vmatprep.subr.bf16.mxu0 0
          %1288 = vmatpush2.bf16.xpose.msra.mxu0 0
          %1289 = vmatprep.mubr.bf16.mxu0 0
          %1290 = vmatmul.mubr.bf16.gmra.mxu0 %v1252
          %v1291 = vpop.f32.mrf.mxu0
          %v1292 = vadd.f32 0.0, %v1291
          %v1293 = vpop.f32.mrf.mxu0
          %v1294 = vpop.f32.mrf.mxu0
          %v1295 = vadd.f32 0.0, %v1294
          %v1296 = vpop.f32.mrf.mxu0
          %1297 = vdwg.mxu0
          %v1298 = vsel %vm731, %v1292, -inf
          %1299 = vmax.xlane.f32.xlu0 %v1298
          %v1300 = vpop.xlane.xlu0 %1299
          %v1301 = vsel %vm731, %v1295, -inf
          %1302 = vmax.xlane.f32.xlu0 %v1301
          %v1303 = vpop.xlane.xlu0 %1302
          %v1304 = vsub.f32 %v1292, %v1300
          %v1305 = vsub.f32 %v1295, %v1303
          %v1306 = vmul.f32 %v1304, 1.442695
          %v1307 = vpow.pop %v1306
          %v1308 = vmul.f32 %v1305, 1.442695
          %v1309 = vpow.pop %v1308
          %v1310 = vsel %vm731, %v1307, 0.0
          %1311 = vadd.xlane.f32.xlu0 %v1310
          %v1312 = vpop.xlane.xlu0 %1311
          %v1313 = vsel %vm731, %v1309, 0.0
          %1314 = vadd.xlane.f32.xlu0 %v1313
          %v1315 = vpop.xlane.xlu0 %1314
          %v1316 = vrcp.pop %v1312
          %v1317 = vrcp.pop %v1315
          %v1318 = vmul.f32 %v1307, %v1316
          %v1319 = vmul.f32 %v1309, %v1317
          %v1320 = vpack.c.bf16 %v1319, %v1318
          %1321 = vrot.lane.b32.xlu0 %v1248, 64
          %v1322 = vpop.permute.xlu0 %1321
          %v1325 = vsel %vm731, %v1320, 0
          %1327 = vmatprep.subr.bf16.mxu0 0
          %1328 = vmatpush1.bf16.msra.mxu0 0
          %1329 = vmatprep.subr.bf16.mxu0 0
          %1330 = vmatpush1.bf16.msra.mxu0 0
          %1331 = vmatprep.subr.bf16.mxu0 0
          %1332 = vmatpush1.bf16.msra.mxu0 0
          %1333 = vmatprep.subr.bf16.mxu0 0
          %1334 = vmatpush1.bf16.msra.mxu0 0
          %1335 = vmatprep.subr.bf16.mxu0 0
          %1336 = vmatpush1.bf16.msra.mxu0 0
          %1337 = vmatprep.subr.bf16.mxu0 0
          %1338 = vmatpush1.bf16.msra.mxu0 0
          %1339 = vmatprep.subr.bf16.mxu0 0
          %1340 = vmatpush1.bf16.msra.mxu0 0
          %1341 = vmatprep.subr.bf16.mxu0 0
          %1342 = vmatpush1.bf16.msra.mxu0 %v1322
          %1343 = vmatprep.subr.bf16.mxu0 0
          %1344 = vmatpush2.bf16.msra.mxu0 0
          %1345 = vmatprep.subr.bf16.mxu0 0
          %1346 = vmatpush2.bf16.msra.mxu0 0
          %1347 = vmatprep.subr.bf16.mxu0 0
          %1348 = vmatpush2.bf16.msra.mxu0 0
          %1349 = vmatprep.subr.bf16.mxu0 0
          %1350 = vmatpush2.bf16.msra.mxu0 0
          %1351 = vmatprep.subr.bf16.mxu0 0
          %1352 = vmatpush2.bf16.msra.mxu0 0
          %1353 = vmatprep.subr.bf16.mxu0 0
          %1354 = vmatpush2.bf16.msra.mxu0 0
          %1355 = vmatprep.subr.bf16.mxu0 0
          %1356 = vmatpush2.bf16.msra.mxu0 0
          %1357 = vmatprep.subr.bf16.mxu0 0
          %1358 = vmatpush2.bf16.msra.mxu0 0
          %1359 = vmatprep.mubr.bf16.mxu0 0
          %1360 = vmatmul.mubr.bf16.gmra.mxu0 %v1325
          %v1361 = vpop.f32.mrf.mxu0
          %v1362 = vadd.f32 0.0, %v1361
          %v1363 = vpop.f32.mrf.mxu0
          %v1364 = vpop.f32.mrf.mxu0
          %v1365 = vadd.f32 0.0, %v1364
          %v1366 = vpop.f32.mrf.mxu0
          %1367 = vdwg.mxu0
          %v1368 = vpack.c.bf16 %v1365, %v1362
          %v1370 = vunpack.c.l.b16 %v1368
          %v1371 = vunpack.c.h.b16 %v1368
          %v1372 = vpack.c.b16 %v1370, %v1370
          %v1373 = vpack.c.b16 %v1371, %v1371
          %1376 = vst.msk [vmem:[#allocation3 + $0x8] sm:$0xf] %vm810, %v1372
          %1377 = vst.msk [vmem:[#allocation3 + $0xc] sm:$0xf] %vm810, %v1373
          %v1378 = vld [vmem:[#allocation2 + $0x8] sm:$0xf]
          %v1379 = vld [vmem:[#allocation2 + $0xc] sm:$0xf]
          %v1382 = vunpack.c.l.b16 %v1378
          %v1383 = vunpack.c.l.b16 %v1379
          %v1384 = vpack.c.b16 %v1383, %v1382
          %1385 = vrot.lane.b32.xlu0 %v1384, 120
          %v1386 = vpop.permute.xlu0 %1385
          %1387 = vrot.lane.b32.xlu0 %v1384, 88
          %v1388 = vpop.permute.xlu0 %1387
          %v1390 = vsel %vm683, %v1386, 0
          %v1393 = vsel %vm683, %v1388, 0
          %1395 = vmatprep.subr.bf16.mxu0 0
          %1396 = vmatpush1.bf16.xpose.msra.mxu0 0
          %1397 = vmatprep.subr.bf16.mxu0 0
          %1398 = vmatpush1.bf16.xpose.msra.mxu0 0
          %1399 = vmatprep.subr.bf16.mxu0 0
          %1400 = vmatpush1.bf16.xpose.msra.mxu0 0
          %1401 = vmatprep.subr.bf16.mxu0 0
          %1402 = vmatpush1.bf16.xpose.msra.mxu0 0
          %1403 = vmatprep.subr.bf16.mxu0 0
          %1404 = vmatpush1.bf16.xpose.msra.mxu0 0
          %1405 = vmatprep.subr.bf16.mxu0 0
          %1406 = vmatpush1.bf16.xpose.msra.mxu0 0
          %1407 = vmatprep.subr.bf16.mxu0 0
          %1408 = vmatpush1.bf16.xpose.msra.mxu0 0
          %1409 = vmatprep.subr.bf16.mxu0 0
          %1410 = vmatpush1.bf16.xpose.msra.mxu0 %v1393
          %1411 = vmatprep.subr.bf16.mxu0 0
          %1412 = vmatpush2.bf16.xpose.msra.mxu0 0
          %1413 = vmatprep.subr.bf16.mxu0 0
          %1414 = vmatpush2.bf16.xpose.msra.mxu0 0
          %1415 = vmatprep.subr.bf16.mxu0 0
          %1416 = vmatpush2.bf16.xpose.msra.mxu0 0
          %1417 = vmatprep.subr.bf16.mxu0 0
          %1418 = vmatpush2.bf16.xpose.msra.mxu0 0
          %1419 = vmatprep.subr.bf16.mxu0 0
          %1420 = vmatpush2.bf16.xpose.msra.mxu0 0
          %1421 = vmatprep.subr.bf16.mxu0 0
          %1422 = vmatpush2.bf16.xpose.msra.mxu0 0
          %1423 = vmatprep.subr.bf16.mxu0 0
          %1424 = vmatpush2.bf16.xpose.msra.mxu0 0
          %1425 = vmatprep.subr.bf16.mxu0 0
          %1426 = vmatpush2.bf16.xpose.msra.mxu0 0
          %1427 = vmatprep.mubr.bf16.mxu0 0
          %1428 = vmatmul.mubr.bf16.gmra.mxu0 %v1390
          %v1429 = vpop.f32.mrf.mxu0
          %v1430 = vadd.f32 0.0, %v1429
          %v1431 = vpop.f32.mrf.mxu0
          %v1432 = vpop.f32.mrf.mxu0
          %v1433 = vadd.f32 0.0, %v1432
          %v1434 = vpop.f32.mrf.mxu0
          %1435 = vdwg.mxu0
          %v1436 = vsel %vm731, %v1430, -inf
          %1437 = vmax.xlane.f32.xlu0 %v1436
          %v1438 = vpop.xlane.xlu0 %1437
          %v1439 = vsel %vm731, %v1433, -inf
          %1440 = vmax.xlane.f32.xlu0 %v1439
          %v1441 = vpop.xlane.xlu0 %1440
          %v1442 = vsub.f32 %v1430, %v1438
          %v1443 = vsub.f32 %v1433, %v1441
          %v1444 = vmul.f32 %v1442, 1.442695
          %v1445 = vpow.pop %v1444
          %v1446 = vmul.f32 %v1443, 1.442695
          %v1447 = vpow.pop %v1446
          %v1448 = vsel %vm731, %v1445, 0.0
          %1449 = vadd.xlane.f32.xlu0 %v1448
          %v1450 = vpop.xlane.xlu0 %1449
          %v1451 = vsel %vm731, %v1447, 0.0
          %1452 = vadd.xlane.f32.xlu0 %v1451
          %v1453 = vpop.xlane.xlu0 %1452
          %v1454 = vrcp.pop %v1450
          %v1455 = vrcp.pop %v1453
          %v1456 = vmul.f32 %v1445, %v1454
          %v1457 = vmul.f32 %v1447, %v1455
          %v1458 = vpack.c.bf16 %v1457, %v1456
          %1459 = vrot.lane.b32.xlu0 %v1384, 56
          %v1460 = vpop.permute.xlu0 %1459
          %v1463 = vsel %vm731, %v1458, 0
          %1465 = vmatprep.subr.bf16.mxu0 0
          %1466 = vmatpush1.bf16.msra.mxu0 0
          %1467 = vmatprep.subr.bf16.mxu0 0
          %1468 = vmatpush1.bf16.msra.mxu0 0
          %1469 = vmatprep.subr.bf16.mxu0 0
          %1470 = vmatpush1.bf16.msra.mxu0 0
          %1471 = vmatprep.subr.bf16.mxu0 0
          %1472 = vmatpush1.bf16.msra.mxu0 0
          %1473 = vmatprep.subr.bf16.mxu0 0
          %1474 = vmatpush1.bf16.msra.mxu0 0
          %1475 = vmatprep.subr.bf16.mxu0 0
          %1476 = vmatpush1.bf16.msra.mxu0 0
          %1477 = vmatprep.subr.bf16.mxu0 0
          %1478 = vmatpush1.bf16.msra.mxu0 0
          %1479 = vmatprep.subr.bf16.mxu0 0
          %1480 = vmatpush1.bf16.msra.mxu0 %v1460
          %1481 = vmatprep.subr.bf16.mxu0 0
          %1482 = vmatpush2.bf16.msra.mxu0 0
          %1483 = vmatprep.subr.bf16.mxu0 0
          %1484 = vmatpush2.bf16.msra.mxu0 0
          %1485 = vmatprep.subr.bf16.mxu0 0
          %1486 = vmatpush2.bf16.msra.mxu0 0
          %1487 = vmatprep.subr.bf16.mxu0 0
          %1488 = vmatpush2.bf16.msra.mxu0 0
          %1489 = vmatprep.subr.bf16.mxu0 0
          %1490 = vmatpush2.bf16.msra.mxu0 0
          %1491 = vmatprep.subr.bf16.mxu0 0
          %1492 = vmatpush2.bf16.msra.mxu0 0
          %1493 = vmatprep.subr.bf16.mxu0 0
          %1494 = vmatpush2.bf16.msra.mxu0 0
          %1495 = vmatprep.subr.bf16.mxu0 0
          %1496 = vmatpush2.bf16.msra.mxu0 0
          %1497 = vmatprep.mubr.bf16.mxu0 0
          %1498 = vmatmul.mubr.bf16.gmra.mxu0 %v1463
          %v1499 = vpop.f32.mrf.mxu0
          %v1500 = vadd.f32 0.0, %v1499
          %v1501 = vpop.f32.mrf.mxu0
          %v1502 = vpop.f32.mrf.mxu0
          %v1503 = vadd.f32 0.0, %v1502
          %v1504 = vpop.f32.mrf.mxu0
          %1505 = vdwg.mxu0
          %v1506 = vpack.c.bf16 %v1503, %v1500
          %v1508 = vunpack.c.l.b16 %v1506
          %v1509 = vunpack.c.h.b16 %v1506
          %v1510 = vpack.c.b16 %v1508, %v1508
          %v1511 = vpack.c.b16 %v1509, %v1509
          %1512 = vrot.lane.b32.xlu0 %v1510, 8
          %v1513 = vpop.permute.xlu0 %1512
          %1514 = vrot.lane.b32.xlu0 %v1511, 8
          %v1515 = vpop.permute.xlu0 %1514
          %1518 = vst.msk [vmem:[#allocation3 + $0x8] sm:$0xf] %vm953, %v1513
          %1519 = vst.msk [vmem:[#allocation3 + $0xc] sm:$0xf] %vm953, %v1515
          %v1520 = vld [vmem:[#allocation2 + $0x8] sm:$0xf]
          %v1521 = vld [vmem:[#allocation2 + $0xc] sm:$0xf]
          %v1524 = vunpack.c.l.b16 %v1520
          %v1525 = vunpack.c.l.b16 %v1521
          %v1526 = vpack.c.b16 %v1525, %v1524
          %1527 = vrot.lane.b32.xlu0 %v1526, 112
          %v1528 = vpop.permute.xlu0 %1527
          %1529 = vrot.lane.b32.xlu0 %v1526, 80
          %v1530 = vpop.permute.xlu0 %1529
          %v1532 = vsel %vm683, %v1528, 0
          %v1535 = vsel %vm683, %v1530, 0
          %1537 = vmatprep.subr.bf16.mxu0 0
          %1538 = vmatpush1.bf16.xpose.msra.mxu0 0
          %1539 = vmatprep.subr.bf16.mxu0 0
          %1540 = vmatpush1.bf16.xpose.msra.mxu0 0
          %1541 = vmatprep.subr.bf16.mxu0 0
          %1542 = vmatpush1.bf16.xpose.msra.mxu0 0
          %1543 = vmatprep.subr.bf16.mxu0 0
          %1544 = vmatpush1.bf16.xpose.msra.mxu0 0
          %1545 = vmatprep.subr.bf16.mxu0 0
          %1546 = vmatpush1.bf16.xpose.msra.mxu0 0
          %1547 = vmatprep.subr.bf16.mxu0 0
          %1548 = vmatpush1.bf16.xpose.msra.mxu0 0
          %1549 = vmatprep.subr.bf16.mxu0 0
          %1550 = vmatpush1.bf16.xpose.msra.mxu0 0
          %1551 = vmatprep.subr.bf16.mxu0 0
          %1552 = vmatpush1.bf16.xpose.msra.mxu0 %v1535
          %1553 = vmatprep.subr.bf16.mxu0 0
          %1554 = vmatpush2.bf16.xpose.msra.mxu0 0
          %1555 = vmatprep.subr.bf16.mxu0 0
          %1556 = vmatpush2.bf16.xpose.msra.mxu0 0
          %1557 = vmatprep.subr.bf16.mxu0 0
          %1558 = vmatpush2.bf16.xpose.msra.mxu0 0
          %1559 = vmatprep.subr.bf16.mxu0 0
          %1560 = vmatpush2.bf16.xpose.msra.mxu0 0
          %1561 = vmatprep.subr.bf16.mxu0 0
          %1562 = vmatpush2.bf16.xpose.msra.mxu0 0
          %1563 = vmatprep.subr.bf16.mxu0 0
          %1564 = vmatpush2.bf16.xpose.msra.mxu0 0
          %1565 = vmatprep.subr.bf16.mxu0 0
          %1566 = vmatpush2.bf16.xpose.msra.mxu0 0
          %1567 = vmatprep.subr.bf16.mxu0 0
          %1568 = vmatpush2.bf16.xpose.msra.mxu0 0
          %1569 = vmatprep.mubr.bf16.mxu0 0
          %1570 = vmatmul.mubr.bf16.gmra.mxu0 %v1532
          %v1571 = vpop.f32.mrf.mxu0
          %v1572 = vadd.f32 0.0, %v1571
          %v1573 = vpop.f32.mrf.mxu0
          %v1574 = vpop.f32.mrf.mxu0
          %v1575 = vadd.f32 0.0, %v1574
          %v1576 = vpop.f32.mrf.mxu0
          %1577 = vdwg.mxu0
          %v1578 = vsel %vm731, %v1572, -inf
          %1579 = vmax.xlane.f32.xlu0 %v1578
          %v1580 = vpop.xlane.xlu0 %1579
          %v1581 = vsel %vm731, %v1575, -inf
          %1582 = vmax.xlane.f32.xlu0 %v1581
          %v1583 = vpop.xlane.xlu0 %1582
          %v1584 = vsub.f32 %v1572, %v1580
          %v1585 = vsub.f32 %v1575, %v1583
          %v1586 = vmul.f32 %v1584, 1.442695
          %v1587 = vpow.pop %v1586
          %v1588 = vmul.f32 %v1585, 1.442695
          %v1589 = vpow.pop %v1588
          %v1590 = vsel %vm731, %v1587, 0.0
          %1591 = vadd.xlane.f32.xlu0 %v1590
          %v1592 = vpop.xlane.xlu0 %1591
          %v1593 = vsel %vm731, %v1589, 0.0
          %1594 = vadd.xlane.f32.xlu0 %v1593
          %v1595 = vpop.xlane.xlu0 %1594
          %v1596 = vrcp.pop %v1592
          %v1597 = vrcp.pop %v1595
          %v1598 = vmul.f32 %v1587, %v1596
          %v1599 = vmul.f32 %v1589, %v1597
          %v1600 = vpack.c.bf16 %v1599, %v1598
          %1601 = vrot.lane.b32.xlu0 %v1526, 48
          %v1602 = vpop.permute.xlu0 %1601
          %v1605 = vsel %vm731, %v1600, 0
          %1607 = vmatprep.subr.bf16.mxu0 0
          %1608 = vmatpush1.bf16.msra.mxu0 0
          %1609 = vmatprep.subr.bf16.mxu0 0
          %1610 = vmatpush1.bf16.msra.mxu0 0
          %1611 = vmatprep.subr.bf16.mxu0 0
          %1612 = vmatpush1.bf16.msra.mxu0 0
          %1613 = vmatprep.subr.bf16.mxu0 0
          %1614 = vmatpush1.bf16.msra.mxu0 0
          %1615 = vmatprep.subr.bf16.mxu0 0
          %1616 = vmatpush1.bf16.msra.mxu0 0
          %1617 = vmatprep.subr.bf16.mxu0 0
          %1618 = vmatpush1.bf16.msra.mxu0 0
          %1619 = vmatprep.subr.bf16.mxu0 0
          %1620 = vmatpush1.bf16.msra.mxu0 0
          %1621 = vmatprep.subr.bf16.mxu0 0
          %1622 = vmatpush1.bf16.msra.mxu0 %v1602
          %1623 = vmatprep.subr.bf16.mxu0 0
          %1624 = vmatpush2.bf16.msra.mxu0 0
          %1625 = vmatprep.subr.bf16.mxu0 0
          %1626 = vmatpush2.bf16.msra.mxu0 0
          %1627 = vmatprep.subr.bf16.mxu0 0
          %1628 = vmatpush2.bf16.msra.mxu0 0
          %1629 = vmatprep.subr.bf16.mxu0 0
          %1630 = vmatpush2.bf16.msra.mxu0 0
          %1631 = vmatprep.subr.bf16.mxu0 0
          %1632 = vmatpush2.bf16.msra.mxu0 0
          %1633 = vmatprep.subr.bf16.mxu0 0
          %1634 = vmatpush2.bf16.msra.mxu0 0
          %1635 = vmatprep.subr.bf16.mxu0 0
          %1636 = vmatpush2.bf16.msra.mxu0 0
          %1637 = vmatprep.subr.bf16.mxu0 0
          %1638 = vmatpush2.bf16.msra.mxu0 0
          %1639 = vmatprep.mubr.bf16.mxu0 0
          %1640 = vmatmul.mubr.bf16.gmra.mxu0 %v1605
          %v1641 = vpop.f32.mrf.mxu0
          %v1642 = vadd.f32 0.0, %v1641
          %v1643 = vpop.f32.mrf.mxu0
          %v1644 = vpop.f32.mrf.mxu0
          %v1645 = vadd.f32 0.0, %v1644
          %v1646 = vpop.f32.mrf.mxu0
          %1647 = vdwg.mxu0
          %v1648 = vpack.c.bf16 %v1645, %v1642
          %v1650 = vunpack.c.l.b16 %v1648
          %v1651 = vunpack.c.h.b16 %v1648
          %v1652 = vpack.c.b16 %v1650, %v1650
          %v1653 = vpack.c.b16 %v1651, %v1651
          %1654 = vrot.lane.b32.xlu0 %v1652, 16
          %v1655 = vpop.permute.xlu0 %1654
          %1656 = vrot.lane.b32.xlu0 %v1653, 16
          %v1657 = vpop.permute.xlu0 %1656
          %1660 = vst.msk [vmem:[#allocation3 + $0x8] sm:$0xf] %vm1096, %v1655
          %1661 = vst.msk [vmem:[#allocation3 + $0xc] sm:$0xf] %vm1096, %v1657
          %v1662 = vld [vmem:[#allocation2 + $0x8] sm:$0xf]
          %v1663 = vld [vmem:[#allocation2 + $0xc] sm:$0xf]
          %v1666 = vunpack.c.l.b16 %v1662
          %v1667 = vunpack.c.l.b16 %v1663
          %v1668 = vpack.c.b16 %v1667, %v1666
          %1669 = vrot.lane.b32.xlu0 %v1668, 104
          %v1670 = vpop.permute.xlu0 %1669
          %1671 = vrot.lane.b32.xlu0 %v1668, 72
          %v1672 = vpop.permute.xlu0 %1671
          %v1674 = vsel %vm683, %v1670, 0
          %v1677 = vsel %vm683, %v1672, 0
          %1679 = vmatprep.subr.bf16.mxu0 0
          %1680 = vmatpush1.bf16.xpose.msra.mxu0 0
          %1681 = vmatprep.subr.bf16.mxu0 0
          %1682 = vmatpush1.bf16.xpose.msra.mxu0 0
          %1683 = vmatprep.subr.bf16.mxu0 0
          %1684 = vmatpush1.bf16.xpose.msra.mxu0 0
          %1685 = vmatprep.subr.bf16.mxu0 0
          %1686 = vmatpush1.bf16.xpose.msra.mxu0 0
          %1687 = vmatprep.subr.bf16.mxu0 0
          %1688 = vmatpush1.bf16.xpose.msra.mxu0 0
          %1689 = vmatprep.subr.bf16.mxu0 0
          %1690 = vmatpush1.bf16.xpose.msra.mxu0 0
          %1691 = vmatprep.subr.bf16.mxu0 0
          %1692 = vmatpush1.bf16.xpose.msra.mxu0 0
          %1693 = vmatprep.subr.bf16.mxu0 0
          %1694 = vmatpush1.bf16.xpose.msra.mxu0 %v1677
          %1695 = vmatprep.subr.bf16.mxu0 0
          %1696 = vmatpush2.bf16.xpose.msra.mxu0 0
          %1697 = vmatprep.subr.bf16.mxu0 0
          %1698 = vmatpush2.bf16.xpose.msra.mxu0 0
          %1699 = vmatprep.subr.bf16.mxu0 0
          %1700 = vmatpush2.bf16.xpose.msra.mxu0 0
          %1701 = vmatprep.subr.bf16.mxu0 0
          %1702 = vmatpush2.bf16.xpose.msra.mxu0 0
          %1703 = vmatprep.subr.bf16.mxu0 0
          %1704 = vmatpush2.bf16.xpose.msra.mxu0 0
          %1705 = vmatprep.subr.bf16.mxu0 0
          %1706 = vmatpush2.bf16.xpose.msra.mxu0 0
          %1707 = vmatprep.subr.bf16.mxu0 0
          %1708 = vmatpush2.bf16.xpose.msra.mxu0 0
          %1709 = vmatprep.subr.bf16.mxu0 0
          %1710 = vmatpush2.bf16.xpose.msra.mxu0 0
          %1711 = vmatprep.mubr.bf16.mxu0 0
          %1712 = vmatmul.mubr.bf16.gmra.mxu0 %v1674
          %v1713 = vpop.f32.mrf.mxu0
          %v1714 = vadd.f32 0.0, %v1713
          %v1715 = vpop.f32.mrf.mxu0
          %v1716 = vpop.f32.mrf.mxu0
          %v1717 = vadd.f32 0.0, %v1716
          %v1718 = vpop.f32.mrf.mxu0
          %1719 = vdwg.mxu0
          %v1720 = vsel %vm731, %v1714, -inf
          %1721 = vmax.xlane.f32.xlu0 %v1720
          %v1722 = vpop.xlane.xlu0 %1721
          %v1723 = vsel %vm731, %v1717, -inf
          %1724 = vmax.xlane.f32.xlu0 %v1723
          %v1725 = vpop.xlane.xlu0 %1724
          %v1726 = vsub.f32 %v1714, %v1722
          %v1727 = vsub.f32 %v1717, %v1725
          %v1728 = vmul.f32 %v1726, 1.442695
          %v1729 = vpow.pop %v1728
          %v1730 = vmul.f32 %v1727, 1.442695
          %v1731 = vpow.pop %v1730
          %v1732 = vsel %vm731, %v1729, 0.0
          %1733 = vadd.xlane.f32.xlu0 %v1732
          %v1734 = vpop.xlane.xlu0 %1733
          %v1735 = vsel %vm731, %v1731, 0.0
          %1736 = vadd.xlane.f32.xlu0 %v1735
          %v1737 = vpop.xlane.xlu0 %1736
          %v1738 = vrcp.pop %v1734
          %v1739 = vrcp.pop %v1737
          %v1740 = vmul.f32 %v1729, %v1738
          %v1741 = vmul.f32 %v1731, %v1739
          %v1742 = vpack.c.bf16 %v1741, %v1740
          %1743 = vrot.lane.b32.xlu0 %v1668, 40
          %v1744 = vpop.permute.xlu0 %1743
          %v1747 = vsel %vm731, %v1742, 0
          %1749 = vmatprep.subr.bf16.mxu0 0
          %1750 = vmatpush1.bf16.msra.mxu0 0
          %1751 = vmatprep.subr.bf16.mxu0 0
          %1752 = vmatpush1.bf16.msra.mxu0 0
          %1753 = vmatprep.subr.bf16.mxu0 0
          %1754 = vmatpush1.bf16.msra.mxu0 0
          %1755 = vmatprep.subr.bf16.mxu0 0
          %1756 = vmatpush1.bf16.msra.mxu0 0
          %1757 = vmatprep.subr.bf16.mxu0 0
          %1758 = vmatpush1.bf16.msra.mxu0 0
          %1759 = vmatprep.subr.bf16.mxu0 0
          %1760 = vmatpush1.bf16.msra.mxu0 0
          %1761 = vmatprep.subr.bf16.mxu0 0
          %1762 = vmatpush1.bf16.msra.mxu0 0
          %1763 = vmatprep.subr.bf16.mxu0 0
          %1764 = vmatpush1.bf16.msra.mxu0 %v1744
          %1765 = vmatprep.subr.bf16.mxu0 0
          %1766 = vmatpush2.bf16.msra.mxu0 0
          %1767 = vmatprep.subr.bf16.mxu0 0
          %1768 = vmatpush2.bf16.msra.mxu0 0
          %1769 = vmatprep.subr.bf16.mxu0 0
          %1770 = vmatpush2.bf16.msra.mxu0 0
          %1771 = vmatprep.subr.bf16.mxu0 0
          %1772 = vmatpush2.bf16.msra.mxu0 0
          %1773 = vmatprep.subr.bf16.mxu0 0
          %1774 = vmatpush2.bf16.msra.mxu0 0
          %1775 = vmatprep.subr.bf16.mxu0 0
          %1776 = vmatpush2.bf16.msra.mxu0 0
          %1777 = vmatprep.subr.bf16.mxu0 0
          %1778 = vmatpush2.bf16.msra.mxu0 0
          %1779 = vmatprep.subr.bf16.mxu0 0
          %1780 = vmatpush2.bf16.msra.mxu0 0
          %1781 = vmatprep.mubr.bf16.mxu0 0
          %1782 = vmatmul.mubr.bf16.gmra.mxu0 %v1747
          %v1783 = vpop.f32.mrf.mxu0
          %v1784 = vadd.f32 0.0, %v1783
          %v1785 = vpop.f32.mrf.mxu0
          %v1786 = vpop.f32.mrf.mxu0
          %v1787 = vadd.f32 0.0, %v1786
          %v1788 = vpop.f32.mrf.mxu0
          %1789 = vdwg.mxu0
          %v1790 = vpack.c.bf16 %v1787, %v1784
          %v1792 = vunpack.c.l.b16 %v1790
          %v1793 = vunpack.c.h.b16 %v1790
          %v1794 = vpack.c.b16 %v1792, %v1792
          %v1795 = vpack.c.b16 %v1793, %v1793
          %1796 = vrot.lane.b32.xlu0 %v1794, 24
          %v1797 = vpop.permute.xlu0 %1796
          %1798 = vrot.lane.b32.xlu0 %v1795, 24
          %v1799 = vpop.permute.xlu0 %1798
          %1802 = vst.msk [vmem:[#allocation3 + $0x8] sm:$0xf] %vm1239, %v1797
          %1803 = vst.msk [vmem:[#allocation3 + $0xc] sm:$0xf] %vm1239, %v1799
          %v1804 = vld [vmem:[#allocation3] sm:$0xf]
          %v1805 = vld [vmem:[#allocation3 + $0x4] sm:$0xf]
          %v1806 = vld [vmem:[#allocation3 + $0x8] sm:$0xf]
          %v1807 = vld [vmem:[#allocation3 + $0xc] sm:$0xf]
          %s1808 = smul.addr %s570, 4
          %s1809 = scalar_lea.vmem %s3, %s1808
          %v1810 = vld [vmem:[%s1809] sm:$0xf]
          %v1811 = vld [vmem:[%s1809 + $0x4] sm:$0xf]
          %v1812 = vld [vmem:[%s1809 + $0x8] sm:$0xf]
          %v1813 = vld [vmem:[%s1809 + $0xc] sm:$0xf]
          %s1814 = scalar_lea.vmem %s4, %s559
          %v1815 = vld [vmem:[%s1814] sm:$0x1]
          %v1817 = vlaneseq
          %v1818 = vshrl.u32 %v1817, 7
          %v1819 = vsub.s32 0, %v1818
          %v1820 = vrot.slane %v1815, %v1819
          %v1826 = vunpack.c.l.b16 %v1804
          %v1827 = vunpack.c.l.b16 %v1805
          %v1828 = vunpack.c.l.b16 %v1806
          %v1829 = vunpack.c.l.b16 %v1807
          %v1830 = vpack.c.b16 %v1827, %v1826
          %v1831 = vpack.c.b16 %v1829, %v1828
          %v1836 = vunpack.c.l.b16 %v1810
          %v1837 = vunpack.c.l.b16 %v1811
          %v1838 = vunpack.c.l.b16 %v1812
          %v1839 = vunpack.c.l.b16 %v1813
          %v1840 = vpack.c.b16 %v1837, %v1836
          %v1841 = vpack.c.b16 %v1839, %v1838
          %v1845 = vsel %vm597, %v1830, 0
          %v1848 = vsel %vm597, %v1831, 0
          %1850 = vmatprep.subr.bf16.mxu0 0
          %1851 = vmatpush1.bf16.msra.mxu0 0
          %1852 = vmatprep.subr.bf16.mxu0 0
          %1853 = vmatpush1.bf16.msra.mxu0 0
          %1854 = vmatprep.subr.bf16.mxu0 0
          %1855 = vmatpush1.bf16.msra.mxu0 0
          %1856 = vmatprep.subr.bf16.mxu0 0
          %1857 = vmatpush1.bf16.msra.mxu0 0
          %1858 = vmatprep.subr.bf16.mxu0 0
          %1859 = vmatpush1.bf16.msra.mxu0 0
          %1860 = vmatprep.subr.bf16.mxu0 0
          %1861 = vmatpush1.bf16.msra.mxu0 0
          %1862 = vmatprep.subr.bf16.mxu0 0
          %1863 = vmatpush1.bf16.msra.mxu0 %v1841
          %1864 = vmatprep.subr.bf16.mxu0 0
          %1865 = vmatpush1.bf16.msra.mxu0 %v1840
          %1866 = vmatprep.subr.bf16.mxu0 0
          %1867 = vmatpush2.bf16.msra.mxu0 0
          %1868 = vmatprep.subr.bf16.mxu0 0
          %1869 = vmatpush2.bf16.msra.mxu0 0
          %1870 = vmatprep.subr.bf16.mxu0 0
          %1871 = vmatpush2.bf16.msra.mxu0 0
          %1872 = vmatprep.subr.bf16.mxu0 0
          %1873 = vmatpush2.bf16.msra.mxu0 0
          %1874 = vmatprep.subr.bf16.mxu0 0
          %1875 = vmatpush2.bf16.msra.mxu0 0
          %1876 = vmatprep.subr.bf16.mxu0 0
          %1877 = vmatpush2.bf16.msra.mxu0 0
          %1878 = vmatprep.subr.bf16.mxu0 0
          %1879 = vmatpush2.bf16.msra.mxu0 0
          %1880 = vmatprep.subr.bf16.mxu0 0
          %1881 = vmatpush2.bf16.msra.mxu0 0
          %1882 = vmatprep.mubr.bf16.mxu0 0
          %1883 = vmatmul.mubr.bf16.gmra.mxu0 %v1845
          %v1884 = vpop.f32.mrf.mxu0
          %v1885 = vadd.f32 %v1820, %v1884
          %v1886 = vpop.f32.mrf.mxu0
          %v1887 = vpop.f32.mrf.mxu0
          %v1888 = vadd.f32 %v1820, %v1887
          %v1889 = vpop.f32.mrf.mxu0
          %1890 = vmatprep.mubr.bf16.mxu0 0
          %1891 = vmatmul.mubr.bf16.gmra.mxu0 %v1848
          %v1892 = vpop.f32.mrf.mxu0
          %v1893 = vadd.f32 %v1820, %v1892
          %v1894 = vpop.f32.mrf.mxu0
          %v1895 = vpop.f32.mrf.mxu0
          %v1896 = vadd.f32 %v1820, %v1895
          %v1897 = vpop.f32.mrf.mxu0
          %1898 = vdwg.mxu0
          %v1899 = vadd.f32 %v564, %v1885
          %v1900 = vadd.f32 %v565, %v1888
          %v1901 = vadd.f32 %v566, %v1893
          %v1902 = vadd.f32 %v567, %v1896
          %v1903 = vsel %vm597, %v1899, 0.0
          %1904 = vadd.xlane.f32.xlu0 %v1903
          %v1905 = vpop.xlane.xlu0 %1904
          %v1906 = vsel %vm597, %v1900, 0.0
          %1907 = vadd.xlane.f32.xlu0 %v1906
          %v1908 = vpop.xlane.xlu0 %1907
          %v1909 = vsel %vm597, %v1901, 0.0
          %1910 = vadd.xlane.f32.xlu0 %v1909
          %v1911 = vpop.xlane.xlu0 %1910
          %v1912 = vsel %vm597, %v1902, 0.0
          %1913 = vadd.xlane.f32.xlu0 %v1912
          %v1914 = vpop.xlane.xlu0 %1913
          %v1915 = vrcp.pop 32.0
          %v1916 = vmul.f32 %v1905, %v1915
          %v1917 = vmul.f32 %v1908, %v1915
          %v1918 = vmul.f32 %v1911, %v1915
          %v1919 = vmul.f32 %v1914, %v1915
          %v1920 = vmul.f32 %v1899, %v1899
          %v1921 = vmul.f32 %v1900, %v1900
          %v1922 = vmul.f32 %v1901, %v1901
          %v1923 = vmul.f32 %v1902, %v1902
          %v1924 = vsel %vm597, %v1920, 0.0
          %1925 = vadd.xlane.f32.xlu0 %v1924
          %v1926 = vpop.xlane.xlu0 %1925
          %v1927 = vsel %vm597, %v1921, 0.0
          %1928 = vadd.xlane.f32.xlu0 %v1927
          %v1929 = vpop.xlane.xlu0 %1928
          %v1930 = vsel %vm597, %v1922, 0.0
          %1931 = vadd.xlane.f32.xlu0 %v1930
          %v1932 = vpop.xlane.xlu0 %1931
          %v1933 = vsel %vm597, %v1923, 0.0
          %1934 = vadd.xlane.f32.xlu0 %v1933
          %v1935 = vpop.xlane.xlu0 %1934
          %v1936 = vmul.f32 %v1926, %v1915
          %v1937 = vmul.f32 %v1929, %v1915
          %v1938 = vmul.f32 %v1932, %v1915
          %v1939 = vmul.f32 %v1935, %v1915
          %v1940 = vsub.f32 %v1899, %v1916
          %v1941 = vsub.f32 %v1900, %v1917
          %v1942 = vsub.f32 %v1901, %v1918
          %v1943 = vsub.f32 %v1902, %v1919
          %v1944 = vmul.f32 %v1916, %v1916
          %v1945 = vmul.f32 %v1917, %v1917
          %v1946 = vmul.f32 %v1918, %v1918
          %v1947 = vmul.f32 %v1919, %v1919
          %v1948 = vsub.f32 %v1936, %v1944
          %v1949 = vsub.f32 %v1937, %v1945
          %v1950 = vsub.f32 %v1938, %v1946
          %v1951 = vsub.f32 %v1939, %v1947
          %v1952 = vadd.f32 %v1948, 1e-06
          %v1953 = vadd.f32 %v1949, 1e-06
          %v1954 = vadd.f32 %v1950, 1e-06
          %v1955 = vadd.f32 %v1951, 1e-06
          %v1956 = vrsqrt.pop %v1952
          %v1957 = vrsqrt.pop %v1953
          %v1958 = vrsqrt.pop %v1954
          %v1959 = vrsqrt.pop %v1955
          %v1960 = vmul.f32 %v1940, %v1956
          %v1961 = vmul.f32 %v1941, %v1957
          %v1962 = vmul.f32 %v1942, %v1958
          %v1963 = vmul.f32 %v1943, %v1959
          %s1964 = scalar_lea.vmem %s5, %s559
          %v1965 = vld [vmem:[%s1964] sm:$0x1]
          %v1967 = vlaneseq
          %v1968 = vshrl.u32 %v1967, 7
          %v1969 = vsub.s32 0, %v1968
          %v1970 = vrot.slane %v1965, %v1969
          %v1972 = vmul.f32 %v1960, %v1970
          %v1973 = vmul.f32 %v1961, %v1970
          %v1974 = vmul.f32 %v1962, %v1970
          %v1975 = vmul.f32 %v1963, %v1970
          %s1976 = scalar_lea.vmem %s6, %s559
          %v1977 = vld [vmem:[%s1976] sm:$0x1]
          %v1979 = vlaneseq
          %v1980 = vshrl.u32 %v1979, 7
          %v1981 = vsub.s32 0, %v1980
          %v1982 = vrot.slane %v1977, %v1981
          %v1984 = vadd.f32 %v1972, %v1982
          %v1985 = vadd.f32 %v1973, %v1982
          %v1986 = vadd.f32 %v1974, %v1982
          %v1987 = vadd.f32 %v1975, %v1982
          %v1988 = vpack.c.bf16 %v1985, %v1984
          %v1989 = vpack.c.bf16 %v1987, %v1986
          %s1990 = smul.addr %s570, 4
          %s1991 = scalar_lea.vmem %s7, %s1990
          %v1992 = vld [vmem:[%s1991] sm:$0xf]
          %v1993 = vld [vmem:[%s1991 + $0x4] sm:$0xf]
          %v1994 = vld [vmem:[%s1991 + $0x8] sm:$0xf]
          %v1995 = vld [vmem:[%s1991 + $0xc] sm:$0xf]
          %s1996 = scalar_lea.vmem %s8, %s559
          %v1997 = vld [vmem:[%s1996] sm:$0x1]
          %v1999 = vlaneseq
          %v2000 = vshrl.u32 %v1999, 7
          %v2001 = vsub.s32 0, %v2000
          %v2002 = vrot.slane %v1997, %v2001
          %v2008 = vunpack.c.l.b16 %v1992
          %v2009 = vunpack.c.l.b16 %v1993
          %v2010 = vunpack.c.l.b16 %v1994
          %v2011 = vunpack.c.l.b16 %v1995
          %v2012 = vpack.c.b16 %v2009, %v2008
          %v2013 = vpack.c.b16 %v2011, %v2010
          %v2017 = vsel %vm597, %v1988, 0
          %v2020 = vsel %vm597, %v1989, 0
          %2022 = vmatprep.subr.bf16.mxu0 0
          %2023 = vmatpush1.bf16.msra.mxu0 0
          %2024 = vmatprep.subr.bf16.mxu0 0
          %2025 = vmatpush1.bf16.msra.mxu0 0
          %2026 = vmatprep.subr.bf16.mxu0 0
          %2027 = vmatpush1.bf16.msra.mxu0 0
          %2028 = vmatprep.subr.bf16.mxu0 0
          %2029 = vmatpush1.bf16.msra.mxu0 0
          %2030 = vmatprep.subr.bf16.mxu0 0
          %2031 = vmatpush1.bf16.msra.mxu0 0
          %2032 = vmatprep.subr.bf16.mxu0 0
          %2033 = vmatpush1.bf16.msra.mxu0 0
          %2034 = vmatprep.subr.bf16.mxu0 0
          %2035 = vmatpush1.bf16.msra.mxu0 %v2013
          %2036 = vmatprep.subr.bf16.mxu0 0
          %2037 = vmatpush1.bf16.msra.mxu0 %v2012
          %2038 = vmatprep.subr.bf16.mxu0 0
          %2039 = vmatpush2.bf16.msra.mxu0 0
          %2040 = vmatprep.subr.bf16.mxu0 0
          %2041 = vmatpush2.bf16.msra.mxu0 0
          %2042 = vmatprep.subr.bf16.mxu0 0
          %2043 = vmatpush2.bf16.msra.mxu0 0
          %2044 = vmatprep.subr.bf16.mxu0 0
          %2045 = vmatpush2.bf16.msra.mxu0 0
          %2046 = vmatprep.subr.bf16.mxu0 0
          %2047 = vmatpush2.bf16.msra.mxu0 0
          %2048 = vmatprep.subr.bf16.mxu0 0
          %2049 = vmatpush2.bf16.msra.mxu0 0
          %2050 = vmatprep.subr.bf16.mxu0 0
          %2051 = vmatpush2.bf16.msra.mxu0 0
          %2052 = vmatprep.subr.bf16.mxu0 0
          %2053 = vmatpush2.bf16.msra.mxu0 0
          %2054 = vmatprep.mubr.bf16.mxu0 0
          %2055 = vmatmul.mubr.bf16.gmra.mxu0 %v2017
          %v2056 = vpop.f32.mrf.mxu0
          %v2057 = vadd.f32 %v2002, %v2056
          %v2058 = vpop.f32.mrf.mxu0
          %v2059 = vpop.f32.mrf.mxu0
          %v2060 = vadd.f32 %v2002, %v2059
          %v2061 = vpop.f32.mrf.mxu0
          %2062 = vmatprep.mubr.bf16.mxu0 0
          %2063 = vmatmul.mubr.bf16.gmra.mxu0 %v2020
          %v2064 = vpop.f32.mrf.mxu0
          %v2065 = vadd.f32 %v2002, %v2064
          %v2066 = vpop.f32.mrf.mxu0
          %v2067 = vpop.f32.mrf.mxu0
          %v2068 = vadd.f32 %v2002, %v2067
          %v2069 = vpop.f32.mrf.mxu0
          %2070 = vdwg.mxu0
          %v2071 = vmax.f32 %v2057, 0.0
          %v2072 = vmax.f32 %v2060, 0.0
          %v2073 = vmax.f32 %v2065, 0.0
          %v2074 = vmax.f32 %v2068, 0.0
          %v2075 = vpack.c.bf16 %v2072, %v2071
          %v2076 = vpack.c.bf16 %v2074, %v2073
          %s2077 = smul.u32 %s559, 8
          %s2078 = smul.addr %s2077, 4
          %s2079 = scalar_lea.vmem %s9, %s2078
          %v2080 = vld [vmem:[%s2079] sm:$0xf]
          %v2081 = vld [vmem:[%s2079 + $0x4] sm:$0xf]
          %v2082 = vld [vmem:[%s2079 + $0x8] sm:$0xf]
          %v2083 = vld [vmem:[%s2079 + $0xc] sm:$0xf]
          %v2084 = vld [vmem:[%s2079 + $0x10] sm:$0xf]
          %v2085 = vld [vmem:[%s2079 + $0x14] sm:$0xf]
          %v2086 = vld [vmem:[%s2079 + $0x18] sm:$0xf]
          %v2087 = vld [vmem:[%s2079 + $0x1c] sm:$0xf]
          %s2088 = scalar_lea.vmem %s10, %s559
          %v2089 = vld [vmem:[%s2088] sm:$0x1]
          %v2091 = vlaneseq
          %v2092 = vshrl.u32 %v2091, 7
          %v2093 = vsub.s32 0, %v2092
          %v2094 = vrot.slane %v2089, %v2093
          %v2104 = vunpack.c.l.b16 %v2080
          %v2105 = vunpack.c.l.b16 %v2081
          %v2106 = vunpack.c.l.b16 %v2082
          %v2107 = vunpack.c.l.b16 %v2083
          %v2108 = vunpack.c.l.b16 %v2084
          %v2109 = vunpack.c.l.b16 %v2085
          %v2110 = vunpack.c.l.b16 %v2086
          %v2111 = vunpack.c.l.b16 %v2087
          %v2112 = vpack.c.b16 %v2105, %v2104
          %v2113 = vpack.c.b16 %v2107, %v2106
          %v2114 = vpack.c.b16 %v2109, %v2108
          %v2115 = vpack.c.b16 %v2111, %v2110
          %vm2120 = vcmask 523264
          %v2122 = vsel %vm2120, %v2075, 0
          %v2125 = vsel %vm2120, %v2076, 0
          %2127 = vmatprep.subr.bf16.mxu0 0
          %2128 = vmatpush1.bf16.msra.mxu0 0
          %2129 = vmatprep.subr.bf16.mxu0 0
          %2130 = vmatpush1.bf16.msra.mxu0 0
          %2131 = vmatprep.subr.bf16.mxu0 0
          %2132 = vmatpush1.bf16.msra.mxu0 0
          %2133 = vmatprep.subr.bf16.mxu0 0
          %2134 = vmatpush1.bf16.msra.mxu0 0
          %2135 = vmatprep.subr.bf16.mxu0 0
          %2136 = vmatpush1.bf16.msra.mxu0 %v2115
          %2137 = vmatprep.subr.bf16.mxu0 0
          %2138 = vmatpush1.bf16.msra.mxu0 %v2114
          %2139 = vmatprep.subr.bf16.mxu0 0
          %2140 = vmatpush1.bf16.msra.mxu0 %v2113
          %2141 = vmatprep.subr.bf16.mxu0 0
          %2142 = vmatpush1.bf16.msra.mxu0 %v2112
          %2143 = vmatprep.subr.bf16.mxu0 0
          %2144 = vmatpush2.bf16.msra.mxu0 0
          %2145 = vmatprep.subr.bf16.mxu0 0
          %2146 = vmatpush2.bf16.msra.mxu0 0
          %2147 = vmatprep.subr.bf16.mxu0 0
          %2148 = vmatpush2.bf16.msra.mxu0 0
          %2149 = vmatprep.subr.bf16.mxu0 0
          %2150 = vmatpush2.bf16.msra.mxu0 0
          %2151 = vmatprep.subr.bf16.mxu0 0
          %2152 = vmatpush2.bf16.msra.mxu0 0
          %2153 = vmatprep.subr.bf16.mxu0 0
          %2154 = vmatpush2.bf16.msra.mxu0 0
          %2155 = vmatprep.subr.bf16.mxu0 0
          %2156 = vmatpush2.bf16.msra.mxu0 0
          %2157 = vmatprep.subr.bf16.mxu0 0
          %2158 = vmatpush2.bf16.msra.mxu0 0
          %2159 = vmatprep.mubr.bf16.mxu0 0
          %2160 = vmatmul.mubr.bf16.gmra.mxu0 %v2122
          %v2161 = vpop.f32.mrf.mxu0
          %v2162 = vadd.f32 %v2094, %v2161
          %v2163 = vpop.f32.mrf.mxu0
          %v2164 = vpop.f32.mrf.mxu0
          %v2165 = vadd.f32 %v2094, %v2164
          %v2166 = vpop.f32.mrf.mxu0
          %2167 = vmatprep.mubr.bf16.mxu0 0
          %2168 = vmatmul.mubr.bf16.gmra.mxu0 %v2125
          %v2169 = vpop.f32.mrf.mxu0
          %v2170 = vadd.f32 %v2094, %v2169
          %v2171 = vpop.f32.mrf.mxu0
          %v2172 = vpop.f32.mrf.mxu0
          %v2173 = vadd.f32 %v2094, %v2172
          %v2174 = vpop.f32.mrf.mxu0
          %2175 = vdwg.mxu0
          %v2176 = vadd.f32 %v1984, %v2162
          %v2177 = vadd.f32 %v1985, %v2165
          %v2178 = vadd.f32 %v1986, %v2170
          %v2179 = vadd.f32 %v1987, %v2173
          %v2180 = vsel %vm597, %v2176, 0.0
          %2181 = vadd.xlane.f32.xlu0 %v2180
          %v2182 = vpop.xlane.xlu0 %2181
          %v2183 = vsel %vm597, %v2177, 0.0
          %2184 = vadd.xlane.f32.xlu0 %v2183
          %v2185 = vpop.xlane.xlu0 %2184
          %v2186 = vsel %vm597, %v2178, 0.0
          %2187 = vadd.xlane.f32.xlu0 %v2186
          %v2188 = vpop.xlane.xlu0 %2187
          %v2189 = vsel %vm597, %v2179, 0.0
          %2190 = vadd.xlane.f32.xlu0 %v2189
          %v2191 = vpop.xlane.xlu0 %2190
          %v2192 = vmul.f32 %v2182, %v1915
          %v2193 = vmul.f32 %v2185, %v1915
          %v2194 = vmul.f32 %v2188, %v1915
          %v2195 = vmul.f32 %v2191, %v1915
          %v2196 = vmul.f32 %v2176, %v2176
          %v2197 = vmul.f32 %v2177, %v2177
          %v2198 = vmul.f32 %v2178, %v2178
          %v2199 = vmul.f32 %v2179, %v2179
          %v2200 = vsel %vm597, %v2196, 0.0
          %2201 = vadd.xlane.f32.xlu0 %v2200
          %v2202 = vpop.xlane.xlu0 %2201
          %v2203 = vsel %vm597, %v2197, 0.0
          %2204 = vadd.xlane.f32.xlu0 %v2203
          %v2205 = vpop.xlane.xlu0 %2204
          %v2206 = vsel %vm597, %v2198, 0.0
          %2207 = vadd.xlane.f32.xlu0 %v2206
          %v2208 = vpop.xlane.xlu0 %2207
          %v2209 = vsel %vm597, %v2199, 0.0
          %2210 = vadd.xlane.f32.xlu0 %v2209
          %v2211 = vpop.xlane.xlu0 %2210
          %v2212 = vmul.f32 %v2202, %v1915
          %v2213 = vmul.f32 %v2205, %v1915
          %v2214 = vmul.f32 %v2208, %v1915
          %v2215 = vmul.f32 %v2211, %v1915
          %v2216 = vsub.f32 %v2176, %v2192
          %v2217 = vsub.f32 %v2177, %v2193
          %v2218 = vsub.f32 %v2178, %v2194
          %v2219 = vsub.f32 %v2179, %v2195
          %v2220 = vmul.f32 %v2192, %v2192
          %v2221 = vmul.f32 %v2193, %v2193
          %v2222 = vmul.f32 %v2194, %v2194
          %v2223 = vmul.f32 %v2195, %v2195
          %v2224 = vsub.f32 %v2212, %v2220
          %v2225 = vsub.f32 %v2213, %v2221
          %v2226 = vsub.f32 %v2214, %v2222
          %v2227 = vsub.f32 %v2215, %v2223
          %v2228 = vadd.f32 %v2224, 1e-06
          %v2229 = vadd.f32 %v2225, 1e-06
          %v2230 = vadd.f32 %v2226, 1e-06
          %v2231 = vadd.f32 %v2227, 1e-06
          %v2232 = vrsqrt.pop %v2228
          %v2233 = vrsqrt.pop %v2229
          %v2234 = vrsqrt.pop %v2230
          %v2235 = vrsqrt.pop %v2231
          %v2236 = vmul.f32 %v2216, %v2232
          %v2237 = vmul.f32 %v2217, %v2233
          %v2238 = vmul.f32 %v2218, %v2234
          %v2239 = vmul.f32 %v2219, %v2235
          %s2240 = scalar_lea.vmem %s11, %s559
          %v2241 = vld [vmem:[%s2240] sm:$0x1]
          %v2243 = vlaneseq
          %v2244 = vshrl.u32 %v2243, 7
          %v2245 = vsub.s32 0, %v2244
          %v2246 = vrot.slane %v2241, %v2245
          %v2248 = vmul.f32 %v2236, %v2246
          %v2249 = vmul.f32 %v2237, %v2246
          %v2250 = vmul.f32 %v2238, %v2246
          %v2251 = vmul.f32 %v2239, %v2246
          %s2252 = scalar_lea.vmem %s12, %s559
          %v2253 = vld [vmem:[%s2252] sm:$0x1]
          %v2255 = vlaneseq
          %v2256 = vshrl.u32 %v2255, 7
          %v2257 = vsub.s32 0, %v2256
          %v2258 = vrot.slane %v2253, %v2257
          %v2260 = vadd.f32 %v2248, %v2258
          %v2261 = vadd.f32 %v2249, %v2258
          %v2262 = vadd.f32 %v2250, %v2258
          %v2263 = vadd.f32 %v2251, %v2258
        $region93: #{tpu_custom_call.1} parent=87 // loop_footer
          %s563 = sadd.s32 1, %s559
        $region94: #{tpu_custom_call.1} parent=87 // loop_footer_branch
          %558 = sbr.rel target = $region90
        $region95: #{tpu_custom_call.1} parent=87 // loop_exit
          _
        %vm2264 = vcmask 261120
        %v2265 = vsel %vm2264, %v564, 0.0
        %v2266 = vsel %vm2264, %v565, 0.0
        %v2267 = vadd.f32 %v2265, %v2266
        %v2268 = vrot.slane %v2267, 4
        %v2269 = vadd.f32 %v2267, %v2268
        %v2270 = vrot.slane %v2269, 2
        %v2271 = vadd.f32 %v2269, %v2270
        %v2272 = vrot.slane %v2271, 1
        %v2273 = vadd.f32 %v2271, %v2272
        %v2274 = vrcp.pop 16.0
        %v2275 = vmul.f32 %v2273, %v2274
        %vm2276 = vcmask 253952
        %2277 = vst.msk [vmem:[#allocation4] sm:$0x1] %vm2276, %v2275
        %v2278 = vsel %vm2264, %v566, 0.0
        %v2279 = vsel %vm2264, %v567, 0.0
        %v2280 = vadd.f32 %v2278, %v2279
        %v2281 = vrot.slane %v2280, 4
        %v2282 = vadd.f32 %v2280, %v2281
        %v2283 = vrot.slane %v2282, 2
        %v2284 = vadd.f32 %v2282, %v2283
        %v2285 = vrot.slane %v2284, 1
        %v2286 = vadd.f32 %v2284, %v2285
        %v2287 = vmul.f32 %v2286, %v2274
        %2288 = vst.msk [vmem:[#allocation4 + $0x1] sm:$0x1] %vm2276, %v2287
        %v2289 = vld [vmem:[#allocation4] sm:$0x3]
        %v2290 = vpack.c.bf16 %v2289, %v2289
        %v2291 = vld [vmem:[%s13] sm:$0xf]
        %v2292 = vld [vmem:[%s13 + $0x4] sm:$0xf]
        %v2293 = vld [vmem:[%s13 + $0x8] sm:$0xf]
        %v2294 = vld [vmem:[%s13 + $0xc] sm:$0xf]
        %v2295 = vld [vmem:[%s14] sm:$0x1]
        %v2297 = vlaneseq
        %v2298 = vshrl.u32 %v2297, 7
        %v2299 = vsub.s32 0, %v2298
        %v2300 = vrot.slane %v2295, %v2299
        %v2306 = vunpack.c.l.b16 %v2291
        %v2307 = vunpack.c.l.b16 %v2292
        %v2308 = vunpack.c.l.b16 %v2293
        %v2309 = vunpack.c.l.b16 %v2294
        %v2310 = vpack.c.b16 %v2307, %v2306
        %v2311 = vpack.c.b16 %v2309, %v2308
        %v2315 = vsel %vm2264, %v2290, 0
        %2317 = vmatprep.subr.bf16.mxu0 0
        %2318 = vmatpush1.bf16.msra.mxu0 0
        %2319 = vmatprep.subr.bf16.mxu0 0
        %2320 = vmatpush1.bf16.msra.mxu0 0
        %2321 = vmatprep.subr.bf16.mxu0 0
        %2322 = vmatpush1.bf16.msra.mxu0 0
        %2323 = vmatprep.subr.bf16.mxu0 0
        %2324 = vmatpush1.bf16.msra.mxu0 0
        %2325 = vmatprep.subr.bf16.mxu0 0
        %2326 = vmatpush1.bf16.msra.mxu0 0
        %2327 = vmatprep.subr.bf16.mxu0 0
        %2328 = vmatpush1.bf16.msra.mxu0 0
        %2329 = vmatprep.subr.bf16.mxu0 0
        %2330 = vmatpush1.bf16.msra.mxu0 %v2311
        %2331 = vmatprep.subr.bf16.mxu0 0
        %2332 = vmatpush1.bf16.msra.mxu0 %v2310
        %2333 = vmatprep.subr.bf16.mxu0 0
        %2334 = vmatpush2.bf16.msra.mxu0 0
        %2335 = vmatprep.subr.bf16.mxu0 0
        %2336 = vmatpush2.bf16.msra.mxu0 0
        %2337 = vmatprep.subr.bf16.mxu0 0
        %2338 = vmatpush2.bf16.msra.mxu0 0
        %2339 = vmatprep.subr.bf16.mxu0 0
        %2340 = vmatpush2.bf16.msra.mxu0 0
        %2341 = vmatprep.subr.bf16.mxu0 0
        %2342 = vmatpush2.bf16.msra.mxu0 0
        %2343 = vmatprep.subr.bf16.mxu0 0
        %2344 = vmatpush2.bf16.msra.mxu0 0
        %2345 = vmatprep.subr.bf16.mxu0 0
        %2346 = vmatpush2.bf16.msra.mxu0 0
        %2347 = vmatprep.subr.bf16.mxu0 0
        %2348 = vmatpush2.bf16.msra.mxu0 0
        %2349 = vmatprep.mubr.bf16.mxu0 0
        %2350 = vmatmul.mubr.bf16.gmra.mxu0 %v2315
        %v2351 = vpop.f32.mrf.mxu0
        %v2352 = vadd.f32 %v2300, %v2351
        %v2353 = vpop.f32.mrf.mxu0
        %v2354 = vpop.f32.mrf.mxu0
        %v2355 = vpop.f32.mrf.mxu0
        %2356 = vdwg.mxu0
        %v2357 = vpack.c.bf16 %v2352, %v2352
        %v2358 = vld [vmem:[%s15] sm:$0xf]
        %v2359 = vld [vmem:[%s15 + $0x4] sm:$0xf]
        %v2360 = vld [vmem:[%s15 + $0x8] sm:$0x3]
        %v2361 = vld [vmem:[%s16] sm:$0x1]
        %v2363 = vlaneseq
        %v2364 = vshrl.u32 %v2363, 7
        %v2365 = vsub.s32 0, %v2364
        %v2366 = vrot.slane %v2361, %v2365
        %v2371 = vunpack.c.l.b16 %v2358
        %v2372 = vunpack.c.l.b16 %v2359
        %v2373 = vunpack.c.l.b16 %v2360
        %v2374 = vpack.c.b16 %v2372, %v2371
        %v2375 = vpack.c.b16 %v2373, %v2373
        %vm2377 = vcmask 162816
        %v2379 = vsel %vm2377, %v2357, 0
        %vm2381 = vcmask 1041408
        %v2383 = vsel %vm2381, %v2375, 0
        %2385 = vmatprep.subr.bf16.mxu0 0
        %2386 = vmatpush1.bf16.msra.mxu0 0
        %2387 = vmatprep.subr.bf16.mxu0 0
        %2388 = vmatpush1.bf16.msra.mxu0 0
        %2389 = vmatprep.subr.bf16.mxu0 0
        %2390 = vmatpush1.bf16.msra.mxu0 0
        %2391 = vmatprep.subr.bf16.mxu0 0
        %2392 = vmatpush1.bf16.msra.mxu0 0
        %2393 = vmatprep.subr.bf16.mxu0 0
        %2394 = vmatpush1.bf16.msra.mxu0 0
        %2395 = vmatprep.subr.bf16.mxu0 0
        %2396 = vmatpush1.bf16.msra.mxu0 0
        %2397 = vmatprep.subr.bf16.mxu0 0
        %2398 = vmatpush1.bf16.msra.mxu0 %v2383
        %2399 = vmatprep.subr.bf16.mxu0 0
        %2400 = vmatpush1.bf16.msra.mxu0 %v2374
        %2401 = vmatprep.subr.bf16.mxu0 0
        %2402 = vmatpush2.bf16.msra.mxu0 0
        %2403 = vmatprep.subr.bf16.mxu0 0
        %2404 = vmatpush2.bf16.msra.mxu0 0
        %2405 = vmatprep.subr.bf16.mxu0 0
        %2406 = vmatpush2.bf16.msra.mxu0 0
        %2407 = vmatprep.subr.bf16.mxu0 0
        %2408 = vmatpush2.bf16.msra.mxu0 0
        %2409 = vmatprep.subr.bf16.mxu0 0
        %2410 = vmatpush2.bf16.msra.mxu0 0
        %2411 = vmatprep.subr.bf16.mxu0 0
        %2412 = vmatpush2.bf16.msra.mxu0 0
        %2413 = vmatprep.subr.bf16.mxu0 0
        %2414 = vmatpush2.bf16.msra.mxu0 0
        %2415 = vmatprep.subr.bf16.mxu0 0
        %2416 = vmatpush2.bf16.msra.mxu0 0
        %2417 = vmatprep.mubr.bf16.mxu0 0
        %2418 = vmatmul.mubr.bf16.gmra.mxu0 %v2379
        %v2419 = vpop.f32.mrf.mxu0
        %v2420 = vadd.f32 %v2366, %v2419
        %v2421 = vpop.f32.mrf.mxu0
        %v2422 = vpop.f32.mrf.mxu0
        %v2423 = vpop.f32.mrf.mxu0
        %2424 = vdwg.mxu0
        %vm2425 = vcmask 9216
        %2426 = vst.msk [vmem:[%s542] sm:$0x3] %vm2425, %v2420
        %s2427 = sand.u32 %s401, 1
        %s2428 = scalar_lea.sflag [#allocation6], %s2427
        %s2429 = sand.u32 %s401, 1
        %s2430 = smul.addr %s2429, 2
        %s2431 = scalar_lea.vmem [#allocation5], %s2430
        // Predicated region
        $region96: #{tpu_custom_call.1} parent=87 // pred_check
          %p2432 = pneg %p411
        $region97: #{tpu_custom_call.1} parent=87 // pred_check_branch
          %2434 = sbr.rel (%p2432) target = $region99
        $region98: #{tpu_custom_call.1} parent=87 // pred_region
          %s2436 = ssub.s32 32, 32
          %2437 = vsyncadd %s2428, %s2436
          %s2438 = smul.addr %s31, 32
          %s2439 = scalar_lea.hbm %s17, %s2438
          %s2441 = sshll.u32 %s2431, 4
          %s2442 = int_to_ptr.vmem [resolvable:$true] %s2441
          %2444 = dma.vmem_to_hbm [thread:$0]  %s2442, 32, %s2439, %s2428
        $region99: #{tpu_custom_call.1} parent=87 // pred_fallthru
          _
      $region88: #{tpu_custom_call.1} parent=5 // pred_fallthru
        _
      %p2445 = scmp.le.s32.totalorder 2, %s26
      // Predicated region
      $region100: #{tpu_custom_call.1} parent=5 // pred_check
        %p2446 = pneg %p2445
      $region101: #{tpu_custom_call.1} parent=5 // pred_check_branch
        %2448 = sbr.rel (%p2446) target = $region103
      $region102: #{tpu_custom_call.1} parent=5 // pred_region
        %s2449 = ssub.s32 %s26, 2
        // Predicated region
        $region104: #{tpu_custom_call.1} parent=102 // pred_check
          %p2450 = pneg %p417
        $region105: #{tpu_custom_call.1} parent=102 // pred_check_branch
          %2452 = sbr.rel (%p2450) target = $region107
        $region106: #{tpu_custom_call.1} parent=102 // pred_region
          %s2453 = sand.u32 %s402, 1
          %s2454 = scalar_lea.sflag [#allocation6], %s2453
          %s2455 = sand.u32 %s402, 1
          %s2456 = smul.addr %s2455, 2
          %s2457 = scalar_lea.vmem [#allocation5], %s2456
          %2458 = dma.done %s2454, 32
        $region107: #{tpu_custom_call.1} parent=102 // pred_fallthru
          _
      $region103: #{tpu_custom_call.1} parent=5 // pred_fallthru
        _
    $region6: #{tpu_custom_call.1} parent=1 // loop_footer
      %s30 = sadd.s32 1, %s26
    $region7: #{tpu_custom_call.1} parent=1 // loop_footer_branch
      %25 = sbr.rel target = $region3
    $region8: #{tpu_custom_call.1} parent=1 // loop_exit
      _
    %2459 = vsyncpa [#allocation6], 1
    %s2460 = scalar_lea.sflag [#allocation6], 1
    %2461 = vsyncpa %s2460, 1

</llo_original>
